<compile_context>
chip_gen: v7x
topology: tpu7x:2x2x1
jax: 0.10.0
libtpu: 0.0.40
codegen_flags: <defaults>
</compile_context>

<pallas_src>
import math
import functools

import jax
import jax.numpy as jnp
from jax.experimental import pallas as pl
from jax.experimental.pallas import tpu as pltpu


_LN_EPS = 1e-5


def _round_up(x, m):
    return ((x + m - 1) // m) * m


def _vmem_capacity_bytes():
    try:
        info = pltpu.get_tpu_info()
        for attr in ("vmem_capacity_bytes", "vmem_capacity"):
            v = getattr(info, attr, None)
            if v:
                return int(v)
    except Exception:
        pass
    return 64 * 1024 * 1024          # conservative (v7x) fallback


_VMEM_CAP = _vmem_capacity_bytes()
_VMEM_LIMIT = int(_VMEM_CAP * 3 // 4)          # ~96 MiB v5e/v6e, ~48 MiB v7x
_BIG_VMEM = _VMEM_CAP >= 100 * 1024 * 1024
_TM_PREF = 512 if _BIG_VMEM else 256           # multiples of 8
_TN_PREF = 512 if _BIG_VMEM else 256           # multiples of 128 (and 256)
_TK_PREF = 512


# ----------------------------- tiled linear ---------------------------------

def _matmul_bias_kernel(x_ref, w_ref, b_ref, o_ref, acc_ref):
    @pl.when(pl.program_id(2) == 0)
    def _():
        acc_ref[...] = jnp.zeros_like(acc_ref)

    acc_ref[...] += jnp.dot(x_ref[...], w_ref[...],
                            preferred_element_type=jnp.float32)

    @pl.when(pl.program_id(2) == pl.num_programs(2) - 1)
    def _():
        o_ref[...] = (acc_ref[...] + b_ref[...]).astype(o_ref.dtype)


def linear(x, w, b, out_dtype=jnp.bfloat16):
    """y = x @ w + b.  bf16 operands on the MXU, f32 accumulate."""
    shape = x.shape
    x2 = x.reshape(-1, shape[-1]).astype(jnp.bfloat16)
    M, K = x2.shape
    N = w.shape[1]

    tm = M if M <= _TM_PREF else _TM_PREF
    tn = N if N <= _TN_PREF else _TN_PREF
    tk = K if K <= _TK_PREF else _TK_PREF
    Mp = M if tm == M else _round_up(M, tm)
    Np = N if tn == N else _round_up(N, tn)
    Kp = K if tk == K else _round_up(K, tk)

    if (Mp, Kp) != (M, K):
        x2 = jnp.pad(x2, ((0, Mp - M), (0, Kp - K)))
    wp = w.astype(jnp.bfloat16)
    if (Kp, Np) != (K, N):
        wp = jnp.pad(wp, ((0, Kp - K), (0, Np - N)))
    bp = (b if Np == N else jnp.pad(b, (0, Np - N))).reshape(1, Np).astype(jnp.float32)

    out = pl.pallas_call(
        _matmul_bias_kernel,
        out_shape=jax.ShapeDtypeStruct((Mp, Np), out_dtype),
        grid=(Mp // tm, Np // tn, Kp // tk),
        in_specs=[pl.BlockSpec((tm, tk), lambda i, j, k: (i, k)),
                  pl.BlockSpec((tk, tn), lambda i, j, k: (k, j)),
                  pl.BlockSpec((1, tn), lambda i, j, k: (0, j))],
        out_specs=pl.BlockSpec((tm, tn), lambda i, j, k: (i, j)),
        scratch_shapes=[pltpu.VMEM((tm, tn), jnp.float32)],
        compiler_params=pltpu.CompilerParams(
            dimension_semantics=("parallel", "parallel", "arbitrary"),
            vmem_limit_bytes=_VMEM_LIMIT),
        cost_estimate=pl.CostEstimate(
            flops=2 * Mp * Np * Kp, transcendentals=0,
            bytes_accessed=Mp * Kp * 2 + Kp * Np * 2 + Mp * Np * 2),
    )(x2, wp, bp)

    if (Mp, Np) != (M, N):
        out = out[:M, :N]
    return out.reshape(shape[:-1] + (N,))


# -------------- matmul + bias + residual + LayerNorm (fused epilogue) --------

def _matmul_res_ln_kernel(x_ref, w_ref, b_ref, r_ref, g_ref, bt_ref,
                          o_ref, acc_ref, *, eps):
    @pl.when(pl.program_id(1) == 0)
    def _():
        acc_ref[...] = jnp.zeros_like(acc_ref)

    acc_ref[...] += jnp.dot(x_ref[...], w_ref[...],
                            preferred_element_type=jnp.float32)

    @pl.when(pl.program_id(1) == pl.num_programs(1) - 1)
    def _():
        y = acc_ref[...] + b_ref[...] + r_ref[...].astype(jnp.float32)
        mean = jnp.mean(y, axis=-1, keepdims=True)
        var = jnp.mean(jnp.square(y - mean), axis=-1, keepdims=True)
        yn = (y - mean) * jax.lax.rsqrt(var + eps)
        o_ref[...] = (yn * g_ref[...] + bt_ref[...]).astype(o_ref.dtype)


def linear_residual_ln(x, w, b, residual, gamma, beta, eps=_LN_EPS,
                       out_dtype=jnp.bfloat16):
    """LayerNorm(residual + (x @ w + b)); the output tile owns full rows (tn=N)."""
    shape = residual.shape
    N = w.shape[1]
    x2 = x.reshape(-1, x.shape[-1]).astype(jnp.bfloat16)
    r2 = residual.reshape(-1, N).astype(jnp.bfloat16)
    M, K = x2.shape

    tm = M if M <= _TM_PREF else _TM_PREF
    tk = K if K <= _TK_PREF else _TK_PREF
    Mp = M if tm == M else _round_up(M, tm)
    Kp = K if tk == K else _round_up(K, tk)
    if Mp != M or Kp != K:
        x2 = jnp.pad(x2, ((0, Mp - M), (0, Kp - K)))
    if Mp != M:
        r2 = jnp.pad(r2, ((0, Mp - M), (0, 0)))
    wp = w.astype(jnp.bfloat16)
    if Kp != K:
        wp = jnp.pad(wp, ((0, Kp - K), (0, 0)))

    out = pl.pallas_call(
        functools.partial(_matmul_res_ln_kernel, eps=eps),
        out_shape=jax.ShapeDtypeStruct((Mp, N), out_dtype),
        grid=(Mp // tm, Kp // tk),
        in_specs=[pl.BlockSpec((tm, tk), lambda i, k: (i, k)),
                  pl.BlockSpec((tk, N), lambda i, k: (k, 0)),
                  pl.BlockSpec((1, N), lambda i, k: (0, 0)),
                  pl.BlockSpec((tm, N), lambda i, k: (i, 0)),
                  pl.BlockSpec((1, N), lambda i, k: (0, 0)),
                  pl.BlockSpec((1, N), lambda i, k: (0, 0))],
        out_specs=pl.BlockSpec((tm, N), lambda i, k: (i, 0)),
        scratch_shapes=[pltpu.VMEM((tm, N), jnp.float32)],
        compiler_params=pltpu.CompilerParams(
            dimension_semantics=("parallel", "arbitrary"),
            vmem_limit_bytes=_VMEM_LIMIT),
        cost_estimate=pl.CostEstimate(
            flops=2 * Mp * N * Kp, transcendentals=0,
            bytes_accessed=Mp * Kp * 2 + Kp * N * 2 + 2 * Mp * N * 2),
    )(x2, wp, b.reshape(1, N).astype(jnp.float32), r2,
      gamma.reshape(1, N).astype(jnp.float32),
      beta.reshape(1, N).astype(jnp.float32))

    if Mp != M:
        out = out[:M]
    return out.reshape(shape)


# -------- fused FFN: LayerNorm(x + relu(xW1+b1)W2 + b2) (post-norm) ----------

def _ffn_res_ln_kernel(x_ref, w1_ref, b1_ref, w2_ref, b2_ref, g_ref, bt_ref,
                       o_ref, acc_ref, *, eps):
    j = pl.program_id(1)

    @pl.when(j == 0)
    def _():
        acc_ref[...] = jnp.zeros_like(acc_ref)

    h = jnp.dot(x_ref[...], w1_ref[...], preferred_element_type=jnp.float32)
    h = jnp.maximum(h + b1_ref[...], 0.0).astype(jnp.bfloat16)
    acc_ref[...] += jnp.dot(h, w2_ref[...], preferred_element_type=jnp.float32)

    @pl.when(j == pl.num_programs(1) - 1)
    def _():
        # x_ref doubles as the residual tile (same block index across j).
        y = acc_ref[...] + b2_ref[...] + x_ref[...].astype(jnp.float32)
        mean = jnp.mean(y, axis=-1, keepdims=True)
        var = jnp.mean(jnp.square(y - mean), axis=-1, keepdims=True)
        yn = (y - mean) * jax.lax.rsqrt(var + eps)
        o_ref[...] = (yn * g_ref[...] + bt_ref[...]).astype(o_ref.dtype)


def ffn_residual_ln(x, w1, b1, w2, b2, gamma, beta, eps=_LN_EPS,
                    out_dtype=jnp.bfloat16):
    shape = x.shape
    E = shape[-1]
    dff = w1.shape[1]
    x2 = x.reshape(-1, E).astype(jnp.bfloat16)
    M = x2.shape[0]

    tm = M if M <= 256 else 256            # keep h tile <= 256 KiB
    Mp = M if tm == M else _round_up(M, tm)
    if Mp != M:
        x2 = jnp.pad(x2, ((0, Mp - M), (0, 0)))
    if dff > 256 and dff % 256 == 0:
        tdff = 256
    elif dff > 128 and dff % 128 == 0:
        tdff = 128
    else:
        tdff = dff   # TODO(synk): pad dff if an awkward feedforward dim appears

    out = pl.pallas_call(
        functools.partial(_ffn_res_ln_kernel, eps=eps),
        out_shape=jax.ShapeDtypeStruct((Mp, E), out_dtype),
        grid=(Mp // tm, dff // tdff),
        in_specs=[pl.BlockSpec((tm, E), lambda i, j: (i, 0)),
                  pl.BlockSpec((E, tdff), lambda i, j: (0, j)),
                  pl.BlockSpec((1, tdff), lambda i, j: (0, j)),
                  pl.BlockSpec((tdff, E), lambda i, j: (j, 0)),
                  pl.BlockSpec((1, E), lambda i, j: (0, 0)),
                  pl.BlockSpec((1, E), lambda i, j: (0, 0)),
                  pl.BlockSpec((1, E), lambda i, j: (0, 0))],
        out_specs=pl.BlockSpec((tm, E), lambda i, j: (i, 0)),
        scratch_shapes=[pltpu.VMEM((tm, E), jnp.float32)],
        compiler_params=pltpu.CompilerParams(
            dimension_semantics=("parallel", "arbitrary"),
            vmem_limit_bytes=_VMEM_LIMIT),
        cost_estimate=pl.CostEstimate(
            flops=4 * Mp * dff * E, transcendentals=0,
            bytes_accessed=Mp * E * 4 + 2 * E * dff * 2),
    )(x2, w1.astype(jnp.bfloat16), b1.reshape(1, dff).astype(jnp.float32),
      w2.astype(jnp.bfloat16), b2.reshape(1, E).astype(jnp.float32),
      gamma.reshape(1, E).astype(jnp.float32),
      beta.reshape(1, E).astype(jnp.float32))

    if Mp != M:
        out = out[:M]
    return out.reshape(shape)


# ----------------------------- LayerNorm (standalone) ------------------------

def _layernorm_kernel(x_ref, g_ref, b_ref, o_ref, *, eps):
    x = x_ref[...].astype(jnp.float32)
    mean = jnp.mean(x, axis=-1, keepdims=True)
    var = jnp.mean(jnp.square(x - mean), axis=-1, keepdims=True)
    y = (x - mean) * jax.lax.rsqrt(var + eps)
    o_ref[...] = (y * g_ref[...] + b_ref[...]).astype(o_ref.dtype)


def layernorm(x, gamma, beta, eps=_LN_EPS, out_dtype=jnp.bfloat16):
    shape = x.shape
    N = shape[-1]
    x2 = x.reshape(-1, N)
    M = x2.shape[0]
    tm = M if M <= 512 else 512
    Mp = M if tm == M else _round_up(M, tm)
    if Mp != M:
        x2 = jnp.pad(x2, ((0, Mp - M), (0, 0)))

    out = pl.pallas_call(
        functools.partial(_layernorm_kernel, eps=eps),
        out_shape=jax.ShapeDtypeStruct((Mp, N), out_dtype),
        grid=(Mp // tm,),
        in_specs=[pl.BlockSpec((tm, N), lambda i: (i, 0)),
                  pl.BlockSpec((1, N), lambda i: (0, 0)),
                  pl.BlockSpec((1, N), lambda i: (0, 0))],
        out_specs=pl.BlockSpec((tm, N), lambda i: (i, 0)),
        compiler_params=pltpu.CompilerParams(
            dimension_semantics=("parallel",),
            vmem_limit_bytes=_VMEM_LIMIT),
    )(x2, gamma.reshape(1, N).astype(jnp.float32),
      beta.reshape(1, N).astype(jnp.float32))

    if Mp != M:
        out = out[:M]
    return out.reshape(shape)


# --------------------- flash (kv-tiled, online-softmax) MHA ------------------

def _flash_mha_kernel(*refs, num_heads, has_mask, has_kp):
    it = iter(refs)
    q_ref = next(it)                         # (1, tq, E)  bf16
    k_ref = next(it)                         # (1, tk, E)  bf16
    v_ref = next(it)                         # (1, tk, E)  bf16
    m_bias_ref = next(it) if has_mask else None   # (tq, tk)  f32
    kp_ref = next(it) if has_kp else None         # (1, 1, tk) f32
    o_ref = next(it)                         # (1, tq, E)
    m_ref = next(it)                         # (H, tq, 1)  f32
    l_ref = next(it)                         # (H, tq, 1)  f32
    acc_ref = next(it)                       # (H, tq, Dh) f32

    ki = pl.program_id(2)

    @pl.when(ki == 0)
    def _():
        m_ref[...] = jnp.full_like(m_ref, -1e30)
        l_ref[...] = jnp.zeros_like(l_ref)
        acc_ref[...] = jnp.zeros_like(acc_ref)

    q = q_ref[0]
    k = k_ref[0]
    v = v_ref[0]
    E = q.shape[-1]
    Dh = E // num_heads

    bias = None
    if m_bias_ref is not None:
        bias = m_bias_ref[...]
    if kp_ref is not None:
        kp = kp_ref[0]                       # (1, tk) broadcasts over rows
        bias = kp if bias is None else bias + kp

    for h in range(num_heads):
        sl = slice(h * Dh, (h + 1) * Dh)
        # scale is folded into the Q projection weights at init
        s = jax.lax.dot_general(q[:, sl], k[:, sl], (((1,), (1,)), ((), ())),
                                preferred_element_type=jnp.float32)   # (tq, tk)
        if bias is not None:
            s = s + bias
        m_prev = m_ref[h]
        m_new = jnp.maximum(m_prev, jnp.max(s, axis=-1, keepdims=True))
        alpha = jnp.exp(m_prev - m_new)
        p = jnp.exp(s - m_new)
        l_ref[h] = alpha * l_ref[h] + jnp.sum(p, axis=-1, keepdims=True)
        acc_ref[h] = alpha * acc_ref[h] + jnp.dot(
            p.astype(jnp.bfloat16), v[:, sl], preferred_element_type=jnp.float32)
        m_ref[h] = m_new

    @pl.when(ki == pl.num_programs(2) - 1)
    def _():
        outs = []
        for h in range(num_heads):
            inv = pl.reciprocal(l_ref[h], approx=True)
            outs.append(acc_ref[h] * inv)
        # single lane-dense (tq, E) store
        o_ref[0] = jnp.concatenate(outs, axis=-1).astype(o_ref.dtype)


def flash_mha(q, k, v, num_heads, attn_bias=None, kp_add=None):
    """q:(B,Sq,E), k/v:(B,Sk,E) bf16; attn_bias:(Sq,Sk) f32; kp_add:(B,1,Sk) f32."""
    B, Sq, E = q.shape
    Sk = k.shape[1]
    assert E % num_heads == 0
    Dh = E // num_heads

    tq = Sq if Sq <= 256 else 256
    tk = Sk if Sk <= 512 else 512
    Sqp = Sq if tq == Sq else _round_up(Sq, tq)
    Skp = Sk if tk == Sk else _round_up(Sk, tk)

    if Sqp != Sq:
        q = jnp.pad(q, ((0, 0), (0, Sqp - Sq), (0, 0)))
    if Skp != Sk:
        k = jnp.pad(k, ((0, 0), (0, Skp - Sk), (0, 0)))
        v = jnp.pad(v, ((0, 0), (0, Skp - Sk), (0, 0)))
        if kp_add is None:
            kp_add = jnp.zeros((B, 1, Sk), jnp.float32)
        kp_add = jnp.pad(kp_add, ((0, 0), (0, 0), (0, Skp - Sk)),
                         constant_values=-1e9)      # mask padded keys
    if attn_bias is not None and (Sqp != Sq or Skp != Sk):
        attn_bias = jnp.pad(attn_bias, ((0, Sqp - Sq), (0, Skp - Sk)))

    args = [q.astype(jnp.bfloat16), k.astype(jnp.bfloat16), v.astype(jnp.bfloat16)]
    in_specs = [pl.BlockSpec((1, tq, E), lambda b, qi, ki: (b, qi, 0)),
                pl.BlockSpec((1, tk, E), lambda b, qi, ki: (b, ki, 0)),
                pl.BlockSpec((1, tk, E), lambda b, qi, ki: (b, ki, 0))]
    if attn_bias is not None:
        args.append(attn_bias.astype(jnp.float32))
        in_specs.append(pl.BlockSpec((tq, tk), lambda b, qi, ki: (qi, ki)))
    if kp_add is not None:
        args.append(kp_add.astype(jnp.float32))
        in_specs.append(pl.BlockSpec((1, 1, tk), lambda b, qi, ki: (b, 0, ki)))

    out = pl.pallas_call(
        functools.partial(_flash_mha_kernel, num_heads=num_heads,
                          has_mask=attn_bias is not None,
                          has_kp=kp_add is not None),
        out_shape=jax.ShapeDtypeStruct((B, Sqp, E), jnp.bfloat16),
        grid=(B, Sqp // tq, Skp // tk),
        in_specs=in_specs,
        out_specs=pl.BlockSpec((1, tq, E), lambda b, qi, ki: (b, qi, 0)),
        scratch_shapes=[pltpu.VMEM((num_heads, tq, 1), jnp.float32),
                        pltpu.VMEM((num_heads, tq, 1), jnp.float32),
                        pltpu.VMEM((num_heads, tq, Dh), jnp.float32)],
        compiler_params=pltpu.CompilerParams(
            dimension_semantics=("parallel", "parallel", "arbitrary"),
            vmem_limit_bytes=_VMEM_LIMIT),
    )(*args)

    if Sqp != Sq:
        out = out[:, :Sq, :]
    return out


# --------------------------- model building blocks ---------------------------

def self_attn_sublayer(x, p, num_heads, norm_g, norm_b, attn_mask=None, kp_add=None):
    E = x.shape[-1]
    qkv = linear(x, p['w_qkv'], p['b_qkv'])                 # fused (E,3E) proj
    q, k, v = qkv[..., :E], qkv[..., E:2 * E], qkv[..., 2 * E:]
    o = flash_mha(q, k, v, num_heads, attn_mask, kp_add)
    # out-projection + residual + LayerNorm fused (post-norm)
    return linear_residual_ln(o, p['w_o'], p['b_o'], residual=x,
                              gamma=norm_g, beta=norm_b)


def cross_attn_sublayer(x, mem, p, num_heads, norm_g, norm_b, kp_add=None):
    E = x.shape[-1]
    q = linear(x, p['w_q'], p['b_q'])
    kv = linear(mem, p['w_kv'], p['b_kv'])                  # fused (E,2E) proj
    k, v = kv[..., :E], kv[..., E:]
    o = flash_mha(q, k, v, num_heads, None, kp_add)
    return linear_residual_ln(o, p['w_o'], p['b_o'], residual=x,
                              gamma=norm_g, beta=norm_b)


def encoder_layer(x, p, num_heads, src_kp_add):
    x = self_attn_sublayer(x, p['self_attn'], num_heads,
                           p['norm1_g'], p['norm1_b'], kp_add=src_kp_add)
    x = ffn_residual_ln(x, p['lin1_w'], p['lin1_b'], p['lin2_w'], p['lin2_b'],
                        p['norm2_g'], p['norm2_b'])
    return x


def decoder_layer(x, memory, p, num_heads, tgt_mask, tgt_kp_add):
    x = self_attn_sublayer(x, p['self_attn'], num_heads,
                           p['norm1_g'], p['norm1_b'], tgt_mask, tgt_kp_add)
    x = cross_attn_sublayer(x, memory, p['cross_attn'], num_heads,
                            p['norm2_g'], p['norm2_b'], kp_add=None)
    x = ffn_residual_ln(x, p['lin1_w'], p['lin1_b'], p['lin2_w'], p['lin2_b'],
                        p['norm3_g'], p['norm3_b'])
    return x


def transformer_forward(params, source, target, target_mask=None,
                        source_pad_mask=None, target_pad_mask=None, *, num_heads):
    emb = params['embedding']                       # (V, E) f32
    E = emb.shape[1]
    B, Ss = source.shape
    St = target.shape[1]
    pe = params['pos_encoding']                     # (max_len, 1, E)

    # TODO(synk): embedding gather + PE add stay in plain XLA (a Pallas gather
    # kernel is not worth it at these sizes).
    src = emb[source] * math.sqrt(E)                # (B, Ss, E)
    tgt = emb[target] * math.sqrt(E)                # (B, St, E)
    # Faithful to the reference: PositionalEncoding indexes dim 0 of the
    # batch-first (B, S, E) embedding (i.e. the batch index) and broadcasts
    # over the sequence axis.
    src = (src + pe[:B]).astype(jnp.bfloat16)
    tgt = (tgt + pe[:B]).astype(jnp.bfloat16)
    # dropout: eval-mode identity

    tgt_mask_f = None
    if target_mask is not None:
        if target_mask.dtype == jnp.bool_:
            tgt_mask_f = jnp.where(target_mask, -1e9, 0.0).astype(jnp.float32)
        else:
            tgt_mask_f = target_mask.astype(jnp.float32)
    src_kp = None
    if source_pad_mask is not None:
        src_kp = jnp.where(source_pad_mask, -1e9, 0.0).astype(
            jnp.float32).reshape(B, 1, Ss)
    tgt_kp = None
    if target_pad_mask is not None:
        tgt_kp = jnp.where(target_pad_mask, -1e9, 0.0).astype(
            jnp.float32).reshape(B, 1, St)

    mem = src
    for lp in params['encoder_layers']:
        mem = encoder_layer(mem, lp, num_heads, src_kp)
    mem = layernorm(mem, params['enc_norm_g'], params['enc_norm_b'])

    out = tgt
    for lp in params['decoder_layers']:
        out = decoder_layer(out, mem, lp, num_heads, tgt_mask_f, tgt_kp)
    out = layernorm(out, params['dec_norm_g'], params['dec_norm_b'])

    # Transpose E-wide activations BEFORE the vocab projection so logits are
    # produced directly as (S_tgt, B, V) — no V-wide transpose afterwards.
    out = jnp.transpose(out, (1, 0, 2))             # (St, B, E)
    return linear(out, params['fc_w'], params['fc_b'], out_dtype=jnp.float32)


# ------------------------------ parameter init -------------------------------

def _init_self_mha(key, E, num_heads):
    k1, k2 = jax.random.split(key)
    s = 1.0 / math.sqrt(E)
    scale = 1.0 / math.sqrt(E // num_heads)
    w_qkv = jax.random.normal(k1, (E, 3 * E), jnp.float32) * s
    w_qkv = w_qkv.at[:, :E].multiply(scale)         # fold 1/sqrt(Dh) into Q proj
    return {
        'w_qkv': w_qkv.astype(jnp.bfloat16),
        'b_qkv': jnp.zeros((3 * E,), jnp.float32),
        'w_o': (jax.random.normal(k2, (E, E), jnp.float32) * s).astype(jnp.bfloat16),
        'b_o': jnp.zeros((E,), jnp.float32),
    }


def _init_cross_mha(key, E, num_heads):
    k1, k2, k3 = jax.random.split(key, 3)
    s = 1.0 / math.sqrt(E)
    scale = 1.0 / math.sqrt(E // num_heads)
    return {
        'w_q': (jax.random.normal(k1, (E, E), jnp.float32) * s * scale
                ).astype(jnp.bfloat16),
        'b_q': jnp.zeros((E,), jnp.float32),
        'w_kv': (jax.random.normal(k2, (E, 2 * E), jnp.float32) * s
                 ).astype(jnp.bfloat16),
        'b_kv': jnp.zeros((2 * E,), jnp.float32),
        'w_o': (jax.random.normal(k3, (E, E), jnp.float32) * s
                ).astype(jnp.bfloat16),
        'b_o': jnp.zeros((E,), jnp.float32),
    }


def _init_ffn_norms(key, E, dff, n_norms):
    k1, k2 = jax.random.split(key)
    p = {
        'lin1_w': (jax.random.normal(k1, (E, dff), jnp.float32) / math.sqrt(E)
                   ).astype(jnp.bfloat16),
        'lin1_b': jnp.zeros((dff,), jnp.float32),
        'lin2_w': (jax.random.normal(k2, (dff, E), jnp.float32) / math.sqrt(dff)
                   ).astype(jnp.bfloat16),
        'lin2_b': jnp.zeros((E,), jnp.float32),
    }
    for n in range(1, n_norms + 1):
        p[f'norm{n}_g'] = jnp.ones((E,), jnp.float32)
        p[f'norm{n}_b'] = jnp.zeros((E,), jnp.float32)
    return p


def init_params(key, num_tokens, dim_model, num_heads,
                num_encoder_layers, num_decoder_layers,
                dim_feedforward=2048, max_len=5000):
    assert dim_model % num_heads == 0
    keys = jax.random.split(key, 2 + 2 * num_encoder_layers + 3 * num_decoder_layers)
    ki = iter(keys)

    # sinusoidal positional table (max_len, 1, E), as in PositionalEncoding
    pos = jnp.arange(max_len, dtype=jnp.float32).reshape(-1, 1)
    div = jnp.exp(jnp.arange(0, dim_model, 2, dtype=jnp.float32)
                  * (-math.log(10000.0) / dim_model))
    pe = jnp.zeros((max_len, dim_model), jnp.float32)
    pe = pe.at[:, 0::2].set(jnp.sin(pos * div))
    pe = pe.at[:, 1::2].set(jnp.cos(pos * div))
    pe = pe[:, None, :]

    params = {
        'pos_encoding': pe,
        'embedding': jax.random.normal(next(ki), (num_tokens, dim_model),
                                       jnp.float32),
        'enc_norm_g': jnp.ones((dim_model,), jnp.float32),
        'enc_norm_b': jnp.zeros((dim_model,), jnp.float32),
        'dec_norm_g': jnp.ones((dim_model,), jnp.float32),
        'dec_norm_b': jnp.zeros((dim_model,), jnp.float32),
        'fc_w': (jax.random.normal(next(ki), (dim_model, num_tokens), jnp.float32)
                 / math.sqrt(dim_model)).astype(jnp.bfloat16),
        'fc_b': jnp.zeros((num_tokens,), jnp.float32),
    }

    enc_layers = []
    for _ in range(num_encoder_layers):
        lp = {'self_attn': _init_self_mha(next(ki), dim_model, num_heads)}
        lp.update(_init_ffn_norms(next(ki), dim_model, dim_feedforward, n_norms=2))
        enc_layers.append(lp)
    params['encoder_layers'] = enc_layers

    dec_layers = []
    for _ in range(num_decoder_layers):
        lp = {'self_attn': _init_self_mha(next(ki), dim_model, num_heads),
              'cross_attn': _init_cross_mha(next(ki), dim_model, num_heads)}
        lp.update(_init_ffn_norms(next(ki), dim_model, dim_feedforward, n_norms=3))
        dec_layers.append(lp)
    params['decoder_layers'] = dec_layers

    return params


# ----------------------------------- main ------------------------------------

if __name__ == "__main__":
    num_tokens, dim_model, num_heads = 64, 32, 2
    num_encoder_layers, num_decoder_layers, dropout_p = 2, 2, 0.1
    B, S_src, S_tgt = 2, 8, 8

    key = jax.random.PRNGKey(0)
    pkey, skey, tkey = jax.random.split(key, 3)
    params = init_params(pkey, num_tokens, dim_model, num_heads,
                         num_encoder_layers, num_decoder_layers)

    source = jax.random.randint(skey, (B, S_src), 0, num_tokens, dtype=jnp.int32)
    target = jax.random.randint(tkey, (B, S_tgt), 0, num_tokens, dtype=jnp.int32)

    fwd = jax.jit(functools.partial(transformer_forward, num_heads=num_heads))

    # no-mask path
    out = jax.block_until_ready(fwd(params, source, target))
    assert out.shape == (S_tgt, B, num_tokens), out.shape
    assert bool(jnp.all(jnp.isfinite(out)))

    # masked path (causal target mask + padding masks) to exercise mask kernels
    causal = jnp.where(jnp.triu(jnp.ones((S_tgt, S_tgt), bool), k=1),
                       -1e9, 0.0).astype(jnp.float32)
    src_pad = jnp.zeros((B, S_src), bool).at[:, -1].set(True)
    tgt_pad = jnp.zeros((B, S_tgt), bool).at[:, -1].set(True)
    out2 = jax.block_until_ready(
        fwd(params, source, target, causal, src_pad, tgt_pad))
    assert out2.shape == (S_tgt, B, num_tokens), out2.shape
    assert bool(jnp.all(jnp.isfinite(out2)))

    print("KERNEL_OK")
</pallas_src>

<mosaic_0001>
module attributes {stable_mosaic.version = 11 : i64} {
  func.func @_matmul_bias_kernel(%arg0: i32, %arg1: i32, %arg2: i32, %arg3: memref<16x32xbf16, #tpu.memory_space<vmem>>, %arg4: memref<32x96xbf16, #tpu.memory_space<vmem>>, %arg5: memref<1x96xf32, #tpu.memory_space<vmem>>, %arg6: memref<16x96xbf16, #tpu.memory_space<vmem>>, %arg7: memref<16x96xf32, #tpu.memory_space<vmem>>) attributes {dimension_semantics = [#tpu.dimension_semantics<parallel>, #tpu.dimension_semantics<parallel>, #tpu.dimension_semantics<arbitrary>], iteration_bounds = array<i64: 1, 1, 1>, scalar_prefetch = 0 : i64, scratch_operands = 1 : i64, tpu.core_type = #tpu.core_type<tc>, window_params = [{transform_indices = @transform_0, window_bounds = array<i64: 16, 32>}, {transform_indices = @transform_1, window_bounds = array<i64: 32, 96>}, {transform_indices = @transform_2, window_bounds = array<i64: 1, 96>}, {transform_indices = @transform_3, window_bounds = array<i64: 16, 96>}]} {
    %c0_i32 = arith.constant 0 : i32
    %0 = arith.cmpi eq, %arg2, %c0_i32 : i32
    %1 = arith.extui %0 : i1 to i32
    %c0_i32_0 = arith.constant 0 : i32
    %2 = arith.cmpi ne, %1, %c0_i32_0 : i32
    scf.if %2 {
      %cst_10 = arith.constant 0.000000e+00 : f32
      %12 = vector.broadcast %cst_10 : f32 to vector<16x96xf32>
      %c0_11 = arith.constant 0 : index
      %c0_12 = arith.constant 0 : index
      %13 = vector.load %arg7[%c0_11, %c0_12] : memref<16x96xf32, #tpu.memory_space<vmem>>, vector<16x96xf32>
      tpu.vector_store %arg7[%c0_11, %c0_12], %12 {strides = array<i32>} : memref<16x96xf32, #tpu.memory_space<vmem>>, vector<16x96xf32>,
    } else {
    }
    %c0 = arith.constant 0 : index
    %c0_1 = arith.constant 0 : index
    %3 = vector.load %arg7[%c0, %c0_1] : memref<16x96xf32, #tpu.memory_space<vmem>>, vector<16x96xf32>
    %c0_2 = arith.constant 0 : index
    %c0_3 = arith.constant 0 : index
    %4 = vector.load %arg3[%c0_2, %c0_3] : memref<16x32xbf16, #tpu.memory_space<vmem>>, vector<16x32xbf16>
    %c0_4 = arith.constant 0 : index
    %c0_5 = arith.constant 0 : index
    %5 = vector.load %arg4[%c0_4, %c0_5] : memref<32x96xbf16, #tpu.memory_space<vmem>>, vector<32x96xbf16>
    %cst = arith.constant dense<0.000000e+00> : vector<16x96xf32>
    %6 = tpu.matmul %4, %5, %cst {dimension_numbers = #tpu.dot_dimension_numbers<[1], [0], [0], [1], [0, 0, 1, 1], [], []>} : vector<16x32xbf16>, vector<32x96xbf16>, vector<16x96xf32> -> vector<16x96xf32>
    %7 = arith.addf %3, %6 : vector<16x96xf32>
    %c0_6 = arith.constant 0 : index
    %c0_7 = arith.constant 0 : index
    %8 = vector.load %arg7[%c0_6, %c0_7] : memref<16x96xf32, #tpu.memory_space<vmem>>, vector<16x96xf32>
    tpu.vector_store %arg7[%c0_6, %c0_7], %7 {strides = array<i32>} : memref<16x96xf32, #tpu.memory_space<vmem>>, vector<16x96xf32>,
    %c0_i32_8 = arith.constant 0 : i32
    %9 = arith.cmpi eq, %arg2, %c0_i32_8 : i32
    %10 = arith.extui %9 : i1 to i32
    %c0_i32_9 = arith.constant 0 : i32
    %11 = arith.cmpi ne, %10, %c0_i32_9 : i32
    scf.if %11 {
      %c0_10 = arith.constant 0 : index
      %c0_11 = arith.constant 0 : index
      %12 = vector.load %arg7[%c0_10, %c0_11] : memref<16x96xf32, #tpu.memory_space<vmem>>, vector<16x96xf32>
      %c0_12 = arith.constant 0 : index
      %c0_13 = arith.constant 0 : index
      %13 = vector.load %arg5[%c0_12, %c0_13] : memref<1x96xf32, #tpu.memory_space<vmem>>, vector<1x96xf32>
      %14 = vector.broadcast %13 : vector<1x96xf32> to vector<16x96xf32>
      %15 = arith.addf %12, %14 : vector<16x96xf32>
      %16 = arith.truncf %15 : vector<16x96xf32> to vector<16x96xbf16>
      %c0_14 = arith.constant 0 : index
      %c0_15 = arith.constant 0 : index
      %17 = vector.load %arg6[%c0_14, %c0_15] : memref<16x96xbf16, #tpu.memory_space<vmem>>, vector<16x96xbf16>
      tpu.vector_store %arg6[%c0_14, %c0_15], %16 {strides = array<i32>} : memref<16x96xbf16, #tpu.memory_space<vmem>>, vector<16x96xbf16>,
    } else {
    }
    return
  }
  func.func @transform_0(%arg0: i32, %arg1: i32, %arg2: i32) -> (i32, i32) {
    %c0_i32 = arith.constant 0 : i32
    return %arg0, %arg2 : i32, i32
  }
  func.func @transform_1(%arg0: i32, %arg1: i32, %arg2: i32) -> (i32, i32) {
    %c0_i32 = arith.constant 0 : i32
    return %arg2, %arg1 : i32, i32
  }
  func.func @transform_2(%arg0: i32, %arg1: i32, %arg2: i32) -> (i32, i32) {
    %c0_i32 = arith.constant 0 : i32
    %c0_i32_0 = arith.constant 0 : i32
    return %c0_i32, %arg1 : i32, i32
  }
  func.func @transform_3(%arg0: i32, %arg1: i32, %arg2: i32) -> (i32, i32) {
    %c0_i32 = arith.constant 0 : i32
    return %arg0, %arg1 : i32, i32
  }
}

module attributes {stable_mosaic.version = 11 : i64} {
  func.func @_flash_mha_kernel(%arg0: i32, %arg1: i32, %arg2: i32, %arg3: memref<1x8x32xbf16, #tpu.memory_space<vmem>>, %arg4: memref<1x8x32xbf16, #tpu.memory_space<vmem>>, %arg5: memref<1x8x32xbf16, #tpu.memory_space<vmem>>, %arg6: memref<1x8x32xbf16, #tpu.memory_space<vmem>>, %arg7: memref<2x8x1xf32, #tpu.memory_space<vmem>>, %arg8: memref<2x8x1xf32, #tpu.memory_space<vmem>>, %arg9: memref<2x8x16xf32, #tpu.memory_space<vmem>>) attributes {dimension_semantics = [#tpu.dimension_semantics<parallel>, #tpu.dimension_semantics<parallel>, #tpu.dimension_semantics<arbitrary>], iteration_bounds = array<i64: 2, 1, 1>, scalar_prefetch = 0 : i64, scratch_operands = 3 : i64, tpu.core_type = #tpu.core_type<tc>, window_params = [{transform_indices = @transform_0, window_bounds = array<i64: 1, 8, 32>}, {transform_indices = @transform_1, window_bounds = array<i64: 1, 8, 32>}, {transform_indices = @transform_2, window_bounds = array<i64: 1, 8, 32>}, {transform_indices = @transform_3, window_bounds = array<i64: 1, 8, 32>}]} {
    %c0_i32 = arith.constant 0 : i32
    %0 = arith.cmpi eq, %arg2, %c0_i32 : i32
    %1 = arith.extui %0 : i1 to i32
    %c0_i32_0 = arith.constant 0 : i32
    %2 = arith.cmpi ne, %1, %c0_i32_0 : i32
    scf.if %2 {
      %cst_53 = arith.constant -1.000000e+30 : f32
      %84 = vector.broadcast %cst_53 : f32 to vector<2x8x1xf32>
      %c0_54 = arith.constant 0 : index
      %c0_55 = arith.constant 0 : index
      %c0_56 = arith.constant 0 : index
      %85 = vector.load %arg7[%c0_54, %c0_55, %c0_56] : memref<2x8x1xf32, #tpu.memory_space<vmem>>, vector<2x8x1xf32>
      tpu.vector_store %arg7[%c0_54, %c0_55, %c0_56], %84 {strides = array<i32>} : memref<2x8x1xf32, #tpu.memory_space<vmem>>, vector<2x8x1xf32>,
      %cst_57 = arith.constant 0.000000e+00 : f32
      %86 = vector.broadcast %cst_57 : f32 to vector<2x8x1xf32>
      %c0_58 = arith.constant 0 : index
      %c0_59 = arith.constant 0 : index
      %c0_60 = arith.constant 0 : index
      %87 = vector.load %arg8[%c0_58, %c0_59, %c0_60] : memref<2x8x1xf32, #tpu.memory_space<vmem>>, vector<2x8x1xf32>
      tpu.vector_store %arg8[%c0_58, %c0_59, %c0_60], %86 {strides = array<i32>} : memref<2x8x1xf32, #tpu.memory_space<vmem>>, vector<2x8x1xf32>,
      %cst_61 = arith.constant 0.000000e+00 : f32
      %88 = vector.broadcast %cst_61 : f32 to vector<2x8x16xf32>
      %c0_62 = arith.constant 0 : index
      %c0_63 = arith.constant 0 : index
      %c0_64 = arith.constant 0 : index
      %89 = vector.load %arg9[%c0_62, %c0_63, %c0_64] : memref<2x8x16xf32, #tpu.memory_space<vmem>>, vector<2x8x16xf32>
      tpu.vector_store %arg9[%c0_62, %c0_63, %c0_64], %88 {strides = array<i32>} : memref<2x8x16xf32, #tpu.memory_space<vmem>>, vector<2x8x16xf32>,
    } else {
    }
    %c0 = arith.constant 0 : index
    %c0_1 = arith.constant 0 : index
    %c0_2 = arith.constant 0 : index
    %3 = vector.load %arg3[%c0, %c0_1, %c0_2] : memref<1x8x32xbf16, #tpu.memory_space<vmem>>, vector<1x8x32xbf16>
    %4 = vector.shape_cast %3 : vector<1x8x32xbf16> to vector<8x32xbf16>
    %c0_3 = arith.constant 0 : index
    %c0_4 = arith.constant 0 : index
    %c0_5 = arith.constant 0 : index
    %5 = vector.load %arg4[%c0_3, %c0_4, %c0_5] : memref<1x8x32xbf16, #tpu.memory_space<vmem>>, vector<1x8x32xbf16>
    %6 = vector.shape_cast %5 : vector<1x8x32xbf16> to vector<8x32xbf16>
    %c0_6 = arith.constant 0 : index
    %c0_7 = arith.constant 0 : index
    %c0_8 = arith.constant 0 : index
    %7 = vector.load %arg5[%c0_6, %c0_7, %c0_8] : memref<1x8x32xbf16, #tpu.memory_space<vmem>>, vector<1x8x32xbf16>
    %8 = vector.shape_cast %7 : vector<1x8x32xbf16> to vector<8x32xbf16>
    %9 = vector.extract_strided_slice %4 {offsets = [0, 0], sizes = [8, 16], strides = [1, 1]} : vector<8x32xbf16> to vector<8x16xbf16>
    %10 = vector.extract_strided_slice %6 {offsets = [0, 0], sizes = [8, 16], strides = [1, 1]} : vector<8x32xbf16> to vector<8x16xbf16>
    %cst = arith.constant dense<0.000000e+00> : vector<8x8xf32>
    %11 = tpu.matmul %9, %10, %cst {dimension_numbers = #tpu.dot_dimension_numbers<[1], [1], [0], [0], [0, 0, 1, 0], [], []>} : vector<8x16xbf16>, vector<8x16xbf16>, vector<8x8xf32> -> vector<8x8xf32>
    %c0_9 = arith.constant 0 : index
    %c0_10 = arith.constant 0 : index
    %c0_11 = arith.constant 0 : index
    %12 = vector.load %arg7[%c0_9, %c0_10, %c0_11] : memref<2x8x1xf32, #tpu.memory_space<vmem>>, vector<1x8x1xf32>
    %13 = vector.shape_cast %12 : vector<1x8x1xf32> to vector<8x1xf32>
    %cst_12 = arith.constant dense<0xFF800000> : vector<8xf32>
    %14 = vector.multi_reduction <maximumf>, %11, %cst_12 [1] : vector<8x8xf32> to vector<8xf32>
    %15 = vector.shape_cast %14 : vector<8xf32> to vector<8x1xf32>
    %16 = arith.maximumf %13, %15 : vector<8x1xf32>
    %17 = arith.subf %13, %16 : vector<8x1xf32>
    %18 = math.exp %17 : vector<8x1xf32>
    %19 = vector.broadcast %16 : vector<8x1xf32> to vector<8x8xf32>
    %20 = arith.subf %11, %19 : vector<8x8xf32>
    %21 = math.exp %20 : vector<8x8xf32>
    %c0_13 = arith.constant 0 : index
    %c0_14 = arith.constant 0 : index
    %c0_15 = arith.constant 0 : index
    %22 = vector.load %arg8[%c0_13, %c0_14, %c0_15] : memref<2x8x1xf32, #tpu.memory_space<vmem>>, vector<1x8x1xf32>
    %23 = vector.shape_cast %22 : vector<1x8x1xf32> to vector<8x1xf32>
    %24 = arith.mulf %18, %23 : vector<8x1xf32>
    %cst_16 = arith.constant dense<0.000000e+00> : vector<8xf32>
    %25 = vector.multi_reduction <add>, %21, %cst_16 [1] : vector<8x8xf32> to vector<8xf32>
    %26 = vector.shape_cast %25 : vector<8xf32> to vector<8x1xf32>
    %27 = arith.addf %24, %26 : vector<8x1xf32>
    %c0_17 = arith.constant 0 : index
    %c0_18 = arith.constant 0 : index
    %c0_19 = arith.constant 0 : index
    %28 = vector.load %arg8[%c0_17, %c0_18, %c0_19] : memref<2x8x1xf32, #tpu.memory_space<vmem>>, vector<1x8x1xf32>
    %29 = vector.shape_cast %28 : vector<1x8x1xf32> to vector<8x1xf32>
    %30 = vector.shape_cast %27 : vector<8x1xf32> to vector<1x8x1xf32>
    tpu.vector_store %arg8[%c0_17, %c0_18, %c0_19], %30 {strides = array<i32>} : memref<2x8x1xf32, #tpu.memory_space<vmem>>, vector<1x8x1xf32>,
    %c0_20 = arith.constant 0 : index
    %c0_21 = arith.constant 0 : index
    %c0_22 = arith.constant 0 : index
    %31 = vector.load %arg9[%c0_20, %c0_21, %c0_22] : memref<2x8x16xf32, #tpu.memory_space<vmem>>, vector<1x8x16xf32>
    %32 = vector.shape_cast %31 : vector<1x8x16xf32> to vector<8x16xf32>
    %33 = vector.broadcast %18 : vector<8x1xf32> to vector<8x16xf32>
    %34 = arith.mulf %33, %32 : vector<8x16xf32>
    %35 = arith.truncf %21 : vector<8x8xf32> to vector<8x8xbf16>
    %36 = vector.extract_strided_slice %8 {offsets = [0, 0], sizes = [8, 16], strides = [1, 1]} : vector<8x32xbf16> to vector<8x16xbf16>
    %cst_23 = arith.constant dense<0.000000e+00> : vector<8x16xf32>
    %37 = tpu.matmul %35, %36, %cst_23 {dimension_numbers = #tpu.dot_dimension_numbers<[1], [0], [0], [1], [0, 0, 1, 1], [], []>} : vector<8x8xbf16>, vector<8x16xbf16>, vector<8x16xf32> -> vector<8x16xf32>
    %38 = arith.addf %34, %37 : vector<8x16xf32>
    %c0_24 = arith.constant 0 : index
    %c0_25 = arith.constant 0 : index
    %c0_26 = arith.constant 0 : index
    %39 = vector.load %arg9[%c0_24, %c0_25, %c0_26] : memref<2x8x16xf32, #tpu.memory_space<vmem>>, vector<1x8x16xf32>
    %40 = vector.shape_cast %39 : vector<1x8x16xf32> to vector<8x16xf32>
    %41 = vector.shape_cast %38 : vector<8x16xf32> to vector<1x8x16xf32>
    tpu.vector_store %arg9[%c0_24, %c0_25, %c0_26], %41 {strides = array<i32>} : memref<2x8x16xf32, #tpu.memory_space<vmem>>, vector<1x8x16xf32>,
    %c0_27 = arith.constant 0 : index
    %c0_28 = arith.constant 0 : index
    %c0_29 = arith.constant 0 : index
    %42 = vector.load %arg7[%c0_27, %c0_28, %c0_29] : memref<2x8x1xf32, #tpu.memory_space<vmem>>, vector<1x8x1xf32>
    %43 = vector.shape_cast %42 : vector<1x8x1xf32> to vector<8x1xf32>
    %44 = vector.shape_cast %16 : vector<8x1xf32> to vector<1x8x1xf32>
    tpu.vector_store %arg7[%c0_27, %c0_28, %c0_29], %44 {strides = array<i32>} : memref<2x8x1xf32, #tpu.memory_space<vmem>>, vector<1x8x1xf32>,
    %45 = vector.extract_strided_slice %4 {offsets = [0, 16], sizes = [8, 16], strides = [1, 1]} : vector<8x32xbf16> to vector<8x16xbf16>
    %46 = vector.extract_strided_slice %6 {offsets = [0, 16], sizes = [8, 16], strides = [1, 1]} : vector<8x32xbf16> to vector<8x16xbf16>
    %cst_30 = arith.constant dense<0.000000e+00> : vector<8x8xf32>
    %47 = tpu.matmul %45, %46, %cst_30 {dimension_numbers = #tpu.dot_dimension_numbers<[1], [1], [0], [0], [0, 0, 1, 0], [], []>} : vector<8x16xbf16>, vector<8x16xbf16>, vector<8x8xf32> -> vector<8x8xf32>
    %c1 = arith.constant 1 : index
    %c0_31 = arith.constant 0 : index
    %c0_32 = arith.constant 0 : index
    %48 = vector.load %arg7[%c1, %c0_31, %c0_32] : memref<2x8x1xf32, #tpu.memory_space<vmem>>, vector<1x8x1xf32>
    %49 = vector.shape_cast %48 : vector<1x8x1xf32> to vector<8x1xf32>
    %cst_33 = arith.constant dense<0xFF800000> : vector<8xf32>
    %50 = vector.multi_reduction <maximumf>, %47, %cst_33 [1] : vector<8x8xf32> to vector<8xf32>
    %51 = vector.shape_cast %50 : vector<8xf32> to vector<8x1xf32>
    %52 = arith.maximumf %49, %51 : vector<8x1xf32>
    %53 = arith.subf %49, %52 : vector<8x1xf32>
    %54 = math.exp %53 : vector<8x1xf32>
    %55 = vector.broadcast %52 : vector<8x1xf32> to vector<8x8xf32>
    %56 = arith.subf %47, %55 : vector<8x8xf32>
    %57 = math.exp %56 : vector<8x8xf32>
    %c1_34 = arith.constant 1 : index
    %c0_35 = arith.constant 0 : index
    %c0_36 = arith.constant 0 : index
    %58 = vector.load %arg8[%c1_34, %c0_35, %c0_36] : memref<2x8x1xf32, #tpu.memory_space<vmem>>, vector<1x8x1xf32>
    %59 = vector.shape_cast %58 : vector<1x8x1xf32> to vector<8x1xf32>
    %60 = arith.mulf %54, %59 : vector<8x1xf32>
    %cst_37 = arith.constant dense<0.000000e+00> : vector<8xf32>
    %61 = vector.multi_reduction <add>, %57, %cst_37 [1] : vector<8x8xf32> to vector<8xf32>
    %62 = vector.shape_cast %61 : vector<8xf32> to vector<8x1xf32>
    %63 = arith.addf %60, %62 : vector<8x1xf32>
    %c1_38 = arith.constant 1 : index
    %c0_39 = arith.constant 0 : index
    %c0_40 = arith.constant 0 : index
    %64 = vector.load %arg8[%c1_38, %c0_39, %c0_40] : memref<2x8x1xf32, #tpu.memory_space<vmem>>, vector<1x8x1xf32>
    %65 = vector.shape_cast %64 : vector<1x8x1xf32> to vector<8x1xf32>
    %66 = vector.shape_cast %63 : vector<8x1xf32> to vector<1x8x1xf32>
    tpu.vector_store %arg8[%c1_38, %c0_39, %c0_40], %66 {strides = array<i32>} : memref<2x8x1xf32, #tpu.memory_space<vmem>>, vector<1x8x1xf32>,
    %c1_41 = arith.constant 1 : index
    %c0_42 = arith.constant 0 : index
    %c0_43 = arith.constant 0 : index
    %67 = vector.load %arg9[%c1_41, %c0_42, %c0_43] : memref<2x8x16xf32, #tpu.memory_space<vmem>>, vector<1x8x16xf32>
    %68 = vector.shape_cast %67 : vector<1x8x16xf32> to vector<8x16xf32>
    %69 = vector.broadcast %54 : vector<8x1xf32> to vector<8x16xf32>
    %70 = arith.mulf %69, %68 : vector<8x16xf32>
    %71 = arith.truncf %57 : vector<8x8xf32> to vector<8x8xbf16>
    %72 = vector.extract_strided_slice %8 {offsets = [0, 16], sizes = [8, 16], strides = [1, 1]} : vector<8x32xbf16> to vector<8x16xbf16>
    %cst_44 = arith.constant dense<0.000000e+00> : vector<8x16xf32>
    %73 = tpu.matmul %71, %72, %cst_44 {dimension_numbers = #tpu.dot_dimension_numbers<[1], [0], [0], [1], [0, 0, 1, 1], [], []>} : vector<8x8xbf16>, vector<8x16xbf16>, vector<8x16xf32> -> vector<8x16xf32>
    %74 = arith.addf %70, %73 : vector<8x16xf32>
    %c1_45 = arith.constant 1 : index
    %c0_46 = arith.constant 0 : index
    %c0_47 = arith.constant 0 : index
    %75 = vector.load %arg9[%c1_45, %c0_46, %c0_47] : memref<2x8x16xf32, #tpu.memory_space<vmem>>, vector<1x8x16xf32>
    %76 = vector.shape_cast %75 : vector<1x8x16xf32> to vector<8x16xf32>
    %77 = vector.shape_cast %74 : vector<8x16xf32> to vector<1x8x16xf32>
    tpu.vector_store %arg9[%c1_45, %c0_46, %c0_47], %77 {strides = array<i32>} : memref<2x8x16xf32, #tpu.memory_space<vmem>>, vector<1x8x16xf32>,
    %c1_48 = arith.constant 1 : index
    %c0_49 = arith.constant 0 : index
    %c0_50 = arith.constant 0 : index
    %78 = vector.load %arg7[%c1_48, %c0_49, %c0_50] : memref<2x8x1xf32, #tpu.memory_space<vmem>>, vector<1x8x1xf32>
    %79 = vector.shape_cast %78 : vector<1x8x1xf32> to vector<8x1xf32>
    %80 = vector.shape_cast %52 : vector<8x1xf32> to vector<1x8x1xf32>
    tpu.vector_store %arg7[%c1_48, %c0_49, %c0_50], %80 {strides = array<i32>} : memref<2x8x1xf32, #tpu.memory_space<vmem>>, vector<1x8x1xf32>,
    %c0_i32_51 = arith.constant 0 : i32
    %81 = arith.cmpi eq, %arg2, %c0_i32_51 : i32
    %82 = arith.extui %81 : i1 to i32
    %c0_i32_52 = arith.constant 0 : i32
    %83 = arith.cmpi ne, %82, %c0_i32_52 : i32
    scf.if %83 {
      %c0_53 = arith.constant 0 : index
      %c0_54 = arith.constant 0 : index
      %c0_55 = arith.constant 0 : index
      %84 = vector.load %arg8[%c0_53, %c0_54, %c0_55] : memref<2x8x1xf32, #tpu.memory_space<vmem>>, vector<1x8x1xf32>
      %85 = vector.shape_cast %84 : vector<1x8x1xf32> to vector<8x1xf32>
      %86 = tpu.reciprocal %85 {approx = true} : vector<8x1xf32> -> vector<8x1xf32>
      %c0_56 = arith.constant 0 : index
      %c0_57 = arith.constant 0 : index
      %c0_58 = arith.constant 0 : index
      %87 = vector.load %arg9[%c0_56, %c0_57, %c0_58] : memref<2x8x16xf32, #tpu.memory_space<vmem>>, vector<1x8x16xf32>
      %88 = vector.shape_cast %87 : vector<1x8x16xf32> to vector<8x16xf32>
      %89 = vector.broadcast %86 : vector<8x1xf32> to vector<8x16xf32>
      %90 = arith.mulf %88, %89 : vector<8x16xf32>
      %c1_59 = arith.constant 1 : index
      %c0_60 = arith.constant 0 : index
      %c0_61 = arith.constant 0 : index
      %91 = vector.load %arg8[%c1_59, %c0_60, %c0_61] : memref<2x8x1xf32, #tpu.memory_space<vmem>>, vector<1x8x1xf32>
      %92 = vector.shape_cast %91 : vector<1x8x1xf32> to vector<8x1xf32>
      %93 = tpu.reciprocal %92 {approx = true} : vector<8x1xf32> -> vector<8x1xf32>
      %c1_62 = arith.constant 1 : index
      %c0_63 = arith.constant 0 : index
      %c0_64 = arith.constant 0 : index
      %94 = vector.load %arg9[%c1_62, %c0_63, %c0_64] : memref<2x8x16xf32, #tpu.memory_space<vmem>>, vector<1x8x16xf32>
      %95 = vector.shape_cast %94 : vector<1x8x16xf32> to vector<8x16xf32>
      %96 = vector.broadcast %93 : vector<8x1xf32> to vector<8x16xf32>
      %97 = arith.mulf %95, %96 : vector<8x16xf32>
      %98 = tpu.concatenate %90, %97 in 1 : vector<8x16xf32>, vector<8x16xf32> -> vector<8x32xf32>
      %99 = arith.truncf %98 : vector<8x32xf32> to vector<8x32xbf16>
      %c0_65 = arith.constant 0 : index
      %c0_66 = arith.constant 0 : index
      %c0_67 = arith.constant 0 : index
      %100 = vector.load %arg6[%c0_65, %c0_66, %c0_67] : memref<1x8x32xbf16, #tpu.memory_space<vmem>>, vector<1x8x32xbf16>
      %101 = vector.shape_cast %100 : vector<1x8x32xbf16> to vector<8x32xbf16>
      %102 = vector.shape_cast %99 : vector<8x32xbf16> to vector<1x8x32xbf16>
      tpu.vector_store %arg6[%c0_65, %c0_66, %c0_67], %102 {strides = array<i32>} : memref<1x8x32xbf16, #tpu.memory_space<vmem>>, vector<1x8x32xbf16>,
    } else {
    }
    return
  }
  func.func @transform_0(%arg0: i32, %arg1: i32, %arg2: i32) -> (i32, i32, i32) {
    %c0_i32 = arith.constant 0 : i32
    %c0_i32_0 = arith.constant 0 : i32
    return %arg0, %arg1, %c0_i32 : i32, i32, i32
  }
  func.func @transform_1(%arg0: i32, %arg1: i32, %arg2: i32) -> (i32, i32, i32) {
    %c0_i32 = arith.constant 0 : i32
    %c0_i32_0 = arith.constant 0 : i32
    return %arg0, %arg2, %c0_i32 : i32, i32, i32
  }
  func.func @transform_2(%arg0: i32, %arg1: i32, %arg2: i32) -> (i32, i32, i32) {
    %c0_i32 = arith.constant 0 : i32
    %c0_i32_0 = arith.constant 0 : i32
    return %arg0, %arg2, %c0_i32 : i32, i32, i32
  }
  func.func @transform_3(%arg0: i32, %arg1: i32, %arg2: i32) -> (i32, i32, i32) {
    %c0_i32 = arith.constant 0 : i32
    %c0_i32_0 = arith.constant 0 : i32
    return %arg0, %arg1, %c0_i32 : i32, i32, i32
  }
}

module attributes {stable_mosaic.version = 11 : i64} {
  func.func @_matmul_res_ln_kernel(%arg0: i32, %arg1: i32, %arg2: memref<16x32xbf16, #tpu.memory_space<vmem>>, %arg3: memref<32x32xbf16, #tpu.memory_space<vmem>>, %arg4: memref<1x32xf32, #tpu.memory_space<vmem>>, %arg5: memref<16x32xbf16, #tpu.memory_space<vmem>>, %arg6: memref<1x32xf32, #tpu.memory_space<vmem>>, %arg7: memref<1x32xf32, #tpu.memory_space<vmem>>, %arg8: memref<16x32xbf16, #tpu.memory_space<vmem>>, %arg9: memref<16x32xf32, #tpu.memory_space<vmem>>) attributes {dimension_semantics = [#tpu.dimension_semantics<parallel>, #tpu.dimension_semantics<arbitrary>], iteration_bounds = array<i64: 1, 1>, scalar_prefetch = 0 : i64, scratch_operands = 1 : i64, tpu.core_type = #tpu.core_type<tc>, window_params = [{transform_indices = @transform_0, window_bounds = array<i64: 16, 32>}, {transform_indices = @transform_1, window_bounds = array<i64: 32, 32>}, {pipeline_mode = #tpu.pipeline_mode<synchronous>, transform_indices = @transform_2, window_bounds = array<i64: 1, 32>}, {transform_indices = @transform_3, window_bounds = array<i64: 16, 32>}, {pipeline_mode = #tpu.pipeline_mode<synchronous>, transform_indices = @transform_4, window_bounds = array<i64: 1, 32>}, {pipeline_mode = #tpu.pipeline_mode<synchronous>, transform_indices = @transform_5, window_bounds = array<i64: 1, 32>}, {transform_indices = @transform_6, window_bounds = array<i64: 16, 32>}]} {
    %c0_i32 = arith.constant 0 : i32
    %0 = arith.cmpi eq, %arg1, %c0_i32 : i32
    %1 = arith.extui %0 : i1 to i32
    %c0_i32_0 = arith.constant 0 : i32
    %2 = arith.cmpi ne, %1, %c0_i32_0 : i32
    scf.if %2 {
      %cst_10 = arith.constant 0.000000e+00 : f32
      %12 = vector.broadcast %cst_10 : f32 to vector<16x32xf32>
      %c0_11 = arith.constant 0 : index
      %c0_12 = arith.constant 0 : index
      %13 = vector.load %arg9[%c0_11, %c0_12] : memref<16x32xf32, #tpu.memory_space<vmem>>, vector<16x32xf32>
      tpu.vector_store %arg9[%c0_11, %c0_12], %12 {strides = array<i32>} : memref<16x32xf32, #tpu.memory_space<vmem>>, vector<16x32xf32>,
    } else {
    }
    %c0 = arith.constant 0 : index
    %c0_1 = arith.constant 0 : index
    %3 = vector.load %arg9[%c0, %c0_1] : memref<16x32xf32, #tpu.memory_space<vmem>>, vector<16x32xf32>
    %c0_2 = arith.constant 0 : index
    %c0_3 = arith.constant 0 : index
    %4 = vector.load %arg2[%c0_2, %c0_3] : memref<16x32xbf16, #tpu.memory_space<vmem>>, vector<16x32xbf16>
    %c0_4 = arith.constant 0 : index
    %c0_5 = arith.constant 0 : index
    %5 = vector.load %arg3[%c0_4, %c0_5] : memref<32x32xbf16, #tpu.memory_space<vmem>>, vector<32x32xbf16>
    %cst = arith.constant dense<0.000000e+00> : vector<16x32xf32>
    %6 = tpu.matmul %4, %5, %cst {dimension_numbers = #tpu.dot_dimension_numbers<[1], [0], [0], [1], [0, 0, 1, 1], [], []>} : vector<16x32xbf16>, vector<32x32xbf16>, vector<16x32xf32> -> vector<16x32xf32>
    %7 = arith.addf %3, %6 : vector<16x32xf32>
    %c0_6 = arith.constant 0 : index
    %c0_7 = arith.constant 0 : index
    %8 = vector.load %arg9[%c0_6, %c0_7] : memref<16x32xf32, #tpu.memory_space<vmem>>, vector<16x32xf32>
    tpu.vector_store %arg9[%c0_6, %c0_7], %7 {strides = array<i32>} : memref<16x32xf32, #tpu.memory_space<vmem>>, vector<16x32xf32>,
    %c0_i32_8 = arith.constant 0 : i32
    %9 = arith.cmpi eq, %arg1, %c0_i32_8 : i32
    %10 = arith.extui %9 : i1 to i32
    %c0_i32_9 = arith.constant 0 : i32
    %11 = arith.cmpi ne, %10, %c0_i32_9 : i32
    scf.if %11 {
      %c0_10 = arith.constant 0 : index
      %c0_11 = arith.constant 0 : index
      %12 = vector.load %arg9[%c0_10, %c0_11] : memref<16x32xf32, #tpu.memory_space<vmem>>, vector<16x32xf32>
      %c0_12 = arith.constant 0 : index
      %c0_13 = arith.constant 0 : index
      %13 = vector.load %arg4[%c0_12, %c0_13] : memref<1x32xf32, #tpu.memory_space<vmem>>, vector<1x32xf32>
      %14 = vector.broadcast %13 : vector<1x32xf32> to vector<16x32xf32>
      %15 = arith.addf %12, %14 : vector<16x32xf32>
      %c0_14 = arith.constant 0 : index
      %c0_15 = arith.constant 0 : index
      %16 = vector.load %arg5[%c0_14, %c0_15] : memref<16x32xbf16, #tpu.memory_space<vmem>>, vector<16x32xbf16>
      %17 = arith.extf %16 : vector<16x32xbf16> to vector<16x32xf32>
      %18 = arith.addf %15, %17 : vector<16x32xf32>
      %cst_16 = arith.constant dense<0.000000e+00> : vector<16xf32>
      %19 = vector.multi_reduction <add>, %18, %cst_16 [1] : vector<16x32xf32> to vector<16xf32>
      %20 = vector.shape_cast %19 : vector<16xf32> to vector<16x1xf32>
      %cst_17 = arith.constant 3.200000e+01 : f32
      %21 = vector.broadcast %cst_17 : f32 to vector<16x1xf32>
      %22 = arith.divf %20, %21 : vector<16x1xf32>
      %23 = vector.broadcast %22 : vector<16x1xf32> to vector<16x32xf32>
      %24 = arith.subf %18, %23 : vector<16x32xf32>
      %25 = arith.mulf %24, %24 : vector<16x32xf32>
      %cst_18 = arith.constant dense<0.000000e+00> : vector<16xf32>
      %26 = vector.multi_reduction <add>, %25, %cst_18 [1] : vector<16x32xf32> to vector<16xf32>
      %27 = vector.shape_cast %26 : vector<16xf32> to vector<16x1xf32>
      %cst_19 = arith.constant 3.200000e+01 : f32
      %28 = vector.broadcast %cst_19 : f32 to vector<16x1xf32>
      %29 = arith.divf %27, %28 : vector<16x1xf32>
      %30 = vector.broadcast %22 : vector<16x1xf32> to vector<16x32xf32>
      %31 = arith.subf %18, %30 : vector<16x32xf32>
      %cst_20 = arith.constant 9.99999974E-6 : f32
      %32 = vector.broadcast %cst_20 : f32 to vector<16x1xf32>
      %33 = arith.addf %29, %32 : vector<16x1xf32>
      %34 = math.rsqrt %33 : vector<16x1xf32>
      %35 = vector.broadcast %34 : vector<16x1xf32> to vector<16x32xf32>
      %36 = arith.mulf %31, %35 : vector<16x32xf32>
      %c0_21 = arith.constant 0 : index
      %c0_22 = arith.constant 0 : index
      %37 = vector.load %arg6[%c0_21, %c0_22] : memref<1x32xf32, #tpu.memory_space<vmem>>, vector<1x32xf32>
      %38 = vector.broadcast %37 : vector<1x32xf32> to vector<16x32xf32>
      %39 = arith.mulf %36, %38 : vector<16x32xf32>
      %c0_23 = arith.constant 0 : index
      %c0_24 = arith.constant 0 : index
      %40 = vector.load %arg7[%c0_23, %c0_24] : memref<1x32xf32, #tpu.memory_space<vmem>>, vector<1x32xf32>
      %41 = vector.broadcast %40 : vector<1x32xf32> to vector<16x32xf32>
      %42 = arith.addf %39, %41 : vector<16x32xf32>
      %43 = arith.truncf %42 : vector<16x32xf32> to vector<16x32xbf16>
      %c0_25 = arith.constant 0 : index
      %c0_26 = arith.constant 0 : index
      %44 = vector.load %arg8[%c0_25, %c0_26] : memref<16x32xbf16, #tpu.memory_space<vmem>>, vector<16x32xbf16>
      tpu.vector_store %arg8[%c0_25, %c0_26], %43 {strides = array<i32>} : memref<16x32xbf16, #tpu.memory_space<vmem>>, vector<16x32xbf16>,
    } else {
    }
    return
  }
  func.func @transform_0(%arg0: i32, %arg1: i32) -> (i32, i32) {
    %c0_i32 = arith.constant 0 : i32
    return %arg0, %arg1 : i32, i32
  }
  func.func @transform_1(%arg0: i32, %arg1: i32) -> (i32, i32) {
    %c0_i32 = arith.constant 0 : i32
    %c0_i32_0 = arith.constant 0 : i32
    return %arg1, %c0_i32 : i32, i32
  }
  func.func @transform_2(%arg0: i32, %arg1: i32) -> (i32, i32) {
    %c0_i32 = arith.constant 0 : i32
    %c0_i32_0 = arith.constant 0 : i32
    %c0_i32_1 = arith.constant 0 : i32
    return %c0_i32, %c0_i32_0 : i32, i32
  }
  func.func @transform_3(%arg0: i32, %arg1: i32) -> (i32, i32) {
    %c0_i32 = arith.constant 0 : i32
    %c0_i32_0 = arith.constant 0 : i32
    return %arg0, %c0_i32 : i32, i32
  }
  func.func @transform_4(%arg0: i32, %arg1: i32) -> (i32, i32) {
    %c0_i32 = arith.constant 0 : i32
    %c0_i32_0 = arith.constant 0 : i32
    %c0_i32_1 = arith.constant 0 : i32
    return %c0_i32, %c0_i32_0 : i32, i32
  }
  func.func @transform_5(%arg0: i32, %arg1: i32) -> (i32, i32) {
    %c0_i32 = arith.constant 0 : i32
    %c0_i32_0 = arith.constant 0 : i32
    %c0_i32_1 = arith.constant 0 : i32
    return %c0_i32, %c0_i32_0 : i32, i32
  }
  func.func @transform_6(%arg0: i32, %arg1: i32) -> (i32, i32) {
    %c0_i32 = arith.constant 0 : i32
    %c0_i32_0 = arith.constant 0 : i32
    return %arg0, %c0_i32 : i32, i32
  }
}

module attributes {stable_mosaic.version = 11 : i64} {
  func.func @_layernorm_kernel(%arg0: i32, %arg1: memref<16x32xbf16, #tpu.memory_space<vmem>>, %arg2: memref<1x32xf32, #tpu.memory_space<vmem>>, %arg3: memref<1x32xf32, #tpu.memory_space<vmem>>, %arg4: memref<16x32xbf16, #tpu.memory_space<vmem>>) attributes {dimension_semantics = [#tpu.dimension_semantics<parallel>], iteration_bounds = array<i64: 1>, scalar_prefetch = 0 : i64, scratch_operands = 0 : i64, tpu.core_type = #tpu.core_type<tc>, window_params = [{transform_indices = @transform_0, window_bounds = array<i64: 16, 32>}, {pipeline_mode = #tpu.pipeline_mode<synchronous>, transform_indices = @transform_1, window_bounds = array<i64: 1, 32>}, {pipeline_mode = #tpu.pipeline_mode<synchronous>, transform_indices = @transform_2, window_bounds = array<i64: 1, 32>}, {transform_indices = @transform_3, window_bounds = array<i64: 16, 32>}]} {
    %c0 = arith.constant 0 : index
    %c0_0 = arith.constant 0 : index
    %0 = vector.load %arg1[%c0, %c0_0] : memref<16x32xbf16, #tpu.memory_space<vmem>>, vector<16x32xbf16>
    %1 = arith.extf %0 : vector<16x32xbf16> to vector<16x32xf32>
    %cst = arith.constant dense<0.000000e+00> : vector<16xf32>
    %2 = vector.multi_reduction <add>, %1, %cst [1] : vector<16x32xf32> to vector<16xf32>
    %3 = vector.shape_cast %2 : vector<16xf32> to vector<16x1xf32>
    %cst_1 = arith.constant 3.200000e+01 : f32
    %4 = vector.broadcast %cst_1 : f32 to vector<16x1xf32>
    %5 = arith.divf %3, %4 : vector<16x1xf32>
    %6 = vector.broadcast %5 : vector<16x1xf32> to vector<16x32xf32>
    %7 = arith.subf %1, %6 : vector<16x32xf32>
    %8 = arith.mulf %7, %7 : vector<16x32xf32>
    %cst_2 = arith.constant dense<0.000000e+00> : vector<16xf32>
    %9 = vector.multi_reduction <add>, %8, %cst_2 [1] : vector<16x32xf32> to vector<16xf32>
    %10 = vector.shape_cast %9 : vector<16xf32> to vector<16x1xf32>
    %cst_3 = arith.constant 3.200000e+01 : f32
    %11 = vector.broadcast %cst_3 : f32 to vector<16x1xf32>
    %12 = arith.divf %10, %11 : vector<16x1xf32>
    %13 = vector.broadcast %5 : vector<16x1xf32> to vector<16x32xf32>
    %14 = arith.subf %1, %13 : vector<16x32xf32>
    %cst_4 = arith.constant 9.99999974E-6 : f32
    %15 = vector.broadcast %cst_4 : f32 to vector<16x1xf32>
    %16 = arith.addf %12, %15 : vector<16x1xf32>
    %17 = math.rsqrt %16 : vector<16x1xf32>
    %18 = vector.broadcast %17 : vector<16x1xf32> to vector<16x32xf32>
    %19 = arith.mulf %14, %18 : vector<16x32xf32>
    %c0_5 = arith.constant 0 : index
    %c0_6 = arith.constant 0 : index
    %20 = vector.load %arg2[%c0_5, %c0_6] : memref<1x32xf32, #tpu.memory_space<vmem>>, vector<1x32xf32>
    %21 = vector.broadcast %20 : vector<1x32xf32> to vector<16x32xf32>
    %22 = arith.mulf %19, %21 : vector<16x32xf32>
    %c0_7 = arith.constant 0 : index
    %c0_8 = arith.constant 0 : index
    %23 = vector.load %arg3[%c0_7, %c0_8] : memref<1x32xf32, #tpu.memory_space<vmem>>, vector<1x32xf32>
    %24 = vector.broadcast %23 : vector<1x32xf32> to vector<16x32xf32>
    %25 = arith.addf %22, %24 : vector<16x32xf32>
    %26 = arith.truncf %25 : vector<16x32xf32> to vector<16x32xbf16>
    %c0_9 = arith.constant 0 : index
    %c0_10 = arith.constant 0 : index
    %27 = vector.load %arg4[%c0_9, %c0_10] : memref<16x32xbf16, #tpu.memory_space<vmem>>, vector<16x32xbf16>
    tpu.vector_store %arg4[%c0_9, %c0_10], %26 {strides = array<i32>} : memref<16x32xbf16, #tpu.memory_space<vmem>>, vector<16x32xbf16>,
    return
  }
  func.func @transform_0(%arg0: i32) -> (i32, i32) {
    %c0_i32 = arith.constant 0 : i32
    %c0_i32_0 = arith.constant 0 : i32
    return %arg0, %c0_i32 : i32, i32
  }
  func.func @transform_1(%arg0: i32) -> (i32, i32) {
    %c0_i32 = arith.constant 0 : i32
    %c0_i32_0 = arith.constant 0 : i32
    %c0_i32_1 = arith.constant 0 : i32
    return %c0_i32, %c0_i32_0 : i32, i32
  }
  func.func @transform_2(%arg0: i32) -> (i32, i32) {
    %c0_i32 = arith.constant 0 : i32
    %c0_i32_0 = arith.constant 0 : i32
    %c0_i32_1 = arith.constant 0 : i32
    return %c0_i32, %c0_i32_0 : i32, i32
  }
  func.func @transform_3(%arg0: i32) -> (i32, i32) {
    %c0_i32 = arith.constant 0 : i32
    %c0_i32_0 = arith.constant 0 : i32
    return %arg0, %c0_i32 : i32, i32
  }
}

module attributes {stable_mosaic.version = 11 : i64} {
  func.func @_ffn_res_ln_kernel(%arg0: i32, %arg1: i32, %arg2: memref<16x32xbf16, #tpu.memory_space<vmem>>, %arg3: memref<32x256xbf16, #tpu.memory_space<vmem>>, %arg4: memref<1x256xf32, #tpu.memory_space<vmem>>, %arg5: memref<256x32xbf16, #tpu.memory_space<vmem>>, %arg6: memref<1x32xf32, #tpu.memory_space<vmem>>, %arg7: memref<1x32xf32, #tpu.memory_space<vmem>>, %arg8: memref<1x32xf32, #tpu.memory_space<vmem>>, %arg9: memref<16x32xbf16, #tpu.memory_space<vmem>>, %arg10: memref<16x32xf32, #tpu.memory_space<vmem>>) attributes {dimension_semantics = [#tpu.dimension_semantics<parallel>, #tpu.dimension_semantics<arbitrary>], iteration_bounds = array<i64: 1, 8>, scalar_prefetch = 0 : i64, scratch_operands = 1 : i64, tpu.core_type = #tpu.core_type<tc>, window_params = [{transform_indices = @transform_0, window_bounds = array<i64: 16, 32>}, {transform_indices = @transform_1, window_bounds = array<i64: 32, 256>}, {transform_indices = @transform_2, window_bounds = array<i64: 1, 256>}, {transform_indices = @transform_3, window_bounds = array<i64: 256, 32>}, {pipeline_mode = #tpu.pipeline_mode<synchronous>, transform_indices = @transform_4, window_bounds = array<i64: 1, 32>}, {pipeline_mode = #tpu.pipeline_mode<synchronous>, transform_indices = @transform_5, window_bounds = array<i64: 1, 32>}, {pipeline_mode = #tpu.pipeline_mode<synchronous>, transform_indices = @transform_6, window_bounds = array<i64: 1, 32>}, {transform_indices = @transform_7, window_bounds = array<i64: 16, 32>}]} {
    %c0_i32 = arith.constant 0 : i32
    %0 = arith.cmpi eq, %arg1, %c0_i32 : i32
    %1 = arith.extui %0 : i1 to i32
    %c0_i32_0 = arith.constant 0 : i32
    %2 = arith.cmpi ne, %1, %c0_i32_0 : i32
    scf.if %2 {
      %cst_15 = arith.constant 0.000000e+00 : f32
      %20 = vector.broadcast %cst_15 : f32 to vector<16x32xf32>
      %c0_16 = arith.constant 0 : index
      %c0_17 = arith.constant 0 : index
      %21 = vector.load %arg10[%c0_16, %c0_17] : memref<16x32xf32, #tpu.memory_space<vmem>>, vector<16x32xf32>
      tpu.vector_store %arg10[%c0_16, %c0_17], %20 {strides = array<i32>} : memref<16x32xf32, #tpu.memory_space<vmem>>, vector<16x32xf32>,
    } else {
    }
    %c0 = arith.constant 0 : index
    %c0_1 = arith.constant 0 : index
    %3 = vector.load %arg2[%c0, %c0_1] : memref<16x32xbf16, #tpu.memory_space<vmem>>, vector<16x32xbf16>
    %c0_2 = arith.constant 0 : index
    %c0_3 = arith.constant 0 : index
    %4 = vector.load %arg3[%c0_2, %c0_3] : memref<32x256xbf16, #tpu.memory_space<vmem>>, vector<32x256xbf16>
    %cst = arith.constant dense<0.000000e+00> : vector<16x256xf32>
    %5 = tpu.matmul %3, %4, %cst {dimension_numbers = #tpu.dot_dimension_numbers<[1], [0], [0], [1], [0, 0, 1, 1], [], []>} : vector<16x32xbf16>, vector<32x256xbf16>, vector<16x256xf32> -> vector<16x256xf32>
    %c0_4 = arith.constant 0 : index
    %c0_5 = arith.constant 0 : index
    %6 = vector.load %arg4[%c0_4, %c0_5] : memref<1x256xf32, #tpu.memory_space<vmem>>, vector<1x256xf32>
    %7 = vector.broadcast %6 : vector<1x256xf32> to vector<16x256xf32>
    %8 = arith.addf %5, %7 : vector<16x256xf32>
    %cst_6 = arith.constant 0.000000e+00 : f32
    %9 = vector.broadcast %cst_6 : f32 to vector<16x256xf32>
    %10 = arith.maximumf %8, %9 : vector<16x256xf32>
    %11 = arith.truncf %10 : vector<16x256xf32> to vector<16x256xbf16>
    %c0_7 = arith.constant 0 : index
    %c0_8 = arith.constant 0 : index
    %12 = vector.load %arg10[%c0_7, %c0_8] : memref<16x32xf32, #tpu.memory_space<vmem>>, vector<16x32xf32>
    %c0_9 = arith.constant 0 : index
    %c0_10 = arith.constant 0 : index
    %13 = vector.load %arg5[%c0_9, %c0_10] : memref<256x32xbf16, #tpu.memory_space<vmem>>, vector<256x32xbf16>
    %cst_11 = arith.constant dense<0.000000e+00> : vector<16x32xf32>
    %14 = tpu.matmul %11, %13, %cst_11 {dimension_numbers = #tpu.dot_dimension_numbers<[1], [0], [0], [1], [0, 0, 1, 1], [], []>} : vector<16x256xbf16>, vector<256x32xbf16>, vector<16x32xf32> -> vector<16x32xf32>
    %15 = arith.addf %12, %14 : vector<16x32xf32>
    %c0_12 = arith.constant 0 : index
    %c0_13 = arith.constant 0 : index
    %16 = vector.load %arg10[%c0_12, %c0_13] : memref<16x32xf32, #tpu.memory_space<vmem>>, vector<16x32xf32>
    tpu.vector_store %arg10[%c0_12, %c0_13], %15 {strides = array<i32>} : memref<16x32xf32, #tpu.memory_space<vmem>>, vector<16x32xf32>,
    %c7_i32 = arith.constant 7 : i32
    %17 = arith.cmpi eq, %arg1, %c7_i32 : i32
    %18 = arith.extui %17 : i1 to i32
    %c0_i32_14 = arith.constant 0 : i32
    %19 = arith.cmpi ne, %18, %c0_i32_14 : i32
    scf.if %19 {
      %c0_15 = arith.constant 0 : index
      %c0_16 = arith.constant 0 : index
      %20 = vector.load %arg10[%c0_15, %c0_16] : memref<16x32xf32, #tpu.memory_space<vmem>>, vector<16x32xf32>
      %c0_17 = arith.constant 0 : index
      %c0_18 = arith.constant 0 : index
      %21 = vector.load %arg6[%c0_17, %c0_18] : memref<1x32xf32, #tpu.memory_space<vmem>>, vector<1x32xf32>
      %22 = vector.broadcast %21 : vector<1x32xf32> to vector<16x32xf32>
      %23 = arith.addf %20, %22 : vector<16x32xf32>
      %c0_19 = arith.constant 0 : index
      %c0_20 = arith.constant 0 : index
      %24 = vector.load %arg2[%c0_19, %c0_20] : memref<16x32xbf16, #tpu.memory_space<vmem>>, vector<16x32xbf16>
      %25 = arith.extf %24 : vector<16x32xbf16> to vector<16x32xf32>
      %26 = arith.addf %23, %25 : vector<16x32xf32>
      %cst_21 = arith.constant dense<0.000000e+00> : vector<16xf32>
      %27 = vector.multi_reduction <add>, %26, %cst_21 [1] : vector<16x32xf32> to vector<16xf32>
      %28 = vector.shape_cast %27 : vector<16xf32> to vector<16x1xf32>
      %cst_22 = arith.constant 3.200000e+01 : f32
      %29 = vector.broadcast %cst_22 : f32 to vector<16x1xf32>
      %30 = arith.divf %28, %29 : vector<16x1xf32>
      %31 = vector.broadcast %30 : vector<16x1xf32> to vector<16x32xf32>
      %32 = arith.subf %26, %31 : vector<16x32xf32>
      %33 = arith.mulf %32, %32 : vector<16x32xf32>
      %cst_23 = arith.constant dense<0.000000e+00> : vector<16xf32>
      %34 = vector.multi_reduction <add>, %33, %cst_23 [1] : vector<16x32xf32> to vector<16xf32>
      %35 = vector.shape_cast %34 : vector<16xf32> to vector<16x1xf32>
      %cst_24 = arith.constant 3.200000e+01 : f32
      %36 = vector.broadcast %cst_24 : f32 to vector<16x1xf32>
      %37 = arith.divf %35, %36 : vector<16x1xf32>
      %38 = vector.broadcast %30 : vector<16x1xf32> to vector<16x32xf32>
      %39 = arith.subf %26, %38 : vector<16x32xf32>
      %cst_25 = arith.constant 9.99999974E-6 : f32
      %40 = vector.broadcast %cst_25 : f32 to vector<16x1xf32>
      %41 = arith.addf %37, %40 : vector<16x1xf32>
      %42 = math.rsqrt %41 : vector<16x1xf32>
      %43 = vector.broadcast %42 : vector<16x1xf32> to vector<16x32xf32>
      %44 = arith.mulf %39, %43 : vector<16x32xf32>
      %c0_26 = arith.constant 0 : index
      %c0_27 = arith.constant 0 : index
      %45 = vector.load %arg7[%c0_26, %c0_27] : memref<1x32xf32, #tpu.memory_space<vmem>>, vector<1x32xf32>
      %46 = vector.broadcast %45 : vector<1x32xf32> to vector<16x32xf32>
      %47 = arith.mulf %44, %46 : vector<16x32xf32>
      %c0_28 = arith.constant 0 : index
      %c0_29 = arith.constant 0 : index
      %48 = vector.load %arg8[%c0_28, %c0_29] : memref<1x32xf32, #tpu.memory_space<vmem>>, vector<1x32xf32>
      %49 = vector.broadcast %48 : vector<1x32xf32> to vector<16x32xf32>
      %50 = arith.addf %47, %49 : vector<16x32xf32>
      %51 = arith.truncf %50 : vector<16x32xf32> to vector<16x32xbf16>
      %c0_30 = arith.constant 0 : index
      %c0_31 = arith.constant 0 : index
      %52 = vector.load %arg9[%c0_30, %c0_31] : memref<16x32xbf16, #tpu.memory_space<vmem>>, vector<16x32xbf16>
      tpu.vector_store %arg9[%c0_30, %c0_31], %51 {strides = array<i32>} : memref<16x32xbf16, #tpu.memory_space<vmem>>, vector<16x32xbf16>,
    } else {
    }
    return
  }
  func.func @transform_0(%arg0: i32, %arg1: i32) -> (i32, i32) {
    %c0_i32 = arith.constant 0 : i32
    %c0_i32_0 = arith.constant 0 : i32
    return %arg0, %c0_i32 : i32, i32
  }
  func.func @transform_1(%arg0: i32, %arg1: i32) -> (i32, i32) {
    %c0_i32 = arith.constant 0 : i32
    %c0_i32_0 = arith.constant 0 : i32
    return %c0_i32, %arg1 : i32, i32
  }
  func.func @transform_2(%arg0: i32, %arg1: i32) -> (i32, i32) {
    %c0_i32 = arith.constant 0 : i32
    %c0_i32_0 = arith.constant 0 : i32
    return %c0_i32, %arg1 : i32, i32
  }
  func.func @transform_3(%arg0: i32, %arg1: i32) -> (i32, i32) {
    %c0_i32 = arith.constant 0 : i32
    %c0_i32_0 = arith.constant 0 : i32
    return %arg1, %c0_i32 : i32, i32
  }
  func.func @transform_4(%arg0: i32, %arg1: i32) -> (i32, i32) {
    %c0_i32 = arith.constant 0 : i32
    %c0_i32_0 = arith.constant 0 : i32
    %c0_i32_1 = arith.constant 0 : i32
    return %c0_i32, %c0_i32_0 : i32, i32
  }
  func.func @transform_5(%arg0: i32, %arg1: i32) -> (i32, i32) {
    %c0_i32 = arith.constant 0 : i32
    %c0_i32_0 = arith.constant 0 : i32
    %c0_i32_1 = arith.constant 0 : i32
    return %c0_i32, %c0_i32_0 : i32, i32
  }
  func.func @transform_6(%arg0: i32, %arg1: i32) -> (i32, i32) {
    %c0_i32 = arith.constant 0 : i32
    %c0_i32_0 = arith.constant 0 : i32
    %c0_i32_1 = arith.constant 0 : i32
    return %c0_i32, %c0_i32_0 : i32, i32
  }
  func.func @transform_7(%arg0: i32, %arg1: i32) -> (i32, i32) {
    %c0_i32 = arith.constant 0 : i32
    %c0_i32_0 = arith.constant 0 : i32
    return %arg0, %c0_i32 : i32, i32
  }
}

module attributes {stable_mosaic.version = 11 : i64} {
  func.func @_matmul_bias_kernel(%arg0: i32, %arg1: i32, %arg2: i32, %arg3: memref<16x32xbf16, #tpu.memory_space<vmem>>, %arg4: memref<32x64xbf16, #tpu.memory_space<vmem>>, %arg5: memref<1x64xf32, #tpu.memory_space<vmem>>, %arg6: memref<16x64xbf16, #tpu.memory_space<vmem>>, %arg7: memref<16x64xf32, #tpu.memory_space<vmem>>) attributes {dimension_semantics = [#tpu.dimension_semantics<parallel>, #tpu.dimension_semantics<parallel>, #tpu.dimension_semantics<arbitrary>], iteration_bounds = array<i64: 1, 1, 1>, scalar_prefetch = 0 : i64, scratch_operands = 1 : i64, tpu.core_type = #tpu.core_type<tc>, window_params = [{transform_indices = @transform_0, window_bounds = array<i64: 16, 32>}, {transform_indices = @transform_1, window_bounds = array<i64: 32, 64>}, {transform_indices = @transform_2, window_bounds = array<i64: 1, 64>}, {transform_indices = @transform_3, window_bounds = array<i64: 16, 64>}]} {
    %c0_i32 = arith.constant 0 : i32
    %0 = arith.cmpi eq, %arg2, %c0_i32 : i32
    %1 = arith.extui %0 : i1 to i32
    %c0_i32_0 = arith.constant 0 : i32
    %2 = arith.cmpi ne, %1, %c0_i32_0 : i32
    scf.if %2 {
      %cst_10 = arith.constant 0.000000e+00 : f32
      %12 = vector.broadcast %cst_10 : f32 to vector<16x64xf32>
      %c0_11 = arith.constant 0 : index
      %c0_12 = arith.constant 0 : index
      %13 = vector.load %arg7[%c0_11, %c0_12] : memref<16x64xf32, #tpu.memory_space<vmem>>, vector<16x64xf32>
      tpu.vector_store %arg7[%c0_11, %c0_12], %12 {strides = array<i32>} : memref<16x64xf32, #tpu.memory_space<vmem>>, vector<16x64xf32>,
    } else {
    }
    %c0 = arith.constant 0 : index
    %c0_1 = arith.constant 0 : index
    %3 = vector.load %arg7[%c0, %c0_1] : memref<16x64xf32, #tpu.memory_space<vmem>>, vector<16x64xf32>
    %c0_2 = arith.constant 0 : index
    %c0_3 = arith.constant 0 : index
    %4 = vector.load %arg3[%c0_2, %c0_3] : memref<16x32xbf16, #tpu.memory_space<vmem>>, vector<16x32xbf16>
    %c0_4 = arith.constant 0 : index
    %c0_5 = arith.constant 0 : index
    %5 = vector.load %arg4[%c0_4, %c0_5] : memref<32x64xbf16, #tpu.memory_space<vmem>>, vector<32x64xbf16>
    %cst = arith.constant dense<0.000000e+00> : vector<16x64xf32>
    %6 = tpu.matmul %4, %5, %cst {dimension_numbers = #tpu.dot_dimension_numbers<[1], [0], [0], [1], [0, 0, 1, 1], [], []>} : vector<16x32xbf16>, vector<32x64xbf16>, vector<16x64xf32> -> vector<16x64xf32>
    %7 = arith.addf %3, %6 : vector<16x64xf32>
    %c0_6 = arith.constant 0 : index
    %c0_7 = arith.constant 0 : index
    %8 = vector.load %arg7[%c0_6, %c0_7] : memref<16x64xf32, #tpu.memory_space<vmem>>, vector<16x64xf32>
    tpu.vector_store %arg7[%c0_6, %c0_7], %7 {strides = array<i32>} : memref<16x64xf32, #tpu.memory_space<vmem>>, vector<16x64xf32>,
    %c0_i32_8 = arith.constant 0 : i32
    %9 = arith.cmpi eq, %arg2, %c0_i32_8 : i32
    %10 = arith.extui %9 : i1 to i32
    %c0_i32_9 = arith.constant 0 : i32
    %11 = arith.cmpi ne, %10, %c0_i32_9 : i32
    scf.if %11 {
      %c0_10 = arith.constant 0 : index
      %c0_11 = arith.constant 0 : index
      %12 = vector.load %arg7[%c0_10, %c0_11] : memref<16x64xf32, #tpu.memory_space<vmem>>, vector<16x64xf32>
      %c0_12 = arith.constant 0 : index
      %c0_13 = arith.constant 0 : index
      %13 = vector.load %arg5[%c0_12, %c0_13] : memref<1x64xf32, #tpu.memory_space<vmem>>, vector<1x64xf32>
      %14 = vector.broadcast %13 : vector<1x64xf32> to vector<16x64xf32>
      %15 = arith.addf %12, %14 : vector<16x64xf32>
      %16 = arith.truncf %15 : vector<16x64xf32> to vector<16x64xbf16>
      %c0_14 = arith.constant 0 : index
      %c0_15 = arith.constant 0 : index
      %17 = vector.load %arg6[%c0_14, %c0_15] : memref<16x64xbf16, #tpu.memory_space<vmem>>, vector<16x64xbf16>
      tpu.vector_store %arg6[%c0_14, %c0_15], %16 {strides = array<i32>} : memref<16x64xbf16, #tpu.memory_space<vmem>>, vector<16x64xbf16>,
    } else {
    }
    return
  }
  func.func @transform_0(%arg0: i32, %arg1: i32, %arg2: i32) -> (i32, i32) {
    %c0_i32 = arith.constant 0 : i32
    return %arg0, %arg2 : i32, i32
  }
  func.func @transform_1(%arg0: i32, %arg1: i32, %arg2: i32) -> (i32, i32) {
    %c0_i32 = arith.constant 0 : i32
    return %arg2, %arg1 : i32, i32
  }
  func.func @transform_2(%arg0: i32, %arg1: i32, %arg2: i32) -> (i32, i32) {
    %c0_i32 = arith.constant 0 : i32
    %c0_i32_0 = arith.constant 0 : i32
    return %c0_i32, %arg1 : i32, i32
  }
  func.func @transform_3(%arg0: i32, %arg1: i32, %arg2: i32) -> (i32, i32) {
    %c0_i32 = arith.constant 0 : i32
    return %arg0, %arg1 : i32, i32
  }
}

module attributes {stable_mosaic.version = 11 : i64} {
  func.func @_matmul_bias_kernel(%arg0: i32, %arg1: i32, %arg2: i32, %arg3: memref<16x32xbf16, #tpu.memory_space<vmem>>, %arg4: memref<32x32xbf16, #tpu.memory_space<vmem>>, %arg5: memref<1x32xf32, #tpu.memory_space<vmem>>, %arg6: memref<16x32xbf16, #tpu.memory_space<vmem>>, %arg7: memref<16x32xf32, #tpu.memory_space<vmem>>) attributes {dimension_semantics = [#tpu.dimension_semantics<parallel>, #tpu.dimension_semantics<parallel>, #tpu.dimension_semantics<arbitrary>], iteration_bounds = array<i64: 1, 1, 1>, scalar_prefetch = 0 : i64, scratch_operands = 1 : i64, tpu.core_type = #tpu.core_type<tc>, window_params = [{transform_indices = @transform_0, window_bounds = array<i64: 16, 32>}, {transform_indices = @transform_1, window_bounds = array<i64: 32, 32>}, {transform_indices = @transform_2, window_bounds = array<i64: 1, 32>}, {transform_indices = @transform_3, window_bounds = array<i64: 16, 32>}]} {
    %c0_i32 = arith.constant 0 : i32
    %0 = arith.cmpi eq, %arg2, %c0_i32 : i32
    %1 = arith.extui %0 : i1 to i32
    %c0_i32_0 = arith.constant 0 : i32
    %2 = arith.cmpi ne, %1, %c0_i32_0 : i32
    scf.if %2 {
      %cst_10 = arith.constant 0.000000e+00 : f32
      %12 = vector.broadcast %cst_10 : f32 to vector<16x32xf32>
      %c0_11 = arith.constant 0 : index
      %c0_12 = arith.constant 0 : index
      %13 = vector.load %arg7[%c0_11, %c0_12] : memref<16x32xf32, #tpu.memory_space<vmem>>, vector<16x32xf32>
      tpu.vector_store %arg7[%c0_11, %c0_12], %12 {strides = array<i32>} : memref<16x32xf32, #tpu.memory_space<vmem>>, vector<16x32xf32>,
    } else {
    }
    %c0 = arith.constant 0 : index
    %c0_1 = arith.constant 0 : index
    %3 = vector.load %arg7[%c0, %c0_1] : memref<16x32xf32, #tpu.memory_space<vmem>>, vector<16x32xf32>
    %c0_2 = arith.constant 0 : index
    %c0_3 = arith.constant 0 : index
    %4 = vector.load %arg3[%c0_2, %c0_3] : memref<16x32xbf16, #tpu.memory_space<vmem>>, vector<16x32xbf16>
    %c0_4 = arith.constant 0 : index
    %c0_5 = arith.constant 0 : index
    %5 = vector.load %arg4[%c0_4, %c0_5] : memref<32x32xbf16, #tpu.memory_space<vmem>>, vector<32x32xbf16>
    %cst = arith.constant dense<0.000000e+00> : vector<16x32xf32>
    %6 = tpu.matmul %4, %5, %cst {dimension_numbers = #tpu.dot_dimension_numbers<[1], [0], [0], [1], [0, 0, 1, 1], [], []>} : vector<16x32xbf16>, vector<32x32xbf16>, vector<16x32xf32> -> vector<16x32xf32>
    %7 = arith.addf %3, %6 : vector<16x32xf32>
    %c0_6 = arith.constant 0 : index
    %c0_7 = arith.constant 0 : index
    %8 = vector.load %arg7[%c0_6, %c0_7] : memref<16x32xf32, #tpu.memory_space<vmem>>, vector<16x32xf32>
    tpu.vector_store %arg7[%c0_6, %c0_7], %7 {strides = array<i32>} : memref<16x32xf32, #tpu.memory_space<vmem>>, vector<16x32xf32>,
    %c0_i32_8 = arith.constant 0 : i32
    %9 = arith.cmpi eq, %arg2, %c0_i32_8 : i32
    %10 = arith.extui %9 : i1 to i32
    %c0_i32_9 = arith.constant 0 : i32
    %11 = arith.cmpi ne, %10, %c0_i32_9 : i32
    scf.if %11 {
      %c0_10 = arith.constant 0 : index
      %c0_11 = arith.constant 0 : index
      %12 = vector.load %arg7[%c0_10, %c0_11] : memref<16x32xf32, #tpu.memory_space<vmem>>, vector<16x32xf32>
      %c0_12 = arith.constant 0 : index
      %c0_13 = arith.constant 0 : index
      %13 = vector.load %arg5[%c0_12, %c0_13] : memref<1x32xf32, #tpu.memory_space<vmem>>, vector<1x32xf32>
      %14 = vector.broadcast %13 : vector<1x32xf32> to vector<16x32xf32>
      %15 = arith.addf %12, %14 : vector<16x32xf32>
      %16 = arith.truncf %15 : vector<16x32xf32> to vector<16x32xbf16>
      %c0_14 = arith.constant 0 : index
      %c0_15 = arith.constant 0 : index
      %17 = vector.load %arg6[%c0_14, %c0_15] : memref<16x32xbf16, #tpu.memory_space<vmem>>, vector<16x32xbf16>
      tpu.vector_store %arg6[%c0_14, %c0_15], %16 {strides = array<i32>} : memref<16x32xbf16, #tpu.memory_space<vmem>>, vector<16x32xbf16>,
    } else {
    }
    return
  }
  func.func @transform_0(%arg0: i32, %arg1: i32, %arg2: i32) -> (i32, i32) {
    %c0_i32 = arith.constant 0 : i32
    return %arg0, %arg2 : i32, i32
  }
  func.func @transform_1(%arg0: i32, %arg1: i32, %arg2: i32) -> (i32, i32) {
    %c0_i32 = arith.constant 0 : i32
    return %arg2, %arg1 : i32, i32
  }
  func.func @transform_2(%arg0: i32, %arg1: i32, %arg2: i32) -> (i32, i32) {
    %c0_i32 = arith.constant 0 : i32
    %c0_i32_0 = arith.constant 0 : i32
    return %c0_i32, %arg1 : i32, i32
  }
  func.func @transform_3(%arg0: i32, %arg1: i32, %arg2: i32) -> (i32, i32) {
    %c0_i32 = arith.constant 0 : i32
    return %arg0, %arg1 : i32, i32
  }
}

module attributes {stable_mosaic.version = 11 : i64} {
  func.func @_matmul_bias_kernel(%arg0: i32, %arg1: i32, %arg2: i32, %arg3: memref<16x32xbf16, #tpu.memory_space<vmem>>, %arg4: memref<32x64xbf16, #tpu.memory_space<vmem>>, %arg5: memref<1x64xf32, #tpu.memory_space<vmem>>, %arg6: memref<16x64xf32, #tpu.memory_space<vmem>>, %arg7: memref<16x64xf32, #tpu.memory_space<vmem>>) attributes {dimension_semantics = [#tpu.dimension_semantics<parallel>, #tpu.dimension_semantics<parallel>, #tpu.dimension_semantics<arbitrary>], iteration_bounds = array<i64: 1, 1, 1>, scalar_prefetch = 0 : i64, scratch_operands = 1 : i64, tpu.core_type = #tpu.core_type<tc>, window_params = [{transform_indices = @transform_0, window_bounds = array<i64: 16, 32>}, {transform_indices = @transform_1, window_bounds = array<i64: 32, 64>}, {transform_indices = @transform_2, window_bounds = array<i64: 1, 64>}, {transform_indices = @transform_3, window_bounds = array<i64: 16, 64>}]} {
    %c0_i32 = arith.constant 0 : i32
    %0 = arith.cmpi eq, %arg2, %c0_i32 : i32
    %1 = arith.extui %0 : i1 to i32
    %c0_i32_0 = arith.constant 0 : i32
    %2 = arith.cmpi ne, %1, %c0_i32_0 : i32
    scf.if %2 {
      %cst_10 = arith.constant 0.000000e+00 : f32
      %12 = vector.broadcast %cst_10 : f32 to vector<16x64xf32>
      %c0_11 = arith.constant 0 : index
      %c0_12 = arith.constant 0 : index
      %13 = vector.load %arg7[%c0_11, %c0_12] : memref<16x64xf32, #tpu.memory_space<vmem>>, vector<16x64xf32>
      tpu.vector_store %arg7[%c0_11, %c0_12], %12 {strides = array<i32>} : memref<16x64xf32, #tpu.memory_space<vmem>>, vector<16x64xf32>,
    } else {
    }
    %c0 = arith.constant 0 : index
    %c0_1 = arith.constant 0 : index
    %3 = vector.load %arg7[%c0, %c0_1] : memref<16x64xf32, #tpu.memory_space<vmem>>, vector<16x64xf32>
    %c0_2 = arith.constant 0 : index
    %c0_3 = arith.constant 0 : index
    %4 = vector.load %arg3[%c0_2, %c0_3] : memref<16x32xbf16, #tpu.memory_space<vmem>>, vector<16x32xbf16>
    %c0_4 = arith.constant 0 : index
    %c0_5 = arith.constant 0 : index
    %5 = vector.load %arg4[%c0_4, %c0_5] : memref<32x64xbf16, #tpu.memory_space<vmem>>, vector<32x64xbf16>
    %cst = arith.constant dense<0.000000e+00> : vector<16x64xf32>
    %6 = tpu.matmul %4, %5, %cst {dimension_numbers = #tpu.dot_dimension_numbers<[1], [0], [0], [1], [0, 0, 1, 1], [], []>} : vector<16x32xbf16>, vector<32x64xbf16>, vector<16x64xf32> -> vector<16x64xf32>
    %7 = arith.addf %3, %6 : vector<16x64xf32>
    %c0_6 = arith.constant 0 : index
    %c0_7 = arith.constant 0 : index
    %8 = vector.load %arg7[%c0_6, %c0_7] : memref<16x64xf32, #tpu.memory_space<vmem>>, vector<16x64xf32>
    tpu.vector_store %arg7[%c0_6, %c0_7], %7 {strides = array<i32>} : memref<16x64xf32, #tpu.memory_space<vmem>>, vector<16x64xf32>,
    %c0_i32_8 = arith.constant 0 : i32
    %9 = arith.cmpi eq, %arg2, %c0_i32_8 : i32
    %10 = arith.extui %9 : i1 to i32
    %c0_i32_9 = arith.constant 0 : i32
    %11 = arith.cmpi ne, %10, %c0_i32_9 : i32
    scf.if %11 {
      %c0_10 = arith.constant 0 : index
      %c0_11 = arith.constant 0 : index
      %12 = vector.load %arg7[%c0_10, %c0_11] : memref<16x64xf32, #tpu.memory_space<vmem>>, vector<16x64xf32>
      %c0_12 = arith.constant 0 : index
      %c0_13 = arith.constant 0 : index
      %13 = vector.load %arg5[%c0_12, %c0_13] : memref<1x64xf32, #tpu.memory_space<vmem>>, vector<1x64xf32>
      %14 = vector.broadcast %13 : vector<1x64xf32> to vector<16x64xf32>
      %15 = arith.addf %12, %14 : vector<16x64xf32>
      %c0_14 = arith.constant 0 : index
      %c0_15 = arith.constant 0 : index
      %16 = vector.load %arg6[%c0_14, %c0_15] : memref<16x64xf32, #tpu.memory_space<vmem>>, vector<16x64xf32>
      tpu.vector_store %arg6[%c0_14, %c0_15], %15 {strides = array<i32>} : memref<16x64xf32, #tpu.memory_space<vmem>>, vector<16x64xf32>,
    } else {
    }
    return
  }
  func.func @transform_0(%arg0: i32, %arg1: i32, %arg2: i32) -> (i32, i32) {
    %c0_i32 = arith.constant 0 : i32
    return %arg0, %arg2 : i32, i32
  }
  func.func @transform_1(%arg0: i32, %arg1: i32, %arg2: i32) -> (i32, i32) {
    %c0_i32 = arith.constant 0 : i32
    return %arg2, %arg1 : i32, i32
  }
  func.func @transform_2(%arg0: i32, %arg1: i32, %arg2: i32) -> (i32, i32) {
    %c0_i32 = arith.constant 0 : i32
    %c0_i32_0 = arith.constant 0 : i32
    return %c0_i32, %arg1 : i32, i32
  }
  func.func @transform_3(%arg0: i32, %arg1: i32, %arg2: i32) -> (i32, i32) {
    %c0_i32 = arith.constant 0 : i32
    return %arg0, %arg1 : i32, i32
  }
}

</mosaic_0001>

<llo_original>
// kernel: transformer_forward.27
$region0: #{transformer_forward.27}
  #allocation0 [shape = 'u32[]', space=smem, size = 0x4, offset = 0x4, fixed_abs, tag = 'smem constant byte address 0x4 - core index']
  #allocation1 [shape = 'u32[144,128]{1,0:T(1,128)}', space=vmem, size = 0x12000, scoped, tag = 'internal scratch']
  #allocation2 [shape = 'f32[16,96]{1,0:T(8,128)}', space=vmem, size = 0x2000, scoped, tag = 'scratch operand']
  %s0 = inlined_call_operand.vmem [shape: bf16[16,32], index: 0, kind: input, shape index: {}]
  %s1 = inlined_call_operand.vmem [shape: bf16[32,96], index: 1, kind: input, shape index: {}]
  %s2 = inlined_call_operand.vmem [shape: f32[1,96], index: 2, kind: input, shape index: {}]
  %s3 = inlined_call_operand.vmem [shape: bf16[16,96], index: 3, kind: output, shape index: {}]
  %s4 = sld [smem:[#allocation0]]
  $region30: #{transformer_forward.27} parent=0
    _
  %s6 = ssub.s32 1, %s4
  %s7 = scalar_select 0, %s6, %s4
  // Predicated region
  $region2: #{transformer_forward.27} parent=0 // pred_check
    _
  $region3: #{transformer_forward.27} parent=0 // pred_check_branch
    %9 = sbr.rel (0) target = $region5
  $region4: #{transformer_forward.27} parent=0 // pred_region
    _
  $region5: #{transformer_forward.27} parent=0 // pred_fallthru
    _
  // Predicated region
  $region6: #{transformer_forward.27} parent=0 // pred_check
    _
  $region7: #{transformer_forward.27} parent=0 // pred_check_branch
    %11 = sbr.rel (0) target = $region9
  $region8: #{transformer_forward.27} parent=0 // pred_region
    _
  $region9: #{transformer_forward.27} parent=0 // pred_fallthru
    _
  // Predicated region
  $region10: #{transformer_forward.27} parent=0 // pred_check
    _
  $region11: #{transformer_forward.27} parent=0 // pred_check_branch
    %13 = sbr.rel (0) target = $region13
  $region12: #{transformer_forward.27} parent=0 // pred_region
    _
  $region13: #{transformer_forward.27} parent=0 // pred_fallthru
    _
  %p15 = scmp.eq.s32.totalorder 0, 0
  // Predicated region
  $region14: #{transformer_forward.27} parent=0 // pred_check
    %p16 = pneg %p15
  $region15: #{transformer_forward.27} parent=0 // pred_check_branch
    %18 = sbr.rel (%p16) target = $region17
  $region16: #{transformer_forward.27} parent=0 // pred_region
    %vm19 = vcmask 785408
    %20 = vst.msk [vmem:[#allocation2] sm:$0xff] %vm19, 0.0
    %21 = vst.msk [vmem:[#allocation2 + $0x8] sm:$0xff] %vm19, 0.0
  $region17: #{transformer_forward.27} parent=0 // pred_fallthru
    _
  %v22 = vld [vmem:[#allocation2] sm:$0xff]
  %v23 = vld [vmem:[#allocation2 + $0x8] sm:$0xff]
  %v24 = vld [vmem:[%s0] sm:$0xf]
  %v25 = vld [vmem:[%s0 + $0x4] sm:$0xf]
  %v26 = vld [vmem:[%s1] sm:$0xf]
  %v27 = vld [vmem:[%s1 + $0x4] sm:$0xf]
  %v28 = vld [vmem:[%s1 + $0x8] sm:$0xf]
  %v29 = vld [vmem:[%s1 + $0xc] sm:$0xf]
  %v32 = vunpack.c.l.b16 %v24
  %v33 = vunpack.c.l.b16 %v25
  %v34 = vpack.c.b16 %v33, %v32
  %v39 = vunpack.c.l.b16 %v26
  %v40 = vunpack.c.l.b16 %v27
  %v41 = vunpack.c.l.b16 %v28
  %v42 = vunpack.c.l.b16 %v29
  %v43 = vpack.c.b16 %v40, %v39
  %v44 = vpack.c.b16 %v42, %v41
  %vm47 = vcmask 261120
  %v49 = vsel %vm47, %v34, 0
  %51 = vmatprep.subr.bf16.mxu0 0
  %52 = vmatpush1.bf16.msra.mxu0 %v43
  %53 = vmatprep.subr.bf16.mxu0 0
  %54 = vmatpush1.bf16.msra.mxu0 %v44
  %55 = vmatprep.subr.bf16.mxu0 0
  %56 = vmatpush1.bf16.msra.mxu0 0
  %57 = vmatprep.subr.bf16.mxu0 0
  %58 = vmatpush1.bf16.msra.mxu0 0
  %59 = vmatprep.subr.bf16.mxu0 0
  %60 = vmatpush1.bf16.msra.mxu0 0
  %61 = vmatprep.subr.bf16.mxu0 0
  %62 = vmatpush1.bf16.msra.mxu0 0
  %63 = vmatprep.subr.bf16.mxu0 0
  %64 = vmatpush1.bf16.msra.mxu0 0
  %65 = vmatprep.subr.bf16.mxu0 0
  %66 = vmatpush1.bf16.msra.mxu0 0
  %67 = vmatprep.subr.bf16.mxu0 0
  %68 = vmatpush1.bf16.msra.mxu0 0
  %69 = vmatprep.subr.bf16.mxu0 0
  %70 = vmatpush1.bf16.msra.mxu0 0
  %71 = vmatprep.subr.bf16.mxu0 0
  %72 = vmatpush1.bf16.msra.mxu0 0
  %73 = vmatprep.subr.bf16.mxu0 0
  %74 = vmatpush1.bf16.msra.mxu0 0
  %75 = vmatprep.subr.bf16.mxu0 0
  %76 = vmatpush1.bf16.msra.mxu0 0
  %77 = vmatprep.subr.bf16.mxu0 0
  %78 = vmatpush1.bf16.msra.mxu0 0
  %79 = vmatprep.subr.bf16.mxu0 0
  %80 = vmatpush1.bf16.msra.mxu0 0
  %81 = vmatprep.subr.bf16.mxu0 0
  %82 = vmatpush1.bf16.msra.mxu0 0
  %83 = vmatprep.mubr.bf16.mxu0 0
  %84 = vmatmul.mubr.bf16.gmra.mrb[0].mxu0 %v49
  %v85 = vpop.f32.mrb[0].mxu0
  %v86 = vadd.f32 0.0, %v85
  %v87 = vpop.f32.mrb[0].mxu0
  %v88 = vpop.f32.mrb[0].mxu0
  %v89 = vadd.f32 0.0, %v88
  %v90 = vpop.f32.mrb[0].mxu0
  %91 = vdwg.mxu0
  %v92 = vadd.f32 %v22, %v86
  %v93 = vadd.f32 %v23, %v89
  %vm94 = vcmask 785408
  %95 = vst.msk [vmem:[#allocation2] sm:$0xff] %vm94, %v92
  %96 = vst.msk [vmem:[#allocation2 + $0x8] sm:$0xff] %vm94, %v93
  // Predicated region
  $region18: #{transformer_forward.27} parent=0 // pred_check
    %p97 = pneg %p15
  $region19: #{transformer_forward.27} parent=0 // pred_check_branch
    %99 = sbr.rel (%p97) target = $region21
  $region20: #{transformer_forward.27} parent=0 // pred_region
    %v100 = vld [vmem:[#allocation2] sm:$0xff]
    %v101 = vld [vmem:[#allocation2 + $0x8] sm:$0xff]
    %v102 = vld [vmem:[%s2] sm:$0x1]
    %v104 = vlaneseq
    %v105 = vshrl.u32 %v104, 7
    %v106 = vsub.s32 0, %v105
    %v107 = vrot.slane %v102, %v106
    %v109 = vadd.f32 %v100, %v107
    %v110 = vadd.f32 %v101, %v107
    %v111 = vpack.c.bf16 %v110, %v109
    %v113 = vunpack.c.l.b16 %v111
    %v114 = vunpack.c.h.b16 %v111
    %v115 = vpack.c.b16 %v113, %v113
    %v116 = vpack.c.b16 %v114, %v114
    %vm119 = vcmask 781312
    %120 = vst.msk [vmem:[%s3] sm:$0xf] %vm119, %v115
    %121 = vst.msk [vmem:[%s3 + $0x4] sm:$0xf] %vm119, %v116
  $region21: #{transformer_forward.27} parent=0 // pred_fallthru
    _
  // Predicated region
  $region22: #{transformer_forward.27} parent=0 // pred_check
    _
  $region23: #{transformer_forward.27} parent=0 // pred_check_branch
    %123 = sbr.rel (0) target = $region25
  $region24: #{transformer_forward.27} parent=0 // pred_region
    _
  $region25: #{transformer_forward.27} parent=0 // pred_fallthru
    _
  // Predicated region
  $region26: #{transformer_forward.27} parent=0 // pred_check
    _
  $region27: #{transformer_forward.27} parent=0 // pred_check_branch
    %125 = sbr.rel (0) target = $region29
  $region28: #{transformer_forward.27} parent=0 // pred_region
    _
  $region29: #{transformer_forward.27} parent=0 // pred_fallthru
    _

// kernel: transformer_forward.29
$region0: #{transformer_forward.29}
  #allocation0 [shape = 'u32[]', space=smem, size = 0x4, offset = 0x4, fixed_abs, tag = 'smem constant byte address 0x4 - core index']
  #allocation1 [shape = 'u32[144,128]{1,0:T(1,128)}', space=vmem, size = 0x12000, scoped, tag = 'internal scratch']
  #allocation2 [shape = 'f32[16,32]{1,0:T(8,128)}', space=vmem, size = 0x2000, scoped, tag = 'scratch operand']
  %s0 = inlined_call_operand.vmem [shape: bf16[16,32], index: 0, kind: input, shape index: {}]
  %s1 = inlined_call_operand.vmem [shape: bf16[32,32], index: 1, kind: input, shape index: {}]
  %s2 = inlined_call_operand.vmem [shape: f32[1,32], index: 2, kind: input, shape index: {}]
  %s3 = inlined_call_operand.vmem [shape: bf16[16,32], index: 3, kind: input, shape index: {}]
  %s4 = inlined_call_operand.vmem [shape: f32[1,32], index: 4, kind: input, shape index: {}]
  %s5 = inlined_call_operand.vmem [shape: f32[1,32], index: 5, kind: input, shape index: {}]
  %s6 = inlined_call_operand.vmem [shape: bf16[16,32], index: 6, kind: output, shape index: {}]
  %s7 = sld [smem:[#allocation0]]
  $region42: #{transformer_forward.29} parent=0
    _
  %s9 = ssub.s32 1, %s7
  %s10 = scalar_select 0, %s9, %s7
  // Predicated region
  $region2: #{transformer_forward.29} parent=0 // pred_check
    _
  $region3: #{transformer_forward.29} parent=0 // pred_check_branch
    %12 = sbr.rel (0) target = $region5
  $region4: #{transformer_forward.29} parent=0 // pred_region
    _
  $region5: #{transformer_forward.29} parent=0 // pred_fallthru
    _
  // Predicated region
  $region6: #{transformer_forward.29} parent=0 // pred_check
    _
  $region7: #{transformer_forward.29} parent=0 // pred_check_branch
    %14 = sbr.rel (0) target = $region9
  $region8: #{transformer_forward.29} parent=0 // pred_region
    _
  $region9: #{transformer_forward.29} parent=0 // pred_fallthru
    _
  // Predicated region
  $region10: #{transformer_forward.29} parent=0 // pred_check
    _
  $region11: #{transformer_forward.29} parent=0 // pred_check_branch
    %16 = sbr.rel (0) target = $region13
  $region12: #{transformer_forward.29} parent=0 // pred_region
    _
  $region13: #{transformer_forward.29} parent=0 // pred_fallthru
    _
  // Predicated region
  $region14: #{transformer_forward.29} parent=0 // pred_check
    _
  $region15: #{transformer_forward.29} parent=0 // pred_check_branch
    %18 = sbr.rel (0) target = $region17
  $region16: #{transformer_forward.29} parent=0 // pred_region
    _
  $region17: #{transformer_forward.29} parent=0 // pred_fallthru
    _
  // Predicated region
  $region18: #{transformer_forward.29} parent=0 // pred_check
    _
  $region19: #{transformer_forward.29} parent=0 // pred_check_branch
    %20 = sbr.rel (0) target = $region21
  $region20: #{transformer_forward.29} parent=0 // pred_region
    _
  $region21: #{transformer_forward.29} parent=0 // pred_fallthru
    _
  // Predicated region
  $region22: #{transformer_forward.29} parent=0 // pred_check
    _
  $region23: #{transformer_forward.29} parent=0 // pred_check_branch
    %22 = sbr.rel (0) target = $region25
  $region24: #{transformer_forward.29} parent=0 // pred_region
    _
  $region25: #{transformer_forward.29} parent=0 // pred_fallthru
    _
  %p24 = scmp.eq.s32.totalorder 0, 0
  // Predicated region
  $region26: #{transformer_forward.29} parent=0 // pred_check
    %p25 = pneg %p24
  $region27: #{transformer_forward.29} parent=0 // pred_check_branch
    %27 = sbr.rel (%p25) target = $region29
  $region28: #{transformer_forward.29} parent=0 // pred_region
    %vm28 = vcmask 261120
    %29 = vst.msk [vmem:[#allocation2] sm:$0xff] %vm28, 0.0
    %30 = vst.msk [vmem:[#allocation2 + $0x8] sm:$0xff] %vm28, 0.0
  $region29: #{transformer_forward.29} parent=0 // pred_fallthru
    _
  %v31 = vld [vmem:[#allocation2] sm:$0xff]
  %v32 = vld [vmem:[#allocation2 + $0x8] sm:$0xff]
  %v33 = vld [vmem:[%s0] sm:$0xf]
  %v34 = vld [vmem:[%s0 + $0x4] sm:$0xf]
  %v35 = vld [vmem:[%s1] sm:$0xf]
  %v36 = vld [vmem:[%s1 + $0x4] sm:$0xf]
  %v37 = vld [vmem:[%s1 + $0x8] sm:$0xf]
  %v38 = vld [vmem:[%s1 + $0xc] sm:$0xf]
  %v41 = vunpack.c.l.b16 %v33
  %v42 = vunpack.c.l.b16 %v34
  %v43 = vpack.c.b16 %v42, %v41
  %v48 = vunpack.c.l.b16 %v35
  %v49 = vunpack.c.l.b16 %v36
  %v50 = vunpack.c.l.b16 %v37
  %v51 = vunpack.c.l.b16 %v38
  %v52 = vpack.c.b16 %v49, %v48
  %v53 = vpack.c.b16 %v51, %v50
  %vm56 = vcmask 261120
  %v58 = vsel %vm56, %v43, 0
  %60 = vmatprep.subr.bf16.mxu0 0
  %61 = vmatpush1.bf16.msra.mxu0 %v52
  %62 = vmatprep.subr.bf16.mxu0 0
  %63 = vmatpush1.bf16.msra.mxu0 %v53
  %64 = vmatprep.subr.bf16.mxu0 0
  %65 = vmatpush1.bf16.msra.mxu0 0
  %66 = vmatprep.subr.bf16.mxu0 0
  %67 = vmatpush1.bf16.msra.mxu0 0
  %68 = vmatprep.subr.bf16.mxu0 0
  %69 = vmatpush1.bf16.msra.mxu0 0
  %70 = vmatprep.subr.bf16.mxu0 0
  %71 = vmatpush1.bf16.msra.mxu0 0
  %72 = vmatprep.subr.bf16.mxu0 0
  %73 = vmatpush1.bf16.msra.mxu0 0
  %74 = vmatprep.subr.bf16.mxu0 0
  %75 = vmatpush1.bf16.msra.mxu0 0
  %76 = vmatprep.subr.bf16.mxu0 0
  %77 = vmatpush1.bf16.msra.mxu0 0
  %78 = vmatprep.subr.bf16.mxu0 0
  %79 = vmatpush1.bf16.msra.mxu0 0
  %80 = vmatprep.subr.bf16.mxu0 0
  %81 = vmatpush1.bf16.msra.mxu0 0
  %82 = vmatprep.subr.bf16.mxu0 0
  %83 = vmatpush1.bf16.msra.mxu0 0
  %84 = vmatprep.subr.bf16.mxu0 0
  %85 = vmatpush1.bf16.msra.mxu0 0
  %86 = vmatprep.subr.bf16.mxu0 0
  %87 = vmatpush1.bf16.msra.mxu0 0
  %88 = vmatprep.subr.bf16.mxu0 0
  %89 = vmatpush1.bf16.msra.mxu0 0
  %90 = vmatprep.subr.bf16.mxu0 0
  %91 = vmatpush1.bf16.msra.mxu0 0
  %92 = vmatprep.mubr.bf16.mxu0 0
  %93 = vmatmul.mubr.bf16.gmra.mrb[0].mxu0 %v58
  %v94 = vpop.f32.mrb[0].mxu0
  %v95 = vadd.f32 0.0, %v94
  %v96 = vpop.f32.mrb[0].mxu0
  %v97 = vpop.f32.mrb[0].mxu0
  %v98 = vadd.f32 0.0, %v97
  %v99 = vpop.f32.mrb[0].mxu0
  %100 = vdwg.mxu0
  %v101 = vadd.f32 %v31, %v95
  %v102 = vadd.f32 %v32, %v98
  %103 = vst.msk [vmem:[#allocation2] sm:$0xff] %vm56, %v101
  %104 = vst.msk [vmem:[#allocation2 + $0x8] sm:$0xff] %vm56, %v102
  // Predicated region
  $region30: #{transformer_forward.29} parent=0 // pred_check
    %p105 = pneg %p24
  $region31: #{transformer_forward.29} parent=0 // pred_check_branch
    %107 = sbr.rel (%p105) target = $region33
  $region32: #{transformer_forward.29} parent=0 // pred_region
    %v108 = vld [vmem:[#allocation2] sm:$0xff]
    %v109 = vld [vmem:[#allocation2 + $0x8] sm:$0xff]
    %v110 = vld [vmem:[%s2] sm:$0x1]
    %v112 = vlaneseq
    %v113 = vshrl.u32 %v112, 7
    %v114 = vsub.s32 0, %v113
    %v115 = vrot.slane %v110, %v114
    %v117 = vadd.f32 %v108, %v115
    %v118 = vadd.f32 %v109, %v115
    %v119 = vld [vmem:[%s3] sm:$0xf]
    %v120 = vld [vmem:[%s3 + $0x4] sm:$0xf]
    %v121 = vunpack.c.l.bf16 %v119
    %v122 = vunpack.c.l.bf16 %v120
    %v123 = vadd.f32 %v117, %v121
    %v124 = vadd.f32 %v118, %v122
    %v125 = vsel %vm56, %v123, 0.0
    %126 = vadd.xlane.f32.xlu0 %v125
    %v127 = vpop.xlane.xlu0 %126
    %v128 = vsel %vm56, %v124, 0.0
    %129 = vadd.xlane.f32.xlu0 %v128
    %v130 = vpop.xlane.xlu0 %129
    %v131 = vrcp.pop 32.0
    %v132 = vmul.f32 %v127, %v131
    %v133 = vmul.f32 %v130, %v131
    %v134 = vsub.f32 %v123, %v132
    %v135 = vsub.f32 %v124, %v133
    %v136 = vmul.f32 %v134, %v134
    %v137 = vmul.f32 %v135, %v135
    %v138 = vsel %vm56, %v136, 0.0
    %139 = vadd.xlane.f32.xlu0 %v138
    %v140 = vpop.xlane.xlu0 %139
    %v141 = vsel %vm56, %v137, 0.0
    %142 = vadd.xlane.f32.xlu0 %v141
    %v143 = vpop.xlane.xlu0 %142
    %v144 = vmul.f32 %v140, %v131
    %v145 = vmul.f32 %v143, %v131
    %v146 = vadd.f32 %v144, 1e-05
    %v147 = vadd.f32 %v145, 1e-05
    %v148 = vrsqrt.pop %v146
    %v149 = vrsqrt.pop %v147
    %v150 = vmul.f32 %v134, %v148
    %v151 = vmul.f32 %v135, %v149
    %v152 = vld [vmem:[%s4] sm:$0x1]
    %v154 = vlaneseq
    %v155 = vshrl.u32 %v154, 7
    %v156 = vsub.s32 0, %v155
    %v157 = vrot.slane %v152, %v156
    %v159 = vmul.f32 %v150, %v157
    %v160 = vmul.f32 %v151, %v157
    %v161 = vld [vmem:[%s5] sm:$0x1]
    %v163 = vlaneseq
    %v164 = vshrl.u32 %v163, 7
    %v165 = vsub.s32 0, %v164
    %v166 = vrot.slane %v161, %v165
    %v168 = vadd.f32 %v159, %v166
    %v169 = vadd.f32 %v160, %v166
    %v170 = vpack.c.bf16 %v169, %v168
    %v172 = vunpack.c.l.b16 %v170
    %v173 = vunpack.c.h.b16 %v170
    %v174 = vpack.c.b16 %v172, %v172
    %v175 = vpack.c.b16 %v173, %v173
    %vm178 = vcmask 257024
    %179 = vst.msk [vmem:[%s6] sm:$0xf] %vm178, %v174
    %180 = vst.msk [vmem:[%s6 + $0x4] sm:$0xf] %vm178, %v175
  $region33: #{transformer_forward.29} parent=0 // pred_fallthru
    _
  // Predicated region
  $region34: #{transformer_forward.29} parent=0 // pred_check
    _
  $region35: #{transformer_forward.29} parent=0 // pred_check_branch
    %182 = sbr.rel (0) target = $region37
  $region36: #{transformer_forward.29} parent=0 // pred_region
    _
  $region37: #{transformer_forward.29} parent=0 // pred_fallthru
    _
  // Predicated region
  $region38: #{transformer_forward.29} parent=0 // pred_check
    _
  $region39: #{transformer_forward.29} parent=0 // pred_check_branch
    %184 = sbr.rel (0) target = $region41
  $region40: #{transformer_forward.29} parent=0 // pred_region
    _
  $region41: #{transformer_forward.29} parent=0 // pred_fallthru
    _

// kernel: transformer_forward.28
$region0: #{transformer_forward.28}
  #allocation0 [shape = 'u32[]', space=smem, size = 0x4, offset = 0x4, fixed_abs, tag = 'smem constant byte address 0x4 - core index']
  #allocation1 [shape = 'u32[144,128]{1,0:T(1,128)}', space=vmem, size = 0x12000, scoped, tag = 'internal scratch']
  #allocation2 [shape = 'f32[2,8,1]{2,1,0:T(8,128)}', space=vmem, size = 0x2000, scoped, tag = 'scratch operand']
  #allocation3 [shape = 'f32[2,8,1]{2,1,0:T(8,128)}', space=vmem, size = 0x2000, scoped, tag = 'scratch operand']
  #allocation4 [shape = 'f32[2,8,16]{2,1,0:T(8,128)}', space=vmem, size = 0x2000, scoped, tag = 'scratch operand']
  %s0 = inlined_call_operand.vmem [shape: bf16[2,8,32], index: 0, kind: input, shape index: {}]
  %s1 = inlined_call_operand.vmem [shape: bf16[2,8,32], index: 1, kind: input, shape index: {}]
  %s2 = inlined_call_operand.vmem [shape: bf16[2,8,32], index: 2, kind: input, shape index: {}]
  %s3 = inlined_call_operand.vmem [shape: bf16[2,8,32], index: 3, kind: output, shape index: {}]
  %s4 = sld [smem:[#allocation0]]
  $region53: #{transformer_forward.28} parent=0
    _
  %s6 = ssub.s32 1, %s4
  %s7 = scalar_select 0, %s6, %s4
  loop: start=0, step=1, limit=4
  $region2: #{transformer_forward.28} parent=0 // loop_pre_header
    _
  $region3: #{transformer_forward.28} parent=0 // loop_header
    %s9 = sphi 0, %s13
    %p10 = scmp.ge.s32.totalorder %s9, 4
    %s16 = sphi 0, %s35
    %s17 = sphi 0, %s31
    %s18 = sphi 0, %s27
    %s19 = sphi 0, %s16
    %s20 = sphi 0, %s17
    %s21 = sphi 0, %s18
    %s22 = sphi 0, %s19
    %s23 = sphi 0, %s20
    %s24 = sphi 0, %s21
    %s40 = sphi 0, %s42
    %s43 = sphi 0, %s40
    %s44 = sphi 0, %s43
    %s60 = sphi 0, %s44
    %s68 = sphi 0, %s70
    %s71 = sphi 0, %s68
    %s72 = sphi 0, %s71
    %s88 = sphi 0, %s72
    %s96 = sphi 0, %s98
    %s99 = sphi 0, %s96
    %s100 = sphi 0, %s99
    %s116 = sphi 0, %s100
    %s124 = sphi 0, %s126
    %s127 = sphi 0, %s124
    %s128 = sphi 0, %s127
    %s144 = sphi 0, %s128
  $region4: #{transformer_forward.28} parent=0 // loop_header_branch
    %12 = sbr.rel (%p10) target = $region8
  $region5: #{transformer_forward.28} parent=0 // loop_body
    %s14 = ssub.s32 %s9, 1
    %s15 = ssub.s32 %s9, 2
    %s25 = sadd.s32 1, %s18
    %p26 = scmp.ge.s32.totalorder %s25, 1
    %s27 = scalar_select %p26, 0, %s25
    %s28 = sadd.s32 1, %s17
    %s29 = scalar_select %p26, %s28, %s17
    %p30 = scmp.ge.s32.totalorder %s29, 1
    %s31 = scalar_select %p30, 0, %s29
    %s32 = sadd.s32 1, %s16
    %s33 = scalar_select %p30, %s32, %s16
    %p34 = scmp.ge.s32.totalorder %s33, 2
    %s35 = scalar_select %p34, 0, %s33
    %s36 = ssub.s32 %s16, %s35
    %s37 = ssub.s32 %s17, %s31
    %s38 = sor.u32 %s36, %s37
    %p39 = scmp.eq.s32.totalorder %s38, 0
    %s41 = sadd.s32 %s40, 1
    %s42 = scalar_select %p39, %s40, %s41
    %p45 = pneg %p39
    %p46 = scmp.eq.s32.totalorder %s9, 1
    %p47 = por %p45, %p46
    %p48 = scmp.ne.s32.totalorder %s40, %s43
    %p49 = scmp.eq.s32.totalorder %s9, 0
    %p50 = por %p48, %p49
    %p51 = scmp.ne.s32.totalorder %s40, %s43
    %p52 = scmp.eq.s32.totalorder %s14, 1
    %p53 = por %p51, %p52
    %p54 = scmp.ne.s32.totalorder %s43, %s44
    %p55 = scmp.eq.s32.totalorder %s14, 0
    %p56 = por %p54, %p55
    %p57 = scmp.ne.s32.totalorder %s43, %s44
    %p58 = scmp.eq.s32.totalorder %s15, 1
    %p59 = por %p57, %p58
    %p61 = scmp.ne.s32.totalorder %s44, %s60
    %p62 = scmp.eq.s32.totalorder %s15, 0
    %p63 = por %p61, %p62
    %s64 = ssub.s32 %s16, %s35
    %s65 = ssub.s32 %s18, %s27
    %s66 = sor.u32 %s64, %s65
    %p67 = scmp.eq.s32.totalorder %s66, 0
    %s69 = sadd.s32 %s68, 1
    %s70 = scalar_select %p67, %s68, %s69
    %p73 = pneg %p67
    %p74 = scmp.eq.s32.totalorder %s9, 1
    %p75 = por %p73, %p74
    %p76 = scmp.ne.s32.totalorder %s68, %s71
    %p77 = scmp.eq.s32.totalorder %s9, 0
    %p78 = por %p76, %p77
    %p79 = scmp.ne.s32.totalorder %s68, %s71
    %p80 = scmp.eq.s32.totalorder %s14, 1
    %p81 = por %p79, %p80
    %p82 = scmp.ne.s32.totalorder %s71, %s72
    %p83 = scmp.eq.s32.totalorder %s14, 0
    %p84 = por %p82, %p83
    %p85 = scmp.ne.s32.totalorder %s71, %s72
    %p86 = scmp.eq.s32.totalorder %s15, 1
    %p87 = por %p85, %p86
    %p89 = scmp.ne.s32.totalorder %s72, %s88
    %p90 = scmp.eq.s32.totalorder %s15, 0
    %p91 = por %p89, %p90
    %s92 = ssub.s32 %s16, %s35
    %s93 = ssub.s32 %s18, %s27
    %s94 = sor.u32 %s92, %s93
    %p95 = scmp.eq.s32.totalorder %s94, 0
    %s97 = sadd.s32 %s96, 1
    %s98 = scalar_select %p95, %s96, %s97
    %p101 = pneg %p95
    %p102 = scmp.eq.s32.totalorder %s9, 1
    %p103 = por %p101, %p102
    %p104 = scmp.ne.s32.totalorder %s96, %s99
    %p105 = scmp.eq.s32.totalorder %s9, 0
    %p106 = por %p104, %p105
    %p107 = scmp.ne.s32.totalorder %s96, %s99
    %p108 = scmp.eq.s32.totalorder %s14, 1
    %p109 = por %p107, %p108
    %p110 = scmp.ne.s32.totalorder %s99, %s100
    %p111 = scmp.eq.s32.totalorder %s14, 0
    %p112 = por %p110, %p111
    %p113 = scmp.ne.s32.totalorder %s99, %s100
    %p114 = scmp.eq.s32.totalorder %s15, 1
    %p115 = por %p113, %p114
    %p117 = scmp.ne.s32.totalorder %s100, %s116
    %p118 = scmp.eq.s32.totalorder %s15, 0
    %p119 = por %p117, %p118
    %s120 = ssub.s32 %s16, %s35
    %s121 = ssub.s32 %s17, %s31
    %s122 = sor.u32 %s120, %s121
    %p123 = scmp.eq.s32.totalorder %s122, 0
    %s125 = sadd.s32 %s124, 1
    %s126 = scalar_select %p123, %s124, %s125
    %p129 = pneg %p123
    %p130 = scmp.eq.s32.totalorder %s9, 1
    %p131 = por %p129, %p130
    %p132 = scmp.ne.s32.totalorder %s124, %s127
    %p133 = scmp.eq.s32.totalorder %s9, 0
    %p134 = por %p132, %p133
    %p135 = scmp.ne.s32.totalorder %s124, %s127
    %p136 = scmp.eq.s32.totalorder %s14, 1
    %p137 = por %p135, %p136
    %p138 = scmp.ne.s32.totalorder %s127, %s128
    %p139 = scmp.eq.s32.totalorder %s14, 0
    %p140 = por %p138, %p139
    %p141 = scmp.ne.s32.totalorder %s127, %s128
    %p142 = scmp.eq.s32.totalorder %s15, 1
    %p143 = por %p141, %p142
    %p145 = scmp.ne.s32.totalorder %s128, %s144
    %p146 = scmp.eq.s32.totalorder %s15, 0
    %p147 = por %p145, %p146
    %p148 = scmp.le.s32.totalorder 1, %s9
    %p149 = scmp.lt.s32.totalorder %s9, 3
    %p150 = pnand %p148, %p149
    %p151 = pneg %p150
    // Predicated region
    $region9: #{transformer_forward.28} parent=5 // pred_check
      _
    $region10: #{transformer_forward.28} parent=5 // pred_check_branch
      %153 = sbr.rel (%p150) target = $region12
    $region11: #{transformer_forward.28} parent=5 // pred_region
      %s154 = ssub.s32 %s9, 1
    $region12: #{transformer_forward.28} parent=5 // pred_fallthru
      _
    %p155 = scmp.lt.s32.totalorder %s9, 2
    // Predicated region
    $region13: #{transformer_forward.28} parent=5 // pred_check
      %p156 = pneg %p155
    $region14: #{transformer_forward.28} parent=5 // pred_check_branch
      %158 = sbr.rel (%p156) target = $region16
    $region15: #{transformer_forward.28} parent=5 // pred_region
      // Predicated region
      $region17: #{transformer_forward.28} parent=15 // pred_check
        %p159 = pneg %p50
      $region18: #{transformer_forward.28} parent=15 // pred_check_branch
        %161 = sbr.rel (%p159) target = $region20
      $region19: #{transformer_forward.28} parent=15 // pred_region
        %p162 = scmp.lt.s32.totalorder %s16, 1
        %s163 = scalar_select %p162, %s16, 1
        %p164 = scmp.lt.s32.totalorder %s17, 0
        %s165 = scalar_select %p164, %s17, 0
        %s166 = sadd.s32 %s165, %s163
        %s167 = smul.addr %s166, 4
        %s168 = scalar_lea.vmem %s0, %s167
      $region20: #{transformer_forward.28} parent=15 // pred_fallthru
        _
      // Predicated region
      $region21: #{transformer_forward.28} parent=15 // pred_check
        %p169 = pneg %p78
      $region22: #{transformer_forward.28} parent=15 // pred_check_branch
        %171 = sbr.rel (%p169) target = $region24
      $region23: #{transformer_forward.28} parent=15 // pred_region
        %p172 = scmp.lt.s32.totalorder %s16, 1
        %s173 = scalar_select %p172, %s16, 1
        %p174 = scmp.lt.s32.totalorder %s18, 0
        %s175 = scalar_select %p174, %s18, 0
        %s176 = sadd.s32 %s175, %s173
        %s177 = smul.addr %s176, 4
        %s178 = scalar_lea.vmem %s1, %s177
      $region24: #{transformer_forward.28} parent=15 // pred_fallthru
        _
      // Predicated region
      $region25: #{transformer_forward.28} parent=15 // pred_check
        %p179 = pneg %p106
      $region26: #{transformer_forward.28} parent=15 // pred_check_branch
        %181 = sbr.rel (%p179) target = $region28
      $region27: #{transformer_forward.28} parent=15 // pred_region
        %p182 = scmp.lt.s32.totalorder %s16, 1
        %s183 = scalar_select %p182, %s16, 1
        %p184 = scmp.lt.s32.totalorder %s18, 0
        %s185 = scalar_select %p184, %s18, 0
        %s186 = sadd.s32 %s185, %s183
        %s187 = smul.addr %s186, 4
        %s188 = scalar_lea.vmem %s2, %s187
      $region28: #{transformer_forward.28} parent=15 // pred_fallthru
        _
    $region16: #{transformer_forward.28} parent=5 // pred_fallthru
      _
    %p189 = scmp.le.s32.totalorder 1, %s9
    %p190 = scmp.lt.s32.totalorder %s9, 3
    %p191 = pnand %p189, %p190
    %p192 = pneg %p191
    // Predicated region
    $region29: #{transformer_forward.28} parent=5 // pred_check
      _
    $region30: #{transformer_forward.28} parent=5 // pred_check_branch
      %194 = sbr.rel (%p191) target = $region32
    $region31: #{transformer_forward.28} parent=5 // pred_region
      %s195 = ssub.s32 %s9, 1
      %p196 = scmp.lt.s32.totalorder %s19, 1
      %s197 = scalar_select %p196, %s19, 1
      %p198 = scmp.lt.s32.totalorder %s20, 0
      %s199 = scalar_select %p198, %s20, 0
      %s200 = sadd.s32 %s199, %s197
      %s201 = smul.addr %s200, 4
      %s202 = scalar_lea.vmem %s0, %s201
      %p203 = pneg %p56
      %p204 = pneg %p53
      %p205 = scmp.lt.s32.totalorder %s19, 1
      %s206 = scalar_select %p205, %s19, 1
      %p207 = scmp.lt.s32.totalorder %s21, 0
      %s208 = scalar_select %p207, %s21, 0
      %s209 = sadd.s32 %s208, %s206
      %s210 = smul.addr %s209, 4
      %s211 = scalar_lea.vmem %s1, %s210
      %p212 = pneg %p84
      %p213 = pneg %p81
      %p214 = scmp.lt.s32.totalorder %s19, 1
      %s215 = scalar_select %p214, %s19, 1
      %p216 = scmp.lt.s32.totalorder %s21, 0
      %s217 = scalar_select %p216, %s21, 0
      %s218 = sadd.s32 %s217, %s215
      %s219 = smul.addr %s218, 4
      %s220 = scalar_lea.vmem %s2, %s219
      %p221 = pneg %p112
      %p222 = pneg %p109
      %p223 = pneg %p140
      %p224 = pneg %p137
      %p225 = scmp.lt.s32.totalorder %s19, 1
      %s226 = scalar_select %p225, %s19, 1
      %p227 = scmp.lt.s32.totalorder %s20, 0
      %s228 = scalar_select %p227, %s20, 0
      %s229 = sadd.s32 %s228, %s226
      %s230 = smul.addr %s229, 4
      %s231 = scalar_lea.vmem %s3, %s230
      %p232 = scmp.lt.s32.totalorder %s19, 1
      %s233 = scalar_select %p232, %s19, 1
      %p234 = scmp.lt.s32.totalorder %s20, 0
      %s235 = scalar_select %p234, %s20, 0
      %s236 = sadd.s32 %s235, %s233
      %s237 = smul.addr %s236, 4
      %s238 = scalar_lea.vmem %s0, %s237
      %p239 = scmp.lt.s32.totalorder %s19, 1
      %s240 = scalar_select %p239, %s19, 1
      %p241 = scmp.lt.s32.totalorder %s21, 0
      %s242 = scalar_select %p241, %s21, 0
      %s243 = sadd.s32 %s242, %s240
      %s244 = smul.addr %s243, 4
      %s245 = scalar_lea.vmem %s1, %s244
      %p246 = scmp.lt.s32.totalorder %s19, 1
      %s247 = scalar_select %p246, %s19, 1
      %p248 = scmp.lt.s32.totalorder %s21, 0
      %s249 = scalar_select %p248, %s21, 0
      %s250 = sadd.s32 %s249, %s247
      %s251 = smul.addr %s250, 4
      %s252 = scalar_lea.vmem %s2, %s251
      %p253 = scmp.lt.s32.totalorder %s19, 1
      %s254 = scalar_select %p253, %s19, 1
      %p255 = scmp.lt.s32.totalorder %s20, 0
      %s256 = scalar_select %p255, %s20, 0
      %s257 = sadd.s32 %s256, %s254
      %s258 = smul.addr %s257, 4
      %s259 = scalar_lea.vmem %s3, %s258
      %p261 = scmp.eq.s32.totalorder %s21, 0
      // Predicated region
      $region33: #{transformer_forward.28} parent=31 // pred_check
        %p262 = pneg %p261
      $region34: #{transformer_forward.28} parent=31 // pred_check_branch
        %264 = sbr.rel (%p262) target = $region36
      $region35: #{transformer_forward.28} parent=31 // pred_region
        %vm265 = vcmask 7168
        %266 = vst.msk [vmem:[#allocation2] sm:$0xff] %vm265, -1e+30
        %267 = vst.msk [vmem:[#allocation2 + $0x8] sm:$0xff] %vm265, -1e+30
        %268 = vst.msk [vmem:[#allocation3] sm:$0xff] %vm265, 0.0
        %269 = vst.msk [vmem:[#allocation3 + $0x8] sm:$0xff] %vm265, 0.0
        %vm270 = vcmask 130048
        %271 = vst.msk [vmem:[#allocation4] sm:$0xff] %vm270, 0.0
        %272 = vst.msk [vmem:[#allocation4 + $0x8] sm:$0xff] %vm270, 0.0
      $region36: #{transformer_forward.28} parent=31 // pred_fallthru
        _
      %v273 = vld [vmem:[%s238] sm:$0xf]
      %v274 = vld [vmem:[%s245] sm:$0xf]
      %v275 = vld [vmem:[%s252] sm:$0xf]
      %vm276 = vcmask 130048
      %v278 = vsel %vm276, %v273, 0
      %v281 = vsel %vm276, %v274, 0
      %283 = vmatprep.subr.bf16.mxu0 0
      %284 = vmatpush1.bf16.xpose.msra.mxu0 %v281
      %285 = vmatprep.subr.bf16.mxu0 0
      %286 = vmatpush1.bf16.xpose.msra.mxu0 0
      %287 = vmatprep.subr.bf16.mxu0 0
      %288 = vmatpush1.bf16.xpose.msra.mxu0 0
      %289 = vmatprep.subr.bf16.mxu0 0
      %290 = vmatpush1.bf16.xpose.msra.mxu0 0
      %291 = vmatprep.subr.bf16.mxu0 0
      %292 = vmatpush1.bf16.xpose.msra.mxu0 0
      %293 = vmatprep.subr.bf16.mxu0 0
      %294 = vmatpush1.bf16.xpose.msra.mxu0 0
      %295 = vmatprep.subr.bf16.mxu0 0
      %296 = vmatpush1.bf16.xpose.msra.mxu0 0
      %297 = vmatprep.subr.bf16.mxu0 0
      %298 = vmatpush1.bf16.xpose.msra.mxu0 0
      %299 = vmatprep.subr.bf16.mxu0 0
      %300 = vmatpush1.bf16.xpose.msra.mxu0 0
      %301 = vmatprep.subr.bf16.mxu0 0
      %302 = vmatpush1.bf16.xpose.msra.mxu0 0
      %303 = vmatprep.subr.bf16.mxu0 0
      %304 = vmatpush1.bf16.xpose.msra.mxu0 0
      %305 = vmatprep.subr.bf16.mxu0 0
      %306 = vmatpush1.bf16.xpose.msra.mxu0 0
      %307 = vmatprep.subr.bf16.mxu0 0
      %308 = vmatpush1.bf16.xpose.msra.mxu0 0
      %309 = vmatprep.subr.bf16.mxu0 0
      %310 = vmatpush1.bf16.xpose.msra.mxu0 0
      %311 = vmatprep.subr.bf16.mxu0 0
      %312 = vmatpush1.bf16.xpose.msra.mxu0 0
      %313 = vmatprep.subr.bf16.mxu0 0
      %314 = vmatpush1.bf16.xpose.msra.mxu0 0
      %315 = vmatprep.mubr.bf16.mxu0 0
      %316 = vmatmul.mubr.bf16.gmra.mrb[0].mxu0 %v278
      %v317 = vpop.f32.mrb[0].mxu0
      %v318 = vadd.f32 0.0, %v317
      %v319 = vpop.f32.mrb[0].mxu0
      %v320 = vpop.f32.mrb[0].mxu0
      %v321 = vpop.f32.mrb[0].mxu0
      %322 = vdwg.mxu0
      %v323 = vld [vmem:[#allocation2] sm:$0xff]
      %vm324 = vcmask 64512
      %v325 = vsel %vm324, %v318, -inf
      %326 = vmax.xlane.f32.xlu0 %v325
      %v327 = vpop.xlane.xlu0 %326
      %v328 = vmax.f32 %v323, %v327
      %v329 = vsub.f32 %v323, %v328
      %v330 = vmul.f32 %v329, 1.442695
      %v331 = vpow.pop %v330
      %333 = vset.pattern.permute.xlu0 0
      %334 = vperm.xlu0 %333, %v328
      %v335 = vpop.permute.xlu0 %334
      %v337 = vsub.f32 %v318, %v335
      %v338 = vmul.f32 %v337, 1.442695
      %v339 = vpow.pop %v338
      %v340 = vld [vmem:[#allocation3] sm:$0xff]
      %v341 = vmul.f32 %v331, %v340
      %v342 = vsel %vm324, %v339, 0.0
      %343 = vadd.xlane.f32.xlu0 %v342
      %v344 = vpop.xlane.xlu0 %343
      %v345 = vadd.f32 %v341, %v344
      %vm346 = vcmask 7168
      %347 = vst.msk [vmem:[#allocation3] sm:$0xff] %vm346, %v345
      %v348 = vld [vmem:[#allocation4] sm:$0xff]
      %350 = vset.pattern.permute.xlu0 0
      %351 = vperm.xlu0 %350, %v331
      %v352 = vpop.permute.xlu0 %351
      %v354 = vmul.f32 %v352, %v348
      %v355 = vpack.c.bf16 %v339, %v339
      %v357 = vsel %vm324, %v355, 0
      %vm359 = vcmask 1043456
      %v361 = vsel %vm359, %v275, 0
      %363 = vmatprep.subr.bf16.mxu0 0
      %364 = vmatpush1.bf16.msra.mxu0 %v361
      %365 = vmatprep.subr.bf16.mxu0 0
      %366 = vmatpush1.bf16.msra.mxu0 0
      %367 = vmatprep.subr.bf16.mxu0 0
      %368 = vmatpush1.bf16.msra.mxu0 0
      %369 = vmatprep.subr.bf16.mxu0 0
      %370 = vmatpush1.bf16.msra.mxu0 0
      %371 = vmatprep.subr.bf16.mxu0 0
      %372 = vmatpush1.bf16.msra.mxu0 0
      %373 = vmatprep.subr.bf16.mxu0 0
      %374 = vmatpush1.bf16.msra.mxu0 0
      %375 = vmatprep.subr.bf16.mxu0 0
      %376 = vmatpush1.bf16.msra.mxu0 0
      %377 = vmatprep.subr.bf16.mxu0 0
      %378 = vmatpush1.bf16.msra.mxu0 0
      %379 = vmatprep.subr.bf16.mxu0 0
      %380 = vmatpush1.bf16.msra.mxu0 0
      %381 = vmatprep.subr.bf16.mxu0 0
      %382 = vmatpush1.bf16.msra.mxu0 0
      %383 = vmatprep.subr.bf16.mxu0 0
      %384 = vmatpush1.bf16.msra.mxu0 0
      %385 = vmatprep.subr.bf16.mxu0 0
      %386 = vmatpush1.bf16.msra.mxu0 0
      %387 = vmatprep.subr.bf16.mxu0 0
      %388 = vmatpush1.bf16.msra.mxu0 0
      %389 = vmatprep.subr.bf16.mxu0 0
      %390 = vmatpush1.bf16.msra.mxu0 0
      %391 = vmatprep.subr.bf16.mxu0 0
      %392 = vmatpush1.bf16.msra.mxu0 0
      %393 = vmatprep.subr.bf16.mxu0 0
      %394 = vmatpush1.bf16.msra.mxu0 0
      %395 = vmatprep.mubr.bf16.mxu0 0
      %396 = vmatmul.mubr.bf16.gmra.mrb[0].mxu0 %v357
      %v397 = vpop.f32.mrb[0].mxu0
      %v398 = vadd.f32 0.0, %v397
      %v399 = vpop.f32.mrb[0].mxu0
      %v400 = vpop.f32.mrb[0].mxu0
      %v401 = vpop.f32.mrb[0].mxu0
      %402 = vdwg.mxu0
      %v403 = vadd.f32 %v354, %v398
      %404 = vst.msk [vmem:[#allocation4] sm:$0xff] %vm276, %v403
      %405 = vst.msk [vmem:[#allocation2] sm:$0xff] %vm346, %v328
      %v407 = vunpack.c.l.b16 %v273
      %v408 = vpack.c.b16 %v407, %v407
      %409 = vrot.lane.b32.xlu0 %v408, 112
      %v410 = vpop.permute.xlu0 %409
      %v412 = vunpack.c.l.b16 %v274
      %v413 = vpack.c.b16 %v412, %v412
      %414 = vrot.lane.b32.xlu0 %v413, 112
      %v415 = vpop.permute.xlu0 %414
      %v417 = vsel %vm276, %v410, 0
      %v420 = vsel %vm276, %v415, 0
      %422 = vmatprep.subr.bf16.mxu0 0
      %423 = vmatpush1.bf16.xpose.msra.mxu0 %v420
      %424 = vmatprep.subr.bf16.mxu0 0
      %425 = vmatpush1.bf16.xpose.msra.mxu0 0
      %426 = vmatprep.subr.bf16.mxu0 0
      %427 = vmatpush1.bf16.xpose.msra.mxu0 0
      %428 = vmatprep.subr.bf16.mxu0 0
      %429 = vmatpush1.bf16.xpose.msra.mxu0 0
      %430 = vmatprep.subr.bf16.mxu0 0
      %431 = vmatpush1.bf16.xpose.msra.mxu0 0
      %432 = vmatprep.subr.bf16.mxu0 0
      %433 = vmatpush1.bf16.xpose.msra.mxu0 0
      %434 = vmatprep.subr.bf16.mxu0 0
      %435 = vmatpush1.bf16.xpose.msra.mxu0 0
      %436 = vmatprep.subr.bf16.mxu0 0
      %437 = vmatpush1.bf16.xpose.msra.mxu0 0
      %438 = vmatprep.subr.bf16.mxu0 0
      %439 = vmatpush1.bf16.xpose.msra.mxu0 0
      %440 = vmatprep.subr.bf16.mxu0 0
      %441 = vmatpush1.bf16.xpose.msra.mxu0 0
      %442 = vmatprep.subr.bf16.mxu0 0
      %443 = vmatpush1.bf16.xpose.msra.mxu0 0
      %444 = vmatprep.subr.bf16.mxu0 0
      %445 = vmatpush1.bf16.xpose.msra.mxu0 0
      %446 = vmatprep.subr.bf16.mxu0 0
      %447 = vmatpush1.bf16.xpose.msra.mxu0 0
      %448 = vmatprep.subr.bf16.mxu0 0
      %449 = vmatpush1.bf16.xpose.msra.mxu0 0
      %450 = vmatprep.subr.bf16.mxu0 0
      %451 = vmatpush1.bf16.xpose.msra.mxu0 0
      %452 = vmatprep.subr.bf16.mxu0 0
      %453 = vmatpush1.bf16.xpose.msra.mxu0 0
      %454 = vmatprep.mubr.bf16.mxu0 0
      %455 = vmatmul.mubr.bf16.gmra.mrb[0].mxu0 %v417
      %v456 = vpop.f32.mrb[0].mxu0
      %v457 = vadd.f32 0.0, %v456
      %v458 = vpop.f32.mrb[0].mxu0
      %v459 = vpop.f32.mrb[0].mxu0
      %v460 = vpop.f32.mrb[0].mxu0
      %461 = vdwg.mxu0
      %s462 = scalar_lea.vmem [#allocation2], 8
      %v463 = vld [vmem:[%s462] sm:$0xff]
      %v464 = vsel %vm324, %v457, -inf
      %465 = vmax.xlane.f32.xlu0 %v464
      %v466 = vpop.xlane.xlu0 %465
      %v467 = vmax.f32 %v463, %v466
      %v468 = vsub.f32 %v463, %v467
      %v469 = vmul.f32 %v468, 1.442695
      %v470 = vpow.pop %v469
      %472 = vset.pattern.permute.xlu0 0
      %473 = vperm.xlu0 %472, %v467
      %v474 = vpop.permute.xlu0 %473
      %v476 = vsub.f32 %v457, %v474
      %v477 = vmul.f32 %v476, 1.442695
      %v478 = vpow.pop %v477
      %s479 = scalar_lea.vmem [#allocation3], 8
      %v480 = vld [vmem:[%s479] sm:$0xff]
      %v481 = vmul.f32 %v470, %v480
      %v482 = vsel %vm324, %v478, 0.0
      %483 = vadd.xlane.f32.xlu0 %v482
      %v484 = vpop.xlane.xlu0 %483
      %v485 = vadd.f32 %v481, %v484
      %486 = vst.msk [vmem:[%s479] sm:$0xff] %vm346, %v485
      %s487 = scalar_lea.vmem [#allocation4], 8
      %v488 = vld [vmem:[%s487] sm:$0xff]
      %490 = vset.pattern.permute.xlu0 0
      %491 = vperm.xlu0 %490, %v470
      %v492 = vpop.permute.xlu0 %491
      %v494 = vmul.f32 %v492, %v488
      %v495 = vpack.c.bf16 %v478, %v478
      %v497 = vunpack.c.l.b16 %v275
      %v498 = vpack.c.b16 %v497, %v497
      %499 = vrot.lane.b32.xlu0 %v498, 112
      %v500 = vpop.permute.xlu0 %499
      %v502 = vsel %vm324, %v495, 0
      %v505 = vsel %vm359, %v500, 0
      %507 = vmatprep.subr.bf16.mxu0 0
      %508 = vmatpush1.bf16.msra.mxu0 %v505
      %509 = vmatprep.subr.bf16.mxu0 0
      %510 = vmatpush1.bf16.msra.mxu0 0
      %511 = vmatprep.subr.bf16.mxu0 0
      %512 = vmatpush1.bf16.msra.mxu0 0
      %513 = vmatprep.subr.bf16.mxu0 0
      %514 = vmatpush1.bf16.msra.mxu0 0
      %515 = vmatprep.subr.bf16.mxu0 0
      %516 = vmatpush1.bf16.msra.mxu0 0
      %517 = vmatprep.subr.bf16.mxu0 0
      %518 = vmatpush1.bf16.msra.mxu0 0
      %519 = vmatprep.subr.bf16.mxu0 0
      %520 = vmatpush1.bf16.msra.mxu0 0
      %521 = vmatprep.subr.bf16.mxu0 0
      %522 = vmatpush1.bf16.msra.mxu0 0
      %523 = vmatprep.subr.bf16.mxu0 0
      %524 = vmatpush1.bf16.msra.mxu0 0
      %525 = vmatprep.subr.bf16.mxu0 0
      %526 = vmatpush1.bf16.msra.mxu0 0
      %527 = vmatprep.subr.bf16.mxu0 0
      %528 = vmatpush1.bf16.msra.mxu0 0
      %529 = vmatprep.subr.bf16.mxu0 0
      %530 = vmatpush1.bf16.msra.mxu0 0
      %531 = vmatprep.subr.bf16.mxu0 0
      %532 = vmatpush1.bf16.msra.mxu0 0
      %533 = vmatprep.subr.bf16.mxu0 0
      %534 = vmatpush1.bf16.msra.mxu0 0
      %535 = vmatprep.subr.bf16.mxu0 0
      %536 = vmatpush1.bf16.msra.mxu0 0
      %537 = vmatprep.subr.bf16.mxu0 0
      %538 = vmatpush1.bf16.msra.mxu0 0
      %539 = vmatprep.mubr.bf16.mxu0 0
      %540 = vmatmul.mubr.bf16.gmra.mrb[0].mxu0 %v502
      %v541 = vpop.f32.mrb[0].mxu0
      %v542 = vadd.f32 0.0, %v541
      %v543 = vpop.f32.mrb[0].mxu0
      %v544 = vpop.f32.mrb[0].mxu0
      %v545 = vpop.f32.mrb[0].mxu0
      %546 = vdwg.mxu0
      %v547 = vadd.f32 %v494, %v542
      %548 = vst.msk [vmem:[%s487] sm:$0xff] %vm276, %v547
      %549 = vst.msk [vmem:[%s462] sm:$0xff] %vm346, %v467
      // Predicated region
      $region37: #{transformer_forward.28} parent=31 // pred_check
        %p550 = pneg %p261
      $region38: #{transformer_forward.28} parent=31 // pred_check_branch
        %552 = sbr.rel (%p550) target = $region40
      $region39: #{transformer_forward.28} parent=31 // pred_region
        %v553 = vld [vmem:[#allocation3] sm:$0xff]
        %v554 = vrcp.pop %v553
        %v555 = vld [vmem:[#allocation4] sm:$0xff]
        %557 = vset.pattern.permute.xlu0 0
        %558 = vperm.xlu0 %557, %v554
        %v559 = vpop.permute.xlu0 %558
        %v561 = vmul.f32 %v555, %v559
        %v562 = vld [vmem:[%s479] sm:$0xff]
        %v563 = vrcp.pop %v562
        %v564 = vld [vmem:[%s487] sm:$0xff]
        %566 = vset.pattern.permute.xlu0 0
        %567 = vperm.xlu0 %566, %v563
        %v568 = vpop.permute.xlu0 %567
        %v570 = vmul.f32 %v564, %v568
        %572 = vrot.lane.b32.xlu0 %v570, 16
        %v573 = vpop.permute.xlu0 %572
        %v575 = vsel %vm276, %v561, %v573
        %v576 = vpack.c.bf16 %v575, %v575
        %vm577 = vcmask 257024
        %578 = vst.msk [vmem:[%s259] sm:$0xf] %vm577, %v576
      $region40: #{transformer_forward.28} parent=31 // pred_fallthru
        _
      %p579 = scmp.lt.s32.totalorder %s19, 1
      %s580 = scalar_select %p579, %s19, 1
      %p581 = scmp.lt.s32.totalorder %s20, 0
      %s582 = scalar_select %p581, %s20, 0
      %s583 = sadd.s32 %s582, %s580
      %s584 = smul.addr %s583, 4
      %s585 = scalar_lea.vmem %s3, %s584
      // Predicated region
      $region41: #{transformer_forward.28} parent=31 // pred_check
        %p586 = pneg %p137
      $region42: #{transformer_forward.28} parent=31 // pred_check_branch
        %588 = sbr.rel (%p586) target = $region44
      $region43: #{transformer_forward.28} parent=31 // pred_region
        _
      $region44: #{transformer_forward.28} parent=31 // pred_fallthru
        _
    $region32: #{transformer_forward.28} parent=5 // pred_fallthru
      _
    %p589 = scmp.le.s32.totalorder 2, %s9
    // Predicated region
    $region45: #{transformer_forward.28} parent=5 // pred_check
      %p590 = pneg %p589
    $region46: #{transformer_forward.28} parent=5 // pred_check_branch
      %592 = sbr.rel (%p590) target = $region48
    $region47: #{transformer_forward.28} parent=5 // pred_region
      %s593 = ssub.s32 %s9, 2
      // Predicated region
      $region49: #{transformer_forward.28} parent=47 // pred_check
        %p594 = pneg %p143
      $region50: #{transformer_forward.28} parent=47 // pred_check_branch
        %596 = sbr.rel (%p594) target = $region52
      $region51: #{transformer_forward.28} parent=47 // pred_region
        %p597 = scmp.lt.s32.totalorder %s22, 1
        %s598 = scalar_select %p597, %s22, 1
        %p599 = scmp.lt.s32.totalorder %s23, 0
        %s600 = scalar_select %p599, %s23, 0
        %s601 = sadd.s32 %s600, %s598
        %s602 = smul.addr %s601, 4
        %s603 = scalar_lea.vmem %s3, %s602
      $region52: #{transformer_forward.28} parent=47 // pred_fallthru
        _
    $region48: #{transformer_forward.28} parent=5 // pred_fallthru
      _
  $region6: #{transformer_forward.28} parent=0 // loop_footer
    %s13 = sadd.s32 1, %s9
  $region7: #{transformer_forward.28} parent=0 // loop_footer_branch
    %8 = sbr.rel target = $region3
  $region8: #{transformer_forward.28} parent=0 // loop_exit
    _

// kernel: transformer_forward.35
$region0: #{transformer_forward.35}
  #allocation0 [shape = 'u32[]', space=smem, size = 0x4, offset = 0x4, fixed_abs, tag = 'smem constant byte address 0x4 - core index']
  #allocation1 [shape = 'u32[144,128]{1,0:T(1,128)}', space=vmem, size = 0x12000, scoped, tag = 'internal scratch']
  %s0 = inlined_call_operand.vmem [shape: bf16[16,32], index: 0, kind: input, shape index: {}]
  %s1 = inlined_call_operand.vmem [shape: f32[1,32], index: 1, kind: input, shape index: {}]
  %s2 = inlined_call_operand.vmem [shape: f32[1,32], index: 2, kind: input, shape index: {}]
  %s3 = inlined_call_operand.vmem [shape: bf16[16,32], index: 3, kind: output, shape index: {}]
  %s4 = sld [smem:[#allocation0]]
  $region22: #{transformer_forward.35} parent=0
    _
  %s6 = ssub.s32 1, %s4
  %s7 = scalar_select 0, %s6, %s4
  // Predicated region
  $region2: #{transformer_forward.35} parent=0 // pred_check
    _
  $region3: #{transformer_forward.35} parent=0 // pred_check_branch
    %9 = sbr.rel (0) target = $region5
  $region4: #{transformer_forward.35} parent=0 // pred_region
    _
  $region5: #{transformer_forward.35} parent=0 // pred_fallthru
    _
  // Predicated region
  $region6: #{transformer_forward.35} parent=0 // pred_check
    _
  $region7: #{transformer_forward.35} parent=0 // pred_check_branch
    %11 = sbr.rel (0) target = $region9
  $region8: #{transformer_forward.35} parent=0 // pred_region
    _
  $region9: #{transformer_forward.35} parent=0 // pred_fallthru
    _
  // Predicated region
  $region10: #{transformer_forward.35} parent=0 // pred_check
    _
  $region11: #{transformer_forward.35} parent=0 // pred_check_branch
    %13 = sbr.rel (0) target = $region13
  $region12: #{transformer_forward.35} parent=0 // pred_region
    _
  $region13: #{transformer_forward.35} parent=0 // pred_fallthru
    _
  %v14 = vld [vmem:[%s0] sm:$0xf]
  %v15 = vld [vmem:[%s0 + $0x4] sm:$0xf]
  %v16 = vunpack.c.l.bf16 %v14
  %v17 = vunpack.c.l.bf16 %v15
  %vm18 = vcmask 261120
  %v19 = vsel %vm18, %v16, 0.0
  %20 = vadd.xlane.f32.xlu0 %v19
  %v21 = vpop.xlane.xlu0 %20
  %v22 = vsel %vm18, %v17, 0.0
  %23 = vadd.xlane.f32.xlu0 %v22
  %v24 = vpop.xlane.xlu0 %23
  %v25 = vrcp.pop 32.0
  %v26 = vmul.f32 %v21, %v25
  %v27 = vmul.f32 %v24, %v25
  %v28 = vsub.f32 %v16, %v26
  %v29 = vsub.f32 %v17, %v27
  %v30 = vmul.f32 %v28, %v28
  %v31 = vmul.f32 %v29, %v29
  %v32 = vsel %vm18, %v30, 0.0
  %33 = vadd.xlane.f32.xlu0 %v32
  %v34 = vpop.xlane.xlu0 %33
  %v35 = vsel %vm18, %v31, 0.0
  %36 = vadd.xlane.f32.xlu0 %v35
  %v37 = vpop.xlane.xlu0 %36
  %v38 = vmul.f32 %v34, %v25
  %v39 = vmul.f32 %v37, %v25
  %v40 = vadd.f32 %v38, 1e-05
  %v41 = vadd.f32 %v39, 1e-05
  %v42 = vrsqrt.pop %v40
  %v43 = vrsqrt.pop %v41
  %v44 = vmul.f32 %v28, %v42
  %v45 = vmul.f32 %v29, %v43
  %v46 = vld [vmem:[%s1] sm:$0x1]
  %v48 = vlaneseq
  %v49 = vshrl.u32 %v48, 7
  %v50 = vsub.s32 0, %v49
  %v51 = vrot.slane %v46, %v50
  %v53 = vmul.f32 %v44, %v51
  %v54 = vmul.f32 %v45, %v51
  %v55 = vld [vmem:[%s2] sm:$0x1]
  %v57 = vlaneseq
  %v58 = vshrl.u32 %v57, 7
  %v59 = vsub.s32 0, %v58
  %v60 = vrot.slane %v55, %v59
  %v62 = vadd.f32 %v53, %v60
  %v63 = vadd.f32 %v54, %v60
  %v64 = vpack.c.bf16 %v63, %v62
  %v66 = vunpack.c.l.b16 %v64
  %v67 = vunpack.c.h.b16 %v64
  %v68 = vpack.c.b16 %v66, %v66
  %v69 = vpack.c.b16 %v67, %v67
  %vm72 = vcmask 257024
  %73 = vst.msk [vmem:[%s3] sm:$0xf] %vm72, %v68
  %74 = vst.msk [vmem:[%s3 + $0x4] sm:$0xf] %vm72, %v69
  // Predicated region
  $region14: #{transformer_forward.35} parent=0 // pred_check
    _
  $region15: #{transformer_forward.35} parent=0 // pred_check_branch
    %76 = sbr.rel (0) target = $region17
  $region16: #{transformer_forward.35} parent=0 // pred_region
    _
  $region17: #{transformer_forward.35} parent=0 // pred_fallthru
    _
  // Predicated region
  $region18: #{transformer_forward.35} parent=0 // pred_check
    _
  $region19: #{transformer_forward.35} parent=0 // pred_check_branch
    %78 = sbr.rel (0) target = $region21
  $region20: #{transformer_forward.35} parent=0 // pred_region
    _
  $region21: #{transformer_forward.35} parent=0 // pred_fallthru
    _

// kernel: transformer_forward.40
$region0: #{transformer_forward.40}
  #allocation0 [shape = 'u32[]', space=smem, size = 0x4, offset = 0x4, fixed_abs, tag = 'smem constant byte address 0x4 - core index']
  #allocation1 [shape = 'u32[144,128]{1,0:T(1,128)}', space=vmem, size = 0x12000, scoped, tag = 'internal scratch']
  #allocation2 [shape = 'f32[16,64]{1,0:T(8,128)}', space=vmem, size = 0x2000, scoped, tag = 'scratch operand']
  %s0 = inlined_call_operand.vmem [shape: bf16[16,32], index: 0, kind: input, shape index: {}]
  %s1 = inlined_call_operand.vmem [shape: bf16[32,64], index: 1, kind: input, shape index: {}]
  %s2 = inlined_call_operand.vmem [shape: f32[1,64], index: 2, kind: input, shape index: {}]
  %s3 = inlined_call_operand.vmem [shape: bf16[16,64], index: 3, kind: output, shape index: {}]
  %s4 = sld [smem:[#allocation0]]
  $region30: #{transformer_forward.40} parent=0
    _
  %s6 = ssub.s32 1, %s4
  %s7 = scalar_select 0, %s6, %s4
  // Predicated region
  $region2: #{transformer_forward.40} parent=0 // pred_check
    _
  $region3: #{transformer_forward.40} parent=0 // pred_check_branch
    %9 = sbr.rel (0) target = $region5
  $region4: #{transformer_forward.40} parent=0 // pred_region
    _
  $region5: #{transformer_forward.40} parent=0 // pred_fallthru
    _
  // Predicated region
  $region6: #{transformer_forward.40} parent=0 // pred_check
    _
  $region7: #{transformer_forward.40} parent=0 // pred_check_branch
    %11 = sbr.rel (0) target = $region9
  $region8: #{transformer_forward.40} parent=0 // pred_region
    _
  $region9: #{transformer_forward.40} parent=0 // pred_fallthru
    _
  // Predicated region
  $region10: #{transformer_forward.40} parent=0 // pred_check
    _
  $region11: #{transformer_forward.40} parent=0 // pred_check_branch
    %13 = sbr.rel (0) target = $region13
  $region12: #{transformer_forward.40} parent=0 // pred_region
    _
  $region13: #{transformer_forward.40} parent=0 // pred_fallthru
    _
  %p15 = scmp.eq.s32.totalorder 0, 0
  // Predicated region
  $region14: #{transformer_forward.40} parent=0 // pred_check
    %p16 = pneg %p15
  $region15: #{transformer_forward.40} parent=0 // pred_check_branch
    %18 = sbr.rel (%p16) target = $region17
  $region16: #{transformer_forward.40} parent=0 // pred_region
    %vm19 = vcmask 523264
    %20 = vst.msk [vmem:[#allocation2] sm:$0xff] %vm19, 0.0
    %21 = vst.msk [vmem:[#allocation2 + $0x8] sm:$0xff] %vm19, 0.0
  $region17: #{transformer_forward.40} parent=0 // pred_fallthru
    _
  %v22 = vld [vmem:[#allocation2] sm:$0xff]
  %v23 = vld [vmem:[#allocation2 + $0x8] sm:$0xff]
  %v24 = vld [vmem:[%s0] sm:$0xf]
  %v25 = vld [vmem:[%s0 + $0x4] sm:$0xf]
  %v26 = vld [vmem:[%s1] sm:$0xf]
  %v27 = vld [vmem:[%s1 + $0x4] sm:$0xf]
  %v28 = vld [vmem:[%s1 + $0x8] sm:$0xf]
  %v29 = vld [vmem:[%s1 + $0xc] sm:$0xf]
  %v32 = vunpack.c.l.b16 %v24
  %v33 = vunpack.c.l.b16 %v25
  %v34 = vpack.c.b16 %v33, %v32
  %v39 = vunpack.c.l.b16 %v26
  %v40 = vunpack.c.l.b16 %v27
  %v41 = vunpack.c.l.b16 %v28
  %v42 = vunpack.c.l.b16 %v29
  %v43 = vpack.c.b16 %v40, %v39
  %v44 = vpack.c.b16 %v42, %v41
  %vm47 = vcmask 261120
  %v49 = vsel %vm47, %v34, 0
  %51 = vmatprep.subr.bf16.mxu0 0
  %52 = vmatpush1.bf16.msra.mxu0 %v43
  %53 = vmatprep.subr.bf16.mxu0 0
  %54 = vmatpush1.bf16.msra.mxu0 %v44
  %55 = vmatprep.subr.bf16.mxu0 0
  %56 = vmatpush1.bf16.msra.mxu0 0
  %57 = vmatprep.subr.bf16.mxu0 0
  %58 = vmatpush1.bf16.msra.mxu0 0
  %59 = vmatprep.subr.bf16.mxu0 0
  %60 = vmatpush1.bf16.msra.mxu0 0
  %61 = vmatprep.subr.bf16.mxu0 0
  %62 = vmatpush1.bf16.msra.mxu0 0
  %63 = vmatprep.subr.bf16.mxu0 0
  %64 = vmatpush1.bf16.msra.mxu0 0
  %65 = vmatprep.subr.bf16.mxu0 0
  %66 = vmatpush1.bf16.msra.mxu0 0
  %67 = vmatprep.subr.bf16.mxu0 0
  %68 = vmatpush1.bf16.msra.mxu0 0
  %69 = vmatprep.subr.bf16.mxu0 0
  %70 = vmatpush1.bf16.msra.mxu0 0
  %71 = vmatprep.subr.bf16.mxu0 0
  %72 = vmatpush1.bf16.msra.mxu0 0
  %73 = vmatprep.subr.bf16.mxu0 0
  %74 = vmatpush1.bf16.msra.mxu0 0
  %75 = vmatprep.subr.bf16.mxu0 0
  %76 = vmatpush1.bf16.msra.mxu0 0
  %77 = vmatprep.subr.bf16.mxu0 0
  %78 = vmatpush1.bf16.msra.mxu0 0
  %79 = vmatprep.subr.bf16.mxu0 0
  %80 = vmatpush1.bf16.msra.mxu0 0
  %81 = vmatprep.subr.bf16.mxu0 0
  %82 = vmatpush1.bf16.msra.mxu0 0
  %83 = vmatprep.mubr.bf16.mxu0 0
  %84 = vmatmul.mubr.bf16.gmra.mrb[0].mxu0 %v49
  %v85 = vpop.f32.mrb[0].mxu0
  %v86 = vadd.f32 0.0, %v85
  %v87 = vpop.f32.mrb[0].mxu0
  %v88 = vpop.f32.mrb[0].mxu0
  %v89 = vadd.f32 0.0, %v88
  %v90 = vpop.f32.mrb[0].mxu0
  %91 = vdwg.mxu0
  %v92 = vadd.f32 %v22, %v86
  %v93 = vadd.f32 %v23, %v89
  %vm94 = vcmask 523264
  %95 = vst.msk [vmem:[#allocation2] sm:$0xff] %vm94, %v92
  %96 = vst.msk [vmem:[#allocation2 + $0x8] sm:$0xff] %vm94, %v93
  // Predicated region
  $region18: #{transformer_forward.40} parent=0 // pred_check
    %p97 = pneg %p15
  $region19: #{transformer_forward.40} parent=0 // pred_check_branch
    %99 = sbr.rel (%p97) target = $region21
  $region20: #{transformer_forward.40} parent=0 // pred_region
    %v100 = vld [vmem:[#allocation2] sm:$0xff]
    %v101 = vld [vmem:[#allocation2 + $0x8] sm:$0xff]
    %v102 = vld [vmem:[%s2] sm:$0x1]
    %v104 = vlaneseq
    %v105 = vshrl.u32 %v104, 7
    %v106 = vsub.s32 0, %v105
    %v107 = vrot.slane %v102, %v106
    %v109 = vadd.f32 %v100, %v107
    %v110 = vadd.f32 %v101, %v107
    %v111 = vpack.c.bf16 %v110, %v109
    %v113 = vunpack.c.l.b16 %v111
    %v114 = vunpack.c.h.b16 %v111
    %v115 = vpack.c.b16 %v113, %v113
    %v116 = vpack.c.b16 %v114, %v114
    %vm119 = vcmask 519168
    %120 = vst.msk [vmem:[%s3] sm:$0xf] %vm119, %v115
    %121 = vst.msk [vmem:[%s3 + $0x4] sm:$0xf] %vm119, %v116
  $region21: #{transformer_forward.40} parent=0 // pred_fallthru
    _
  // Predicated region
  $region22: #{transformer_forward.40} parent=0 // pred_check
    _
  $region23: #{transformer_forward.40} parent=0 // pred_check_branch
    %123 = sbr.rel (0) target = $region25
  $region24: #{transformer_forward.40} parent=0 // pred_region
    _
  $region25: #{transformer_forward.40} parent=0 // pred_fallthru
    _
  // Predicated region
  $region26: #{transformer_forward.40} parent=0 // pred_check
    _
  $region27: #{transformer_forward.40} parent=0 // pred_check_branch
    %125 = sbr.rel (0) target = $region29
  $region28: #{transformer_forward.40} parent=0 // pred_region
    _
  $region29: #{transformer_forward.40} parent=0 // pred_fallthru
    _

// kernel: transformer_forward.30
$region0: #{transformer_forward.30}
  #allocation0 [shape = 'u32[]', space=smem, size = 0x4, offset = 0x4, fixed_abs, tag = 'smem constant byte address 0x4 - core index']
  #allocation1 [shape = 'u32[144,128]{1,0:T(1,128)}', space=vmem, size = 0x12000, scoped, tag = 'internal scratch']
  #allocation2 [shape = 'f32[16,32]{1,0:T(8,128)}', space=vmem, size = 0x2000, scoped, tag = 'scratch operand']
  %s0 = inlined_call_operand.vmem [shape: bf16[16,32], index: 0, kind: input, shape index: {}]
  %s1 = inlined_call_operand.vmem [shape: bf16[32,2048], index: 1, kind: input, shape index: {}]
  %s2 = inlined_call_operand.vmem [shape: f32[1,2048], index: 2, kind: input, shape index: {}]
  %s3 = inlined_call_operand.vmem [shape: bf16[2048,32], index: 3, kind: input, shape index: {}]
  %s4 = inlined_call_operand.vmem [shape: f32[1,32], index: 4, kind: input, shape index: {}]
  %s5 = inlined_call_operand.vmem [shape: f32[1,32], index: 5, kind: input, shape index: {}]
  %s6 = inlined_call_operand.vmem [shape: f32[1,32], index: 6, kind: input, shape index: {}]
  %s7 = inlined_call_operand.vmem [shape: bf16[16,32], index: 7, kind: output, shape index: {}]
  %s8 = sld [smem:[#allocation0]]
  $region107: #{transformer_forward.30} parent=0
    _
  %s10 = ssub.s32 1, %s8
  %s11 = scalar_select 0, %s10, %s8
  $region1: #{transformer_forward.30} parent=0
    #allocation3 [shape = 'u8[32768]{0}', space=vmem, size = 0x8000, scoped, tag = 'input window, operand 1']
    loop: start=0, step=1, limit=10
    $region2: #{transformer_forward.30} parent=1 // loop_pre_header
      _
    $region3: #{transformer_forward.30} parent=1 // loop_header
      %s13 = sphi 0, %s17
      %p14 = scmp.ge.s32.totalorder %s13, 10
      %s20 = sphi 0, %s32
      %s21 = sphi 0, %s28
      %s22 = sphi 0, %s20
      %s23 = sphi 0, %s21
      %s24 = sphi 0, %s22
      %s25 = sphi 0, %s23
      %s35 = sphi 0, %s37
      %s38 = sphi 0, %s35
      %s39 = sphi 0, %s38
      %s55 = sphi 0, %s39
      %s61 = sphi 0, %s63
      %s64 = sphi 0, %s61
      %s65 = sphi 0, %s64
      %s81 = sphi 0, %s65
      %s87 = sphi 0, %s89
      %s90 = sphi 0, %s87
      %s91 = sphi 0, %s90
      %s107 = sphi 0, %s91
      %s113 = sphi 0, %s115
      %s116 = sphi 0, %s113
      %s117 = sphi 0, %s116
      %s133 = sphi 0, %s117
      %s137 = sphi 0, %s137
      %s139 = sphi 0, %s137
      %s140 = sphi 0, %s139
      %s154 = sphi 0, %s140
      %s158 = sphi 0, %s158
      %s160 = sphi 0, %s158
      %s161 = sphi 0, %s160
      %s175 = sphi 0, %s161
      %s179 = sphi 0, %s179
      %s181 = sphi 0, %s179
      %s182 = sphi 0, %s181
      %s196 = sphi 0, %s182
      %s202 = sphi 0, %s204
      %s205 = sphi 0, %s202
      %s206 = sphi 0, %s205
      %s222 = sphi 0, %s206
    $region4: #{transformer_forward.30} parent=1 // loop_header_branch
      %16 = sbr.rel (%p14) target = $region8
    $region5: #{transformer_forward.30} parent=1 // loop_body
      %s18 = ssub.s32 %s13, 1
      %s19 = ssub.s32 %s13, 2
      %s26 = sadd.s32 1, %s21
      %p27 = scmp.ge.s32.totalorder %s26, 8
      %s28 = scalar_select %p27, 0, %s26
      %s29 = sadd.s32 1, %s20
      %s30 = scalar_select %p27, %s29, %s20
      %p31 = scmp.ge.s32.totalorder %s30, 1
      %s32 = scalar_select %p31, 0, %s30
      %s33 = ssub.s32 %s20, %s32
      %p34 = scmp.eq.s32.totalorder %s33, 0
      %s36 = sadd.s32 %s35, 1
      %s37 = scalar_select %p34, %s35, %s36
      %p40 = pneg %p34
      %p41 = scmp.eq.s32.totalorder %s13, 7
      %p42 = por %p40, %p41
      %p43 = scmp.ne.s32.totalorder %s35, %s38
      %p44 = scmp.eq.s32.totalorder %s13, 0
      %p45 = por %p43, %p44
      %p46 = scmp.ne.s32.totalorder %s35, %s38
      %p47 = scmp.eq.s32.totalorder %s18, 7
      %p48 = por %p46, %p47
      %p49 = scmp.ne.s32.totalorder %s38, %s39
      %p50 = scmp.eq.s32.totalorder %s18, 0
      %p51 = por %p49, %p50
      %p52 = scmp.ne.s32.totalorder %s38, %s39
      %p53 = scmp.eq.s32.totalorder %s19, 7
      %p54 = por %p52, %p53
      %p56 = scmp.ne.s32.totalorder %s39, %s55
      %p57 = scmp.eq.s32.totalorder %s19, 0
      %p58 = por %p56, %p57
      %s59 = ssub.s32 %s21, %s28
      %p60 = scmp.eq.s32.totalorder %s59, 0
      %s62 = sadd.s32 %s61, 1
      %s63 = scalar_select %p60, %s61, %s62
      %p66 = pneg %p60
      %p67 = scmp.eq.s32.totalorder %s13, 7
      %p68 = por %p66, %p67
      %p69 = scmp.ne.s32.totalorder %s61, %s64
      %p70 = scmp.eq.s32.totalorder %s13, 0
      %p71 = por %p69, %p70
      %p72 = scmp.ne.s32.totalorder %s61, %s64
      %p73 = scmp.eq.s32.totalorder %s18, 7
      %p74 = por %p72, %p73
      %p75 = scmp.ne.s32.totalorder %s64, %s65
      %p76 = scmp.eq.s32.totalorder %s18, 0
      %p77 = por %p75, %p76
      %p78 = scmp.ne.s32.totalorder %s64, %s65
      %p79 = scmp.eq.s32.totalorder %s19, 7
      %p80 = por %p78, %p79
      %p82 = scmp.ne.s32.totalorder %s65, %s81
      %p83 = scmp.eq.s32.totalorder %s19, 0
      %p84 = por %p82, %p83
      %s85 = ssub.s32 %s21, %s28
      %p86 = scmp.eq.s32.totalorder %s85, 0
      %s88 = sadd.s32 %s87, 1
      %s89 = scalar_select %p86, %s87, %s88
      %p92 = pneg %p86
      %p93 = scmp.eq.s32.totalorder %s13, 7
      %p94 = por %p92, %p93
      %p95 = scmp.ne.s32.totalorder %s87, %s90
      %p96 = scmp.eq.s32.totalorder %s13, 0
      %p97 = por %p95, %p96
      %p98 = scmp.ne.s32.totalorder %s87, %s90
      %p99 = scmp.eq.s32.totalorder %s18, 7
      %p100 = por %p98, %p99
      %p101 = scmp.ne.s32.totalorder %s90, %s91
      %p102 = scmp.eq.s32.totalorder %s18, 0
      %p103 = por %p101, %p102
      %p104 = scmp.ne.s32.totalorder %s90, %s91
      %p105 = scmp.eq.s32.totalorder %s19, 7
      %p106 = por %p104, %p105
      %p108 = scmp.ne.s32.totalorder %s91, %s107
      %p109 = scmp.eq.s32.totalorder %s19, 0
      %p110 = por %p108, %p109
      %s111 = ssub.s32 %s21, %s28
      %p112 = scmp.eq.s32.totalorder %s111, 0
      %s114 = sadd.s32 %s113, 1
      %s115 = scalar_select %p112, %s113, %s114
      %p118 = pneg %p112
      %p119 = scmp.eq.s32.totalorder %s13, 7
      %p120 = por %p118, %p119
      %p121 = scmp.ne.s32.totalorder %s113, %s116
      %p122 = scmp.eq.s32.totalorder %s13, 0
      %p123 = por %p121, %p122
      %p124 = scmp.ne.s32.totalorder %s113, %s116
      %p125 = scmp.eq.s32.totalorder %s18, 7
      %p126 = por %p124, %p125
      %p127 = scmp.ne.s32.totalorder %s116, %s117
      %p128 = scmp.eq.s32.totalorder %s18, 0
      %p129 = por %p127, %p128
      %p130 = scmp.ne.s32.totalorder %s116, %s117
      %p131 = scmp.eq.s32.totalorder %s19, 7
      %p132 = por %p130, %p131
      %p134 = scmp.ne.s32.totalorder %s117, %s133
      %p135 = scmp.eq.s32.totalorder %s19, 0
      %p136 = por %p134, %p135
      %s138 = sadd.s32 %s137, 1
      %p141 = scmp.eq.s32.totalorder %s13, 7
      %p142 = scmp.ne.s32.totalorder %s137, %s139
      %p143 = scmp.eq.s32.totalorder %s13, 0
      %p144 = por %p142, %p143
      %p145 = scmp.ne.s32.totalorder %s137, %s139
      %p146 = scmp.eq.s32.totalorder %s18, 7
      %p147 = por %p145, %p146
      %p148 = scmp.ne.s32.totalorder %s139, %s140
      %p149 = scmp.eq.s32.totalorder %s18, 0
      %p150 = por %p148, %p149
      %p151 = scmp.ne.s32.totalorder %s139, %s140
      %p152 = scmp.eq.s32.totalorder %s19, 7
      %p153 = por %p151, %p152
      %p155 = scmp.ne.s32.totalorder %s140, %s154
      %p156 = scmp.eq.s32.totalorder %s19, 0
      %p157 = por %p155, %p156
      %s159 = sadd.s32 %s158, 1
      %p162 = scmp.eq.s32.totalorder %s13, 7
      %p163 = scmp.ne.s32.totalorder %s158, %s160
      %p164 = scmp.eq.s32.totalorder %s13, 0
      %p165 = por %p163, %p164
      %p166 = scmp.ne.s32.totalorder %s158, %s160
      %p167 = scmp.eq.s32.totalorder %s18, 7
      %p168 = por %p166, %p167
      %p169 = scmp.ne.s32.totalorder %s160, %s161
      %p170 = scmp.eq.s32.totalorder %s18, 0
      %p171 = por %p169, %p170
      %p172 = scmp.ne.s32.totalorder %s160, %s161
      %p173 = scmp.eq.s32.totalorder %s19, 7
      %p174 = por %p172, %p173
      %p176 = scmp.ne.s32.totalorder %s161, %s175
      %p177 = scmp.eq.s32.totalorder %s19, 0
      %p178 = por %p176, %p177
      %s180 = sadd.s32 %s179, 1
      %p183 = scmp.eq.s32.totalorder %s13, 7
      %p184 = scmp.ne.s32.totalorder %s179, %s181
      %p185 = scmp.eq.s32.totalorder %s13, 0
      %p186 = por %p184, %p185
      %p187 = scmp.ne.s32.totalorder %s179, %s181
      %p188 = scmp.eq.s32.totalorder %s18, 7
      %p189 = por %p187, %p188
      %p190 = scmp.ne.s32.totalorder %s181, %s182
      %p191 = scmp.eq.s32.totalorder %s18, 0
      %p192 = por %p190, %p191
      %p193 = scmp.ne.s32.totalorder %s181, %s182
      %p194 = scmp.eq.s32.totalorder %s19, 7
      %p195 = por %p193, %p194
      %p197 = scmp.ne.s32.totalorder %s182, %s196
      %p198 = scmp.eq.s32.totalorder %s19, 0
      %p199 = por %p197, %p198
      %s200 = ssub.s32 %s20, %s32
      %p201 = scmp.eq.s32.totalorder %s200, 0
      %s203 = sadd.s32 %s202, 1
      %s204 = scalar_select %p201, %s202, %s203
      %p207 = pneg %p201
      %p208 = scmp.eq.s32.totalorder %s13, 7
      %p209 = por %p207, %p208
      %p210 = scmp.ne.s32.totalorder %s202, %s205
      %p211 = scmp.eq.s32.totalorder %s13, 0
      %p212 = por %p210, %p211
      %p213 = scmp.ne.s32.totalorder %s202, %s205
      %p214 = scmp.eq.s32.totalorder %s18, 7
      %p215 = por %p213, %p214
      %p216 = scmp.ne.s32.totalorder %s205, %s206
      %p217 = scmp.eq.s32.totalorder %s18, 0
      %p218 = por %p216, %p217
      %p219 = scmp.ne.s32.totalorder %s205, %s206
      %p220 = scmp.eq.s32.totalorder %s19, 7
      %p221 = por %p219, %p220
      %p223 = scmp.ne.s32.totalorder %s206, %s222
      %p224 = scmp.eq.s32.totalorder %s19, 0
      %p225 = por %p223, %p224
      %p226 = scmp.le.s32.totalorder 1, %s13
      %p227 = scmp.lt.s32.totalorder %s13, 9
      %p228 = pnand %p226, %p227
      %p229 = pneg %p228
      // Predicated region
      $region9: #{transformer_forward.30} parent=5 // pred_check
        _
      $region10: #{transformer_forward.30} parent=5 // pred_check_branch
        %231 = sbr.rel (%p228) target = $region12
      $region11: #{transformer_forward.30} parent=5 // pred_region
        %s232 = ssub.s32 %s13, 1
        // Predicated region
        $region13: #{transformer_forward.30} parent=11 // pred_check
          %p233 = pneg %p51
        $region14: #{transformer_forward.30} parent=11 // pred_check_branch
          %235 = sbr.rel (%p233) target = $region16
        $region15: #{transformer_forward.30} parent=11 // pred_region
          %s236 = smul.u32 2, %s22
          %p237 = scmp.lt.s32.totalorder %s236, 1
          %s238 = scalar_select %p237, %s236, 1
          %s239 = smul.addr %s238, 4
          %s240 = scalar_lea.vmem %s0, %s239
          %s241 = smul.u32 2, %s22
        $region16: #{transformer_forward.30} parent=11 // pred_fallthru
          _
        // Predicated region
        $region17: #{transformer_forward.30} parent=11 // pred_check
          %p242 = pneg %p150
        $region18: #{transformer_forward.30} parent=11 // pred_check_branch
          %244 = sbr.rel (%p242) target = $region20
        $region19: #{transformer_forward.30} parent=11 // pred_region
          _
        $region20: #{transformer_forward.30} parent=11 // pred_fallthru
          _
        // Predicated region
        $region21: #{transformer_forward.30} parent=11 // pred_check
          %p245 = pneg %p171
        $region22: #{transformer_forward.30} parent=11 // pred_check_branch
          %247 = sbr.rel (%p245) target = $region24
        $region23: #{transformer_forward.30} parent=11 // pred_region
          _
        $region24: #{transformer_forward.30} parent=11 // pred_fallthru
          _
        // Predicated region
        $region25: #{transformer_forward.30} parent=11 // pred_check
          %p248 = pneg %p192
        $region26: #{transformer_forward.30} parent=11 // pred_check_branch
          %250 = sbr.rel (%p248) target = $region28
        $region27: #{transformer_forward.30} parent=11 // pred_region
          _
        $region28: #{transformer_forward.30} parent=11 // pred_fallthru
          _
      $region12: #{transformer_forward.30} parent=5 // pred_fallthru
        _
      %p251 = scmp.lt.s32.totalorder %s13, 8
      // Predicated region
      $region29: #{transformer_forward.30} parent=5 // pred_check
        %p252 = pneg %p251
      $region30: #{transformer_forward.30} parent=5 // pred_check_branch
        %254 = sbr.rel (%p252) target = $region32
      $region31: #{transformer_forward.30} parent=5 // pred_region
        // Predicated region
        $region33: #{transformer_forward.30} parent=31 // pred_check
          %p255 = pneg %p71
        $region34: #{transformer_forward.30} parent=31 // pred_check_branch
          %257 = sbr.rel (%p255) target = $region36
        $region35: #{transformer_forward.30} parent=31 // pred_region
          %s258 = sand.u32 %s61, 1
          %s259 = sand.u32 %s61, 1
          %s260 = smul.addr %s259, 32
          %s261 = scalar_lea.vmem [#allocation3], %s260
          %s262 = smul.u32 2, %s21
          %s263 = smul.addr %s262, 4
          %s264 = scalar_lea.vmem %s1, %s263
          // Predicated region
          $region37: #{transformer_forward.30} parent=35 // pred_check
            _
          $region38: #{transformer_forward.30} parent=35 // pred_check_branch
            %266 = sbr.rel (0) target = $region40
          $region39: #{transformer_forward.30} parent=35 // pred_region
            // Predicated region
            $region41: #{transformer_forward.30} parent=39 // pred_check
              _
            $region42: #{transformer_forward.30} parent=39 // pred_check_branch
              %268 = sbr.rel (0) target = $region44
            $region43: #{transformer_forward.30} parent=39 // pred_region
              // Predicated region
              $region56: #{transformer_forward.30} parent=43 // pred_check
                _
              $region57: #{transformer_forward.30} parent=43 // pred_check_branch
                %289 = sbr.rel (0) target = $region59
              $region58: #{transformer_forward.30} parent=43 // pred_region
                loop: start=0, step=1, limit=1
                $region60: #{transformer_forward.30} parent=58 // loop_pre_header
                  _
                $region61: #{transformer_forward.30} parent=58 // loop_header
                  %s291 = sphi 0, %s295
                  %p292 = scmp.ge.s32.totalorder %s291, 1
                  %s296 = sphi %s264, %s264
                  %s297 = sphi %s261, %s261
                $region62: #{transformer_forward.30} parent=58 // loop_header_branch
                  %294 = sbr.rel (%p292) target = $region66
                $region63: #{transformer_forward.30} parent=58 // loop_body
                  %v298 = vld [vmem:[%s296] sm:$0xff]
                  %299 = vst [vmem:[%s297] sm:$0xff] %v298
                  %v300 = vld [vmem:[%s296 + $0x40] sm:$0xff]
                  %301 = vst [vmem:[%s297 + $0x8] sm:$0xff] %v300
                  %v302 = vld [vmem:[%s296 + $0x80] sm:$0xff]
                  %303 = vst [vmem:[%s297 + $0x10] sm:$0xff] %v302
                  %v304 = vld [vmem:[%s296 + $0xc0] sm:$0xff]
                  %305 = vst [vmem:[%s297 + $0x18] sm:$0xff] %v304
                $region64: #{transformer_forward.30} parent=58 // loop_footer
                  %s295 = sadd.s32 1, %s291
                $region65: #{transformer_forward.30} parent=58 // loop_footer_branch
                  %290 = sbr.rel target = $region61
                $region66: #{transformer_forward.30} parent=58 // loop_exit
                  _
              $region59: #{transformer_forward.30} parent=43 // pred_fallthru
                _
              // Predicated region
              $region67: #{transformer_forward.30} parent=43 // pred_check
                _
              $region68: #{transformer_forward.30} parent=43 // pred_check_branch
                %307 = sbr.rel target = $region70
              $region69: #{transformer_forward.30} parent=43 // pred_region
                _
              $region70: #{transformer_forward.30} parent=43 // pred_fallthru
                _
            $region44: #{transformer_forward.30} parent=39 // pred_fallthru
              _
            // Predicated region
            $region45: #{transformer_forward.30} parent=39 // pred_check
              _
            $region46: #{transformer_forward.30} parent=39 // pred_check_branch
              %270 = sbr.rel target = $region48
            $region47: #{transformer_forward.30} parent=39 // pred_region
              loop: start=0, step=1, limit=1
              $region49: #{transformer_forward.30} parent=47 // loop_pre_header
                _
              $region50: #{transformer_forward.30} parent=47 // loop_header
                %s273 = sphi 0, %s277
                %p274 = scmp.ge.s32.totalorder %s273, 1
                %s278 = sphi %s264, %s264
                %s279 = sphi %s261, %s261
              $region51: #{transformer_forward.30} parent=47 // loop_header_branch
                %276 = sbr.rel (%p274) target = $region55
              $region52: #{transformer_forward.30} parent=47 // loop_body
                %v280 = vld [vmem:[%s278] sm:$0xff]
                %281 = vst [vmem:[%s279] sm:$0xff] %v280
                %v282 = vld [vmem:[%s278 + $0x40] sm:$0xff]
                %283 = vst [vmem:[%s279 + $0x8] sm:$0xff] %v282
                %v284 = vld [vmem:[%s278 + $0x80] sm:$0xff]
                %285 = vst [vmem:[%s279 + $0x10] sm:$0xff] %v284
                %v286 = vld [vmem:[%s278 + $0xc0] sm:$0xff]
                %287 = vst [vmem:[%s279 + $0x18] sm:$0xff] %v286
              $region53: #{transformer_forward.30} parent=47 // loop_footer
                %s277 = sadd.s32 1, %s273
              $region54: #{transformer_forward.30} parent=47 // loop_footer_branch
                %272 = sbr.rel target = $region50
              $region55: #{transformer_forward.30} parent=47 // loop_exit
                _
            $region48: #{transformer_forward.30} parent=39 // pred_fallthru
              _
          $region40: #{transformer_forward.30} parent=35 // pred_fallthru
            _
          %308 = vnop
        $region36: #{transformer_forward.30} parent=31 // pred_fallthru
          _
        // Predicated region
        $region71: #{transformer_forward.30} parent=31 // pred_check
          %p309 = pneg %p97
        $region72: #{transformer_forward.30} parent=31 // pred_check_branch
          %311 = sbr.rel (%p309) target = $region74
        $region73: #{transformer_forward.30} parent=31 // pred_region
          %s312 = smul.u32 2, %s21
          %p313 = scmp.lt.s32.totalorder %s312, 15
          %s314 = scalar_select %p313, %s312, 15
          %s315 = scalar_lea.vmem %s2, %s314
          %s316 = smul.u32 2, %s21
        $region74: #{transformer_forward.30} parent=31 // pred_fallthru
          _
        // Predicated region
        $region75: #{transformer_forward.30} parent=31 // pred_check
          %p317 = pneg %p123
        $region76: #{transformer_forward.30} parent=31 // pred_check_branch
          %319 = sbr.rel (%p317) target = $region78
        $region77: #{transformer_forward.30} parent=31 // pred_region
          %s320 = smul.u32 32, %s21
          %p321 = scmp.lt.s32.totalorder %s320, 255
          %s322 = scalar_select %p321, %s320, 255
          %s323 = smul.addr %s322, 4
          %s324 = scalar_lea.vmem %s3, %s323
          %s325 = smul.u32 32, %s21
        $region78: #{transformer_forward.30} parent=31 // pred_fallthru
          _
      $region32: #{transformer_forward.30} parent=5 // pred_fallthru
        _
      %p326 = scmp.le.s32.totalorder 1, %s13
      %p327 = scmp.lt.s32.totalorder %s13, 9
      %p328 = pnand %p326, %p327
      %p329 = pneg %p328
      // Predicated region
      $region79: #{transformer_forward.30} parent=5 // pred_check
        _
      $region80: #{transformer_forward.30} parent=5 // pred_check_branch
        %331 = sbr.rel (%p328) target = $region82
      $region81: #{transformer_forward.30} parent=5 // pred_region
        %s332 = ssub.s32 %s13, 1
        %s333 = sand.u32 %s64, 1
        %s334 = sand.u32 %s64, 1
        %s335 = smul.addr %s334, 32
        %s336 = scalar_lea.vmem [#allocation3], %s335
        // Predicated region
        $region83: #{transformer_forward.30} parent=81 // pred_check
          %p337 = pneg %p77
        $region84: #{transformer_forward.30} parent=81 // pred_check_branch
          %339 = sbr.rel (%p337) target = $region86
        $region85: #{transformer_forward.30} parent=81 // pred_region
          _
        $region86: #{transformer_forward.30} parent=81 // pred_fallthru
          _
        %s340 = smul.u32 2, %s22
        %p341 = scmp.lt.s32.totalorder %s340, 1
        %s342 = scalar_select %p341, %s340, 1
        %s343 = smul.addr %s342, 4
        %s344 = scalar_lea.vmem %s0, %s343
        %p345 = pneg %p51
        %p346 = pneg %p48
        %s347 = sand.u32 %s64, 1
        %s348 = sand.u32 %s64, 1
        %s349 = smul.addr %s348, 32
        %s350 = scalar_lea.vmem [#allocation3], %s349
        %p351 = pneg %p77
        %p352 = pneg %p74
        %s353 = smul.u32 2, %s23
        %p354 = scmp.lt.s32.totalorder %s353, 15
        %s355 = scalar_select %p354, %s353, 15
        %s356 = scalar_lea.vmem %s2, %s355
        %p357 = pneg %p103
        %p358 = pneg %p100
        %s359 = smul.u32 32, %s23
        %p360 = scmp.lt.s32.totalorder %s359, 255
        %s361 = scalar_select %p360, %s359, 255
        %s362 = smul.addr %s361, 4
        %s363 = scalar_lea.vmem %s3, %s362
        %p364 = pneg %p129
        %p365 = pneg %p126
        %p366 = pneg %p150
        %p367 = pneg %p147
        %p368 = pneg %p171
        %p369 = pneg %p168
        %p370 = pneg %p192
        %p371 = pneg %p189
        %p372 = pneg %p218
        %p373 = pneg %p215
        %s374 = smul.u32 2, %s22
        %p375 = scmp.lt.s32.totalorder %s374, 1
        %s376 = scalar_select %p375, %s374, 1
        %s377 = smul.addr %s376, 4
        %s378 = scalar_lea.vmem %s7, %s377
        %s379 = smul.u32 2, %s22
        %p380 = scmp.lt.s32.totalorder %s379, 1
        %s381 = scalar_select %p380, %s379, 1
        %s382 = smul.addr %s381, 4
        %s383 = scalar_lea.vmem %s0, %s382
        %s384 = smul.u32 2, %s22
        %s385 = smul.u32 2, %s23
        %s386 = smul.u32 2, %s23
        %p387 = scmp.lt.s32.totalorder %s386, 15
        %s388 = scalar_select %p387, %s386, 15
        %s389 = scalar_lea.vmem %s2, %s388
        %s390 = smul.u32 2, %s23
        %s391 = smul.u32 32, %s23
        %p392 = scmp.lt.s32.totalorder %s391, 255
        %s393 = scalar_select %p392, %s391, 255
        %s394 = smul.addr %s393, 4
        %s395 = scalar_lea.vmem %s3, %s394
        %s396 = smul.u32 32, %s23
        %s397 = smul.u32 2, %s22
        %p398 = scmp.lt.s32.totalorder %s397, 1
        %s399 = scalar_select %p398, %s397, 1
        %s400 = smul.addr %s399, 4
        %s401 = scalar_lea.vmem %s7, %s400
        %s402 = smul.u32 2, %s22
        %p404 = scmp.eq.s32.totalorder %s23, 0
        // Predicated region
        $region87: #{transformer_forward.30} parent=81 // pred_check
          %p405 = pneg %p404
        $region88: #{transformer_forward.30} parent=81 // pred_check_branch
          %407 = sbr.rel (%p405) target = $region90
        $region89: #{transformer_forward.30} parent=81 // pred_region
          %vm408 = vcmask 261120
          %409 = vst.msk [vmem:[#allocation2] sm:$0xff] %vm408, 0.0
          %410 = vst.msk [vmem:[#allocation2 + $0x8] sm:$0xff] %vm408, 0.0
        $region90: #{transformer_forward.30} parent=81 // pred_fallthru
          _
        %v411 = vld [vmem:[%s383] sm:$0xf]
        %v412 = vld [vmem:[%s383 + $0x4] sm:$0xf]
        %v413 = vld [vmem:[%s336] sm:$0xff]
        %v414 = vld [vmem:[%s336 + $0x8] sm:$0xff]
        %v415 = vld [vmem:[%s336 + $0x10] sm:$0xff]
        %v416 = vld [vmem:[%s336 + $0x18] sm:$0xff]
        %v417 = vld [vmem:[%s389] sm:$0x3]
        %v419 = vlaneseq
        %v420 = vshrl.u32 %v419, 7
        %v421 = vsub.s32 0, %v420
        %v422 = vrot.slane %v417, %v421
        %v423 = vlaneseq
        %v424 = vshrl.u32 %v423, 7
        %v425 = vsub.s32 1, %v424
        %v426 = vrot.slane %v417, %v425
        %v431 = vunpack.c.l.b16 %v411
        %v432 = vunpack.c.l.b16 %v412
        %v433 = vpack.c.b16 %v432, %v431
        %v438 = vunpack.c.l.b16 %v413
        %v439 = vunpack.c.h.b16 %v413
        %v440 = vunpack.c.l.b16 %v414
        %v441 = vunpack.c.h.b16 %v414
        %v442 = vunpack.c.l.b16 %v415
        %v443 = vunpack.c.h.b16 %v415
        %v444 = vunpack.c.l.b16 %v416
        %v445 = vunpack.c.h.b16 %v416
        %v446 = vpack.c.b16 %v440, %v438
        %v447 = vpack.c.b16 %v441, %v439
        %v448 = vpack.c.b16 %v444, %v442
        %v449 = vpack.c.b16 %v445, %v443
        %vm454 = vcmask 261120
        %v456 = vsel %vm454, %v433, 0
        %458 = vmatprep.subr.bf16.mxu0 %v447
        %459 = vmatpush1.bf16.msra.mxu0 %v446
        %460 = vmatprep.subr.bf16.mxu0 %v449
        %461 = vmatpush1.bf16.msra.mxu0 %v448
        %462 = vmatprep.subr.bf16.mxu0 0
        %463 = vmatpush1.bf16.msra.mxu0 0
        %464 = vmatprep.subr.bf16.mxu0 0
        %465 = vmatpush1.bf16.msra.mxu0 0
        %466 = vmatprep.subr.bf16.mxu0 0
        %467 = vmatpush1.bf16.msra.mxu0 0
        %468 = vmatprep.subr.bf16.mxu0 0
        %469 = vmatpush1.bf16.msra.mxu0 0
        %470 = vmatprep.subr.bf16.mxu0 0
        %471 = vmatpush1.bf16.msra.mxu0 0
        %472 = vmatprep.subr.bf16.mxu0 0
        %473 = vmatpush1.bf16.msra.mxu0 0
        %474 = vmatprep.subr.bf16.mxu0 0
        %475 = vmatpush1.bf16.msra.mxu0 0
        %476 = vmatprep.subr.bf16.mxu0 0
        %477 = vmatpush1.bf16.msra.mxu0 0
        %478 = vmatprep.subr.bf16.mxu0 0
        %479 = vmatpush1.bf16.msra.mxu0 0
        %480 = vmatprep.subr.bf16.mxu0 0
        %481 = vmatpush1.bf16.msra.mxu0 0
        %482 = vmatprep.subr.bf16.mxu0 0
        %483 = vmatpush1.bf16.msra.mxu0 0
        %484 = vmatprep.subr.bf16.mxu0 0
        %485 = vmatpush1.bf16.msra.mxu0 0
        %486 = vmatprep.subr.bf16.mxu0 0
        %487 = vmatpush1.bf16.msra.mxu0 0
        %488 = vmatprep.subr.bf16.mxu0 0
        %489 = vmatpush1.bf16.msra.mxu0 0
        %490 = vmatprep.mubr.bf16.mxu0 0
        %491 = vmatmul.mubr.bf16.gmra.mrb[0].mxu0 %v456
        %v492 = vpop.f32.mrb[0].mxu0
        %v493 = vadd.f32 %v422, %v492
        %v494 = vpop.f32.mrb[0].mxu0
        %v495 = vadd.f32 %v426, %v494
        %v496 = vpop.f32.mrb[0].mxu0
        %v497 = vadd.f32 %v422, %v496
        %v498 = vpop.f32.mrb[0].mxu0
        %v499 = vadd.f32 %v426, %v498
        %500 = vdwg.mxu0
        %v501 = vmax.f32 %v493, 0.0
        %v502 = vmax.f32 %v495, 0.0
        %v503 = vmax.f32 %v497, 0.0
        %v504 = vmax.f32 %v499, 0.0
        %v505 = vpack.c.bf16 %v503, %v501
        %v506 = vpack.c.bf16 %v504, %v502
        %v507 = vld [vmem:[#allocation2] sm:$0xff]
        %v508 = vld [vmem:[#allocation2 + $0x8] sm:$0xff]
        %v509 = vld [vmem:[%s395] sm:$0xf]
        %v510 = vld [vmem:[%s395 + $0x4] sm:$0xf]
        %v511 = vld [vmem:[%s395 + $0x8] sm:$0xf]
        %v512 = vld [vmem:[%s395 + $0xc] sm:$0xf]
        %v513 = vld [vmem:[%s395 + $0x10] sm:$0xf]
        %v514 = vld [vmem:[%s395 + $0x14] sm:$0xf]
        %v515 = vld [vmem:[%s395 + $0x18] sm:$0xf]
        %v516 = vld [vmem:[%s395 + $0x1c] sm:$0xf]
        %v517 = vld [vmem:[%s395 + $0x20] sm:$0xf]
        %v518 = vld [vmem:[%s395 + $0x24] sm:$0xf]
        %v519 = vld [vmem:[%s395 + $0x28] sm:$0xf]
        %v520 = vld [vmem:[%s395 + $0x2c] sm:$0xf]
        %v521 = vld [vmem:[%s395 + $0x30] sm:$0xf]
        %v522 = vld [vmem:[%s395 + $0x34] sm:$0xf]
        %v523 = vld [vmem:[%s395 + $0x38] sm:$0xf]
        %v524 = vld [vmem:[%s395 + $0x3c] sm:$0xf]
        %v525 = vld [vmem:[%s395 + $0x40] sm:$0xf]
        %v526 = vld [vmem:[%s395 + $0x44] sm:$0xf]
        %v527 = vld [vmem:[%s395 + $0x48] sm:$0xf]
        %v528 = vld [vmem:[%s395 + $0x4c] sm:$0xf]
        %v529 = vld [vmem:[%s395 + $0x50] sm:$0xf]
        %v530 = vld [vmem:[%s395 + $0x54] sm:$0xf]
        %v531 = vld [vmem:[%s395 + $0x58] sm:$0xf]
        %v532 = vld [vmem:[%s395 + $0x5c] sm:$0xf]
        %v533 = vld [vmem:[%s395 + $0x60] sm:$0xf]
        %v534 = vld [vmem:[%s395 + $0x64] sm:$0xf]
        %v535 = vld [vmem:[%s395 + $0x68] sm:$0xf]
        %v536 = vld [vmem:[%s395 + $0x6c] sm:$0xf]
        %v537 = vld [vmem:[%s395 + $0x70] sm:$0xf]
        %v538 = vld [vmem:[%s395 + $0x74] sm:$0xf]
        %v539 = vld [vmem:[%s395 + $0x78] sm:$0xf]
        %v540 = vld [vmem:[%s395 + $0x7c] sm:$0xf]
        %v573 = vunpack.c.l.b16 %v509
        %v574 = vunpack.c.l.b16 %v510
        %v575 = vunpack.c.l.b16 %v511
        %v576 = vunpack.c.l.b16 %v512
        %v577 = vunpack.c.l.b16 %v513
        %v578 = vunpack.c.l.b16 %v514
        %v579 = vunpack.c.l.b16 %v515
        %v580 = vunpack.c.l.b16 %v516
        %v581 = vunpack.c.l.b16 %v517
        %v582 = vunpack.c.l.b16 %v518
        %v583 = vunpack.c.l.b16 %v519
        %v584 = vunpack.c.l.b16 %v520
        %v585 = vunpack.c.l.b16 %v521
        %v586 = vunpack.c.l.b16 %v522
        %v587 = vunpack.c.l.b16 %v523
        %v588 = vunpack.c.l.b16 %v524
        %v589 = vunpack.c.l.b16 %v525
        %v590 = vunpack.c.l.b16 %v526
        %v591 = vunpack.c.l.b16 %v527
        %v592 = vunpack.c.l.b16 %v528
        %v593 = vunpack.c.l.b16 %v529
        %v594 = vunpack.c.l.b16 %v530
        %v595 = vunpack.c.l.b16 %v531
        %v596 = vunpack.c.l.b16 %v532
        %v597 = vunpack.c.l.b16 %v533
        %v598 = vunpack.c.l.b16 %v534
        %v599 = vunpack.c.l.b16 %v535
        %v600 = vunpack.c.l.b16 %v536
        %v601 = vunpack.c.l.b16 %v537
        %v602 = vunpack.c.l.b16 %v538
        %v603 = vunpack.c.l.b16 %v539
        %v604 = vunpack.c.l.b16 %v540
        %v605 = vpack.c.b16 %v574, %v573
        %v606 = vpack.c.b16 %v576, %v575
        %v607 = vpack.c.b16 %v578, %v577
        %v608 = vpack.c.b16 %v580, %v579
        %v609 = vpack.c.b16 %v582, %v581
        %v610 = vpack.c.b16 %v584, %v583
        %v611 = vpack.c.b16 %v586, %v585
        %v612 = vpack.c.b16 %v588, %v587
        %v613 = vpack.c.b16 %v590, %v589
        %v614 = vpack.c.b16 %v592, %v591
        %v615 = vpack.c.b16 %v594, %v593
        %v616 = vpack.c.b16 %v596, %v595
        %v617 = vpack.c.b16 %v598, %v597
        %v618 = vpack.c.b16 %v600, %v599
        %v619 = vpack.c.b16 %v602, %v601
        %v620 = vpack.c.b16 %v604, %v603
        %637 = vmatprep.subr.bf16.mxu0 0
        %638 = vmatpush1.bf16.msra.mxu0 %v605
        %639 = vmatprep.subr.bf16.mxu0 0
        %640 = vmatpush1.bf16.msra.mxu0 %v606
        %641 = vmatprep.subr.bf16.mxu0 0
        %642 = vmatpush1.bf16.msra.mxu0 %v607
        %643 = vmatprep.subr.bf16.mxu0 0
        %644 = vmatpush1.bf16.msra.mxu0 %v608
        %645 = vmatprep.subr.bf16.mxu0 0
        %646 = vmatpush1.bf16.msra.mxu0 %v609
        %647 = vmatprep.subr.bf16.mxu0 0
        %648 = vmatpush1.bf16.msra.mxu0 %v610
        %649 = vmatprep.subr.bf16.mxu0 0
        %650 = vmatpush1.bf16.msra.mxu0 %v611
        %651 = vmatprep.subr.bf16.mxu0 0
        %652 = vmatpush1.bf16.msra.mxu0 %v612
        %653 = vmatprep.subr.bf16.mxu0 0
        %654 = vmatpush1.bf16.msra.mxu0 %v613
        %655 = vmatprep.subr.bf16.mxu0 0
        %656 = vmatpush1.bf16.msra.mxu0 %v614
        %657 = vmatprep.subr.bf16.mxu0 0
        %658 = vmatpush1.bf16.msra.mxu0 %v615
        %659 = vmatprep.subr.bf16.mxu0 0
        %660 = vmatpush1.bf16.msra.mxu0 %v616
        %661 = vmatprep.subr.bf16.mxu0 0
        %662 = vmatpush1.bf16.msra.mxu0 %v617
        %663 = vmatprep.subr.bf16.mxu0 0
        %664 = vmatpush1.bf16.msra.mxu0 %v618
        %665 = vmatprep.subr.bf16.mxu0 0
        %666 = vmatpush1.bf16.msra.mxu0 %v619
        %667 = vmatprep.subr.bf16.mxu0 0
        %668 = vmatpush1.bf16.msra.mxu0 %v620
        %669 = vmatprep.mubr.bf16.mxu0 %v506
        %670 = vmatmul.mubr.bf16.gmra.mrb[0].mxu0 %v505
        %v671 = vpop.f32.mrb[0].mxu0
        %v672 = vadd.f32 0.0, %v671
        %v673 = vpop.f32.mrb[0].mxu0
        %v674 = vpop.f32.mrb[0].mxu0
        %v675 = vadd.f32 0.0, %v674
        %v676 = vpop.f32.mrb[0].mxu0
        %677 = vdwg.mxu0
        %v678 = vadd.f32 %v507, %v672
        %v679 = vadd.f32 %v508, %v675
        %680 = vst.msk [vmem:[#allocation2] sm:$0xff] %vm454, %v678
        %681 = vst.msk [vmem:[#allocation2 + $0x8] sm:$0xff] %vm454, %v679
        %p682 = scmp.eq.s32.totalorder %s23, 7
        // Predicated region
        $region91: #{transformer_forward.30} parent=81 // pred_check
          %p683 = pneg %p682
        $region92: #{transformer_forward.30} parent=81 // pred_check_branch
          %685 = sbr.rel (%p683) target = $region94
        $region93: #{transformer_forward.30} parent=81 // pred_region
          %v686 = vld [vmem:[#allocation2] sm:$0xff]
          %v687 = vld [vmem:[#allocation2 + $0x8] sm:$0xff]
          %v688 = vld [vmem:[%s4] sm:$0x1]
          %v690 = vlaneseq
          %v691 = vshrl.u32 %v690, 7
          %v692 = vsub.s32 0, %v691
          %v693 = vrot.slane %v688, %v692
          %v695 = vadd.f32 %v686, %v693
          %v696 = vadd.f32 %v687, %v693
          %v697 = vld [vmem:[%s383] sm:$0xf]
          %v698 = vld [vmem:[%s383 + $0x4] sm:$0xf]
          %v699 = vunpack.c.l.bf16 %v697
          %v700 = vunpack.c.l.bf16 %v698
          %v701 = vadd.f32 %v695, %v699
          %v702 = vadd.f32 %v696, %v700
          %v703 = vsel %vm454, %v701, 0.0
          %704 = vadd.xlane.f32.xlu0 %v703
          %v705 = vpop.xlane.xlu0 %704
          %v706 = vsel %vm454, %v702, 0.0
          %707 = vadd.xlane.f32.xlu0 %v706
          %v708 = vpop.xlane.xlu0 %707
          %v709 = vrcp.pop 32.0
          %v710 = vmul.f32 %v705, %v709
          %v711 = vmul.f32 %v708, %v709
          %v712 = vsub.f32 %v701, %v710
          %v713 = vsub.f32 %v702, %v711
          %v714 = vmul.f32 %v712, %v712
          %v715 = vmul.f32 %v713, %v713
          %v716 = vsel %vm454, %v714, 0.0
          %717 = vadd.xlane.f32.xlu0 %v716
          %v718 = vpop.xlane.xlu0 %717
          %v719 = vsel %vm454, %v715, 0.0
          %720 = vadd.xlane.f32.xlu0 %v719
          %v721 = vpop.xlane.xlu0 %720
          %v722 = vmul.f32 %v718, %v709
          %v723 = vmul.f32 %v721, %v709
          %v724 = vadd.f32 %v722, 1e-05
          %v725 = vadd.f32 %v723, 1e-05
          %v726 = vrsqrt.pop %v724
          %v727 = vrsqrt.pop %v725
          %v728 = vmul.f32 %v712, %v726
          %v729 = vmul.f32 %v713, %v727
          %v730 = vld [vmem:[%s5] sm:$0x1]
          %v732 = vlaneseq
          %v733 = vshrl.u32 %v732, 7
          %v734 = vsub.s32 0, %v733
          %v735 = vrot.slane %v730, %v734
          %v737 = vmul.f32 %v728, %v735
          %v738 = vmul.f32 %v729, %v735
          %v739 = vld [vmem:[%s6] sm:$0x1]
          %v741 = vlaneseq
          %v742 = vshrl.u32 %v741, 7
          %v743 = vsub.s32 0, %v742
          %v744 = vrot.slane %v739, %v743
          %v746 = vadd.f32 %v737, %v744
          %v747 = vadd.f32 %v738, %v744
          %v748 = vpack.c.bf16 %v747, %v746
          %v750 = vunpack.c.l.b16 %v748
          %v751 = vunpack.c.h.b16 %v748
          %v752 = vpack.c.b16 %v750, %v750
          %v753 = vpack.c.b16 %v751, %v751
          %vm756 = vcmask 257024
          %757 = vst.msk [vmem:[%s401] sm:$0xf] %vm756, %v752
          %758 = vst.msk [vmem:[%s401 + $0x4] sm:$0xf] %vm756, %v753
        $region94: #{transformer_forward.30} parent=81 // pred_fallthru
          _
        %s759 = smul.u32 2, %s22
        %p760 = scmp.lt.s32.totalorder %s759, 1
        %s761 = scalar_select %p760, %s759, 1
        %s762 = smul.addr %s761, 4
        %s763 = scalar_lea.vmem %s7, %s762
        // Predicated region
        $region95: #{transformer_forward.30} parent=81 // pred_check
          %p764 = pneg %p215
        $region96: #{transformer_forward.30} parent=81 // pred_check_branch
          %766 = sbr.rel (%p764) target = $region98
        $region97: #{transformer_forward.30} parent=81 // pred_region
          %s767 = smul.u32 2, %s22
        $region98: #{transformer_forward.30} parent=81 // pred_fallthru
          _
        // Predicated region
        $region99: #{transformer_forward.30} parent=81 // pred_check
          %p768 = pneg %p215
        $region100: #{transformer_forward.30} parent=81 // pred_check_branch
          %770 = sbr.rel (%p768) target = $region102
        $region101: #{transformer_forward.30} parent=81 // pred_region
          %s771 = smul.u32 2, %s22
          %p772 = scmp.lt.s32.totalorder %s771, 1
          %s773 = scalar_select %p772, %s771, 1
          %s774 = smul.addr %s773, 4
          %s775 = scalar_lea.vmem %s7, %s774
        $region102: #{transformer_forward.30} parent=81 // pred_fallthru
          _
      $region82: #{transformer_forward.30} parent=5 // pred_fallthru
        _
      %p776 = scmp.le.s32.totalorder 2, %s13
      // Predicated region
      $region103: #{transformer_forward.30} parent=5 // pred_check
        %p777 = pneg %p776
      $region104: #{transformer_forward.30} parent=5 // pred_check_branch
        %779 = sbr.rel (%p777) target = $region106
      $region105: #{transformer_forward.30} parent=5 // pred_region
        %s780 = ssub.s32 %s13, 2
      $region106: #{transformer_forward.30} parent=5 // pred_fallthru
        _
    $region6: #{transformer_forward.30} parent=1 // loop_footer
      %s17 = sadd.s32 1, %s13
    $region7: #{transformer_forward.30} parent=1 // loop_footer_branch
      %12 = sbr.rel target = $region3
    $region8: #{transformer_forward.30} parent=1 // loop_exit
      _

// kernel: transformer_forward.39
$region0: #{transformer_forward.39}
  #allocation0 [shape = 'u32[]', space=smem, size = 0x4, offset = 0x4, fixed_abs, tag = 'smem constant byte address 0x4 - core index']
  #allocation1 [shape = 'u32[144,128]{1,0:T(1,128)}', space=vmem, size = 0x12000, scoped, tag = 'internal scratch']
  #allocation2 [shape = 'f32[16,32]{1,0:T(8,128)}', space=vmem, size = 0x2000, scoped, tag = 'scratch operand']
  %s0 = inlined_call_operand.vmem [shape: bf16[16,32], index: 0, kind: input, shape index: {}]
  %s1 = inlined_call_operand.vmem [shape: bf16[32,32], index: 1, kind: input, shape index: {}]
  %s2 = inlined_call_operand.vmem [shape: f32[1,32], index: 2, kind: input, shape index: {}]
  %s3 = inlined_call_operand.vmem [shape: bf16[16,32], index: 3, kind: output, shape index: {}]
  %s4 = sld [smem:[#allocation0]]
  $region30: #{transformer_forward.39} parent=0
    _
  %s6 = ssub.s32 1, %s4
  %s7 = scalar_select 0, %s6, %s4
  // Predicated region
  $region2: #{transformer_forward.39} parent=0 // pred_check
    _
  $region3: #{transformer_forward.39} parent=0 // pred_check_branch
    %9 = sbr.rel (0) target = $region5
  $region4: #{transformer_forward.39} parent=0 // pred_region
    _
  $region5: #{transformer_forward.39} parent=0 // pred_fallthru
    _
  // Predicated region
  $region6: #{transformer_forward.39} parent=0 // pred_check
    _
  $region7: #{transformer_forward.39} parent=0 // pred_check_branch
    %11 = sbr.rel (0) target = $region9
  $region8: #{transformer_forward.39} parent=0 // pred_region
    _
  $region9: #{transformer_forward.39} parent=0 // pred_fallthru
    _
  // Predicated region
  $region10: #{transformer_forward.39} parent=0 // pred_check
    _
  $region11: #{transformer_forward.39} parent=0 // pred_check_branch
    %13 = sbr.rel (0) target = $region13
  $region12: #{transformer_forward.39} parent=0 // pred_region
    _
  $region13: #{transformer_forward.39} parent=0 // pred_fallthru
    _
  %p15 = scmp.eq.s32.totalorder 0, 0
  // Predicated region
  $region14: #{transformer_forward.39} parent=0 // pred_check
    %p16 = pneg %p15
  $region15: #{transformer_forward.39} parent=0 // pred_check_branch
    %18 = sbr.rel (%p16) target = $region17
  $region16: #{transformer_forward.39} parent=0 // pred_region
    %vm19 = vcmask 261120
    %20 = vst.msk [vmem:[#allocation2] sm:$0xff] %vm19, 0.0
    %21 = vst.msk [vmem:[#allocation2 + $0x8] sm:$0xff] %vm19, 0.0
  $region17: #{transformer_forward.39} parent=0 // pred_fallthru
    _
  %v22 = vld [vmem:[#allocation2] sm:$0xff]
  %v23 = vld [vmem:[#allocation2 + $0x8] sm:$0xff]
  %v24 = vld [vmem:[%s0] sm:$0xf]
  %v25 = vld [vmem:[%s0 + $0x4] sm:$0xf]
  %v26 = vld [vmem:[%s1] sm:$0xf]
  %v27 = vld [vmem:[%s1 + $0x4] sm:$0xf]
  %v28 = vld [vmem:[%s1 + $0x8] sm:$0xf]
  %v29 = vld [vmem:[%s1 + $0xc] sm:$0xf]
  %v32 = vunpack.c.l.b16 %v24
  %v33 = vunpack.c.l.b16 %v25
  %v34 = vpack.c.b16 %v33, %v32
  %v39 = vunpack.c.l.b16 %v26
  %v40 = vunpack.c.l.b16 %v27
  %v41 = vunpack.c.l.b16 %v28
  %v42 = vunpack.c.l.b16 %v29
  %v43 = vpack.c.b16 %v40, %v39
  %v44 = vpack.c.b16 %v42, %v41
  %vm47 = vcmask 261120
  %v49 = vsel %vm47, %v34, 0
  %51 = vmatprep.subr.bf16.mxu0 0
  %52 = vmatpush1.bf16.msra.mxu0 %v43
  %53 = vmatprep.subr.bf16.mxu0 0
  %54 = vmatpush1.bf16.msra.mxu0 %v44
  %55 = vmatprep.subr.bf16.mxu0 0
  %56 = vmatpush1.bf16.msra.mxu0 0
  %57 = vmatprep.subr.bf16.mxu0 0
  %58 = vmatpush1.bf16.msra.mxu0 0
  %59 = vmatprep.subr.bf16.mxu0 0
  %60 = vmatpush1.bf16.msra.mxu0 0
  %61 = vmatprep.subr.bf16.mxu0 0
  %62 = vmatpush1.bf16.msra.mxu0 0
  %63 = vmatprep.subr.bf16.mxu0 0
  %64 = vmatpush1.bf16.msra.mxu0 0
  %65 = vmatprep.subr.bf16.mxu0 0
  %66 = vmatpush1.bf16.msra.mxu0 0
  %67 = vmatprep.subr.bf16.mxu0 0
  %68 = vmatpush1.bf16.msra.mxu0 0
  %69 = vmatprep.subr.bf16.mxu0 0
  %70 = vmatpush1.bf16.msra.mxu0 0
  %71 = vmatprep.subr.bf16.mxu0 0
  %72 = vmatpush1.bf16.msra.mxu0 0
  %73 = vmatprep.subr.bf16.mxu0 0
  %74 = vmatpush1.bf16.msra.mxu0 0
  %75 = vmatprep.subr.bf16.mxu0 0
  %76 = vmatpush1.bf16.msra.mxu0 0
  %77 = vmatprep.subr.bf16.mxu0 0
  %78 = vmatpush1.bf16.msra.mxu0 0
  %79 = vmatprep.subr.bf16.mxu0 0
  %80 = vmatpush1.bf16.msra.mxu0 0
  %81 = vmatprep.subr.bf16.mxu0 0
  %82 = vmatpush1.bf16.msra.mxu0 0
  %83 = vmatprep.mubr.bf16.mxu0 0
  %84 = vmatmul.mubr.bf16.gmra.mrb[0].mxu0 %v49
  %v85 = vpop.f32.mrb[0].mxu0
  %v86 = vadd.f32 0.0, %v85
  %v87 = vpop.f32.mrb[0].mxu0
  %v88 = vpop.f32.mrb[0].mxu0
  %v89 = vadd.f32 0.0, %v88
  %v90 = vpop.f32.mrb[0].mxu0
  %91 = vdwg.mxu0
  %v92 = vadd.f32 %v22, %v86
  %v93 = vadd.f32 %v23, %v89
  %94 = vst.msk [vmem:[#allocation2] sm:$0xff] %vm47, %v92
  %95 = vst.msk [vmem:[#allocation2 + $0x8] sm:$0xff] %vm47, %v93
  // Predicated region
  $region18: #{transformer_forward.39} parent=0 // pred_check
    %p96 = pneg %p15
  $region19: #{transformer_forward.39} parent=0 // pred_check_branch
    %98 = sbr.rel (%p96) target = $region21
  $region20: #{transformer_forward.39} parent=0 // pred_region
    %v99 = vld [vmem:[#allocation2] sm:$0xff]
    %v100 = vld [vmem:[#allocation2 + $0x8] sm:$0xff]
    %v101 = vld [vmem:[%s2] sm:$0x1]
    %v103 = vlaneseq
    %v104 = vshrl.u32 %v103, 7
    %v105 = vsub.s32 0, %v104
    %v106 = vrot.slane %v101, %v105
    %v108 = vadd.f32 %v99, %v106
    %v109 = vadd.f32 %v100, %v106
    %v110 = vpack.c.bf16 %v109, %v108
    %v112 = vunpack.c.l.b16 %v110
    %v113 = vunpack.c.h.b16 %v110
    %v114 = vpack.c.b16 %v112, %v112
    %v115 = vpack.c.b16 %v113, %v113
    %vm118 = vcmask 257024
    %119 = vst.msk [vmem:[%s3] sm:$0xf] %vm118, %v114
    %120 = vst.msk [vmem:[%s3 + $0x4] sm:$0xf] %vm118, %v115
  $region21: #{transformer_forward.39} parent=0 // pred_fallthru
    _
  // Predicated region
  $region22: #{transformer_forward.39} parent=0 // pred_check
    _
  $region23: #{transformer_forward.39} parent=0 // pred_check_branch
    %122 = sbr.rel (0) target = $region25
  $region24: #{transformer_forward.39} parent=0 // pred_region
    _
  $region25: #{transformer_forward.39} parent=0 // pred_fallthru
    _
  // Predicated region
  $region26: #{transformer_forward.39} parent=0 // pred_check
    _
  $region27: #{transformer_forward.39} parent=0 // pred_check_branch
    %124 = sbr.rel (0) target = $region29
  $region28: #{transformer_forward.39} parent=0 // pred_region
    _
  $region29: #{transformer_forward.39} parent=0 // pred_fallthru
    _

// kernel: transformer_forward.53
$region0: #{transformer_forward.53}
  #allocation0 [shape = 'u32[]', space=smem, size = 0x4, offset = 0x4, fixed_abs, tag = 'smem constant byte address 0x4 - core index']
  #allocation1 [shape = 'u32[144,128]{1,0:T(1,128)}', space=vmem, size = 0x12000, scoped, tag = 'internal scratch']
  #allocation2 [shape = 'f32[16,64]{1,0:T(8,128)}', space=vmem, size = 0x2000, scoped, tag = 'scratch operand']
  %s0 = inlined_call_operand.vmem [shape: bf16[16,32], index: 0, kind: input, shape index: {}]
  %s1 = inlined_call_operand.vmem [shape: bf16[32,64], index: 1, kind: input, shape index: {}]
  %s2 = inlined_call_operand.vmem [shape: f32[1,64], index: 2, kind: input, shape index: {}]
  %s3 = inlined_call_operand.hbm [shape: f32[16,64], index: 3, kind: output, shape index: {}]
  %s4 = sld [smem:[#allocation0]]
  $region30: #{transformer_forward.53} parent=0
    _
  %s6 = ssub.s32 1, %s4
  %s7 = scalar_select 0, %s6, %s4
  $region1: #{transformer_forward.53} parent=0
    #allocation3 [shape = 'u8[8192]{0}', space=vmem, size = 0x2000, scoped, tag = 'output window, operand 0, single buffered']
    #allocation4 [shape = 's32[1]{0}', space=sflag, size = 0x4, scoped, tag = 'scoped memory for transformer_forward.53']
    %8 = vsyncpa [#allocation4], 0
    // Predicated region
    $region2: #{transformer_forward.53} parent=1 // pred_check
      _
    $region3: #{transformer_forward.53} parent=1 // pred_check_branch
      %10 = sbr.rel (0) target = $region5
    $region4: #{transformer_forward.53} parent=1 // pred_region
      _
    $region5: #{transformer_forward.53} parent=1 // pred_fallthru
      _
    // Predicated region
    $region6: #{transformer_forward.53} parent=1 // pred_check
      _
    $region7: #{transformer_forward.53} parent=1 // pred_check_branch
      %12 = sbr.rel (0) target = $region9
    $region8: #{transformer_forward.53} parent=1 // pred_region
      _
    $region9: #{transformer_forward.53} parent=1 // pred_fallthru
      _
    // Predicated region
    $region10: #{transformer_forward.53} parent=1 // pred_check
      _
    $region11: #{transformer_forward.53} parent=1 // pred_check_branch
      %14 = sbr.rel (0) target = $region13
    $region12: #{transformer_forward.53} parent=1 // pred_region
      _
    $region13: #{transformer_forward.53} parent=1 // pred_fallthru
      _
    %p16 = scmp.eq.s32.totalorder 0, 0
    // Predicated region
    $region14: #{transformer_forward.53} parent=1 // pred_check
      %p17 = pneg %p16
    $region15: #{transformer_forward.53} parent=1 // pred_check_branch
      %19 = sbr.rel (%p17) target = $region17
    $region16: #{transformer_forward.53} parent=1 // pred_region
      %vm20 = vcmask 523264
      %21 = vst.msk [vmem:[#allocation2] sm:$0xff] %vm20, 0.0
      %22 = vst.msk [vmem:[#allocation2 + $0x8] sm:$0xff] %vm20, 0.0
    $region17: #{transformer_forward.53} parent=1 // pred_fallthru
      _
    %v23 = vld [vmem:[#allocation2] sm:$0xff]
    %v24 = vld [vmem:[#allocation2 + $0x8] sm:$0xff]
    %v25 = vld [vmem:[%s0] sm:$0xf]
    %v26 = vld [vmem:[%s0 + $0x4] sm:$0xf]
    %v27 = vld [vmem:[%s1] sm:$0xf]
    %v28 = vld [vmem:[%s1 + $0x4] sm:$0xf]
    %v29 = vld [vmem:[%s1 + $0x8] sm:$0xf]
    %v30 = vld [vmem:[%s1 + $0xc] sm:$0xf]
    %v33 = vunpack.c.l.b16 %v25
    %v34 = vunpack.c.l.b16 %v26
    %v35 = vpack.c.b16 %v34, %v33
    %v40 = vunpack.c.l.b16 %v27
    %v41 = vunpack.c.l.b16 %v28
    %v42 = vunpack.c.l.b16 %v29
    %v43 = vunpack.c.l.b16 %v30
    %v44 = vpack.c.b16 %v41, %v40
    %v45 = vpack.c.b16 %v43, %v42
    %vm48 = vcmask 261120
    %v50 = vsel %vm48, %v35, 0
    %52 = vmatprep.subr.bf16.mxu0 0
    %53 = vmatpush1.bf16.msra.mxu0 %v44
    %54 = vmatprep.subr.bf16.mxu0 0
    %55 = vmatpush1.bf16.msra.mxu0 %v45
    %56 = vmatprep.subr.bf16.mxu0 0
    %57 = vmatpush1.bf16.msra.mxu0 0
    %58 = vmatprep.subr.bf16.mxu0 0
    %59 = vmatpush1.bf16.msra.mxu0 0
    %60 = vmatprep.subr.bf16.mxu0 0
    %61 = vmatpush1.bf16.msra.mxu0 0
    %62 = vmatprep.subr.bf16.mxu0 0
    %63 = vmatpush1.bf16.msra.mxu0 0
    %64 = vmatprep.subr.bf16.mxu0 0
    %65 = vmatpush1.bf16.msra.mxu0 0
    %66 = vmatprep.subr.bf16.mxu0 0
    %67 = vmatpush1.bf16.msra.mxu0 0
    %68 = vmatprep.subr.bf16.mxu0 0
    %69 = vmatpush1.bf16.msra.mxu0 0
    %70 = vmatprep.subr.bf16.mxu0 0
    %71 = vmatpush1.bf16.msra.mxu0 0
    %72 = vmatprep.subr.bf16.mxu0 0
    %73 = vmatpush1.bf16.msra.mxu0 0
    %74 = vmatprep.subr.bf16.mxu0 0
    %75 = vmatpush1.bf16.msra.mxu0 0
    %76 = vmatprep.subr.bf16.mxu0 0
    %77 = vmatpush1.bf16.msra.mxu0 0
    %78 = vmatprep.subr.bf16.mxu0 0
    %79 = vmatpush1.bf16.msra.mxu0 0
    %80 = vmatprep.subr.bf16.mxu0 0
    %81 = vmatpush1.bf16.msra.mxu0 0
    %82 = vmatprep.subr.bf16.mxu0 0
    %83 = vmatpush1.bf16.msra.mxu0 0
    %84 = vmatprep.mubr.bf16.mxu0 0
    %85 = vmatmul.mubr.bf16.gmra.mrb[0].mxu0 %v50
    %v86 = vpop.f32.mrb[0].mxu0
    %v87 = vadd.f32 0.0, %v86
    %v88 = vpop.f32.mrb[0].mxu0
    %v89 = vpop.f32.mrb[0].mxu0
    %v90 = vadd.f32 0.0, %v89
    %v91 = vpop.f32.mrb[0].mxu0
    %92 = vdwg.mxu0
    %v93 = vadd.f32 %v23, %v87
    %v94 = vadd.f32 %v24, %v90
    %vm95 = vcmask 523264
    %96 = vst.msk [vmem:[#allocation2] sm:$0xff] %vm95, %v93
    %97 = vst.msk [vmem:[#allocation2 + $0x8] sm:$0xff] %vm95, %v94
    // Predicated region
    $region18: #{transformer_forward.53} parent=1 // pred_check
      %p98 = pneg %p16
    $region19: #{transformer_forward.53} parent=1 // pred_check_branch
      %100 = sbr.rel (%p98) target = $region21
    $region20: #{transformer_forward.53} parent=1 // pred_region
      %v101 = vld [vmem:[#allocation2] sm:$0xff]
      %v102 = vld [vmem:[#allocation2 + $0x8] sm:$0xff]
      %v103 = vld [vmem:[%s2] sm:$0x1]
      %v105 = vlaneseq
      %v106 = vshrl.u32 %v105, 7
      %v107 = vsub.s32 0, %v106
      %v108 = vrot.slane %v103, %v107
      %v110 = vadd.f32 %v101, %v108
      %v111 = vadd.f32 %v102, %v108
      %112 = vst.msk [vmem:[#allocation3] sm:$0xff] %vm95, %v110
      %113 = vst.msk [vmem:[#allocation3 + $0x8] sm:$0xff] %vm95, %v111
    $region21: #{transformer_forward.53} parent=1 // pred_fallthru
      _
    // Predicated region
    $region22: #{transformer_forward.53} parent=1 // pred_check
      _
    $region23: #{transformer_forward.53} parent=1 // pred_check_branch
      %115 = sbr.rel (0) target = $region25
    $region24: #{transformer_forward.53} parent=1 // pred_region
      %s117 = ssub.s32 256, 256
      %118 = vsyncadd [#allocation4], %s117
      %s119 = sshll.u32 [#allocation3], 4
      %s120 = int_to_ptr.vmem [resolvable:$true] %s119
      %125 = dma.vmem_to_hbm [thread:$0]  %s120, 256, %s3, [#allocation4], 128, 128, 8
    $region25: #{transformer_forward.53} parent=1 // pred_fallthru
      _
    // Predicated region
    $region26: #{transformer_forward.53} parent=1 // pred_check
      _
    $region27: #{transformer_forward.53} parent=1 // pred_check_branch
      %127 = sbr.rel (0) target = $region29
    $region28: #{transformer_forward.53} parent=1 // pred_region
      %128 = dma.done [#allocation4], 256
    $region29: #{transformer_forward.53} parent=1 // pred_fallthru
      _
    %129 = vsyncpa [#allocation4], 1

</llo_original>
